<compile_context>
chip_gen: v7x
topology: tpu7x:2x2x1
jax: 0.10.0
libtpu: 0.0.40
codegen_flags: <defaults>
</compile_context>

<pallas_src>
import functools

import jax
import jax.numpy as jnp
from jax.experimental import pallas as pl
from jax.experimental.pallas import tpu as pltpu

NUM_NODES = 5   # [head, pair_pre, person_1_pre, person_2_pre, scene_pre]
NUM_HEADS = 4   # pair / person_1 / person_2 / scene


# --------------------------------------------------------------------------
# Fused kernel: batch reductions -> 4 lane-packed GatedGraphConv heads ->
#               8 KDE/KL comparisons -> scalar loss.
# --------------------------------------------------------------------------
def _graph_loss_kernel(x_ref, w_ref, wih_ref, whh_ref, bih_ref, bhh_ref,
                       noise_ref, out_ref, *, num_layers, n_feat, batch, a):
    D = n_feat
    D4 = NUM_HEADS * D
    x = x_ref[...].astype(jnp.float32)            # [8*B, D]
    noise = noise_ref[...].astype(jnp.float32)    # [16, D]

    # ---- per-entity batch sums / means (8 entities: 4 "now" + 4 "pre") ----
    sums, means = [], []
    inv_b = 1.0 / float(batch)
    for k in range(2 * NUM_HEADS):
        s = jnp.sum(x[k * batch:(k + 1) * batch, :], axis=0, keepdims=True)  # [1, D]
        sums.append(s)
        means.append(s * inv_b)

    # ---- packed node features H: [5, 4D] (4 heads side-by-side on lanes) --
    head_row = jnp.concatenate(means[0:NUM_HEADS], axis=1)            # [1, 4D]
    prev_cat = jnp.concatenate(means[NUM_HEADS:], axis=0)             # [4, D]
    prev_rows = jnp.concatenate([prev_cat] * NUM_HEADS, axis=1)       # [4, 4D]
    h = jnp.concatenate([head_row, prev_rows], axis=0)                # [5, 4D]

    wih = wih_ref[...]            # [4D, 3*4D]  gate blocks (r|z|n), head-block-diag
    whh = whh_ref[...]            # [4D, 3*4D]
    bih = bih_ref[...]            # [1, 3*4D]
    bhh = bhh_ref[...]            # [1, 3*4D]
    zeros_rest = jnp.zeros((NUM_NODES - 1, 3 * D4), jnp.float32)      # hoisted

    # ---- GatedGraphConv layers (GRU weights shared across layers) ---------
    for layer in range(num_layers):
        # adjacency folded: node 0 aggregates messages from nodes 1..4, rest get 0
        src = jnp.sum(h[1:NUM_NODES, :], axis=0, keepdims=True)               # [1, 4D]
        m0 = jnp.dot(src, w_ref[layer], preferred_element_type=jnp.float32)   # [1, 4D]
        gi0 = jnp.dot(m0, wih, preferred_element_type=jnp.float32)            # [1, 12D]
        gi = jnp.concatenate([gi0, zeros_rest], axis=0) + bih                 # [5, 12D]
        gh = jnp.dot(h, whh, preferred_element_type=jnp.float32) + bhh        # [5, 12D]

        r = jax.nn.sigmoid(gi[:, 0:D4] + gh[:, 0:D4])
        z = jax.nn.sigmoid(gi[:, D4:2 * D4] + gh[:, D4:2 * D4])
        n_g = jnp.tanh(gi[:, 2 * D4:3 * D4] + r * gh[:, 2 * D4:3 * D4])
        h = (1.0 - z) * n_g + z * h

    # node-0 output of each head, [1, D] each
    outs = [h[0:1, k * D:(k + 1) * D] for k in range(NUM_HEADS)]

    # ---- 1-D Silverman KDE evaluated at its own samples + KL(p || q) ------
    n = D
    factor2 = float((n * 0.75) ** (-0.4))        # silverman bandwidth^2 factor (d=1)

    def kde_pdf(row):                            # row: [1, n] -> unnormalized pdf [n, 1]
        mean = jnp.mean(row)
        var = jnp.sum((row - mean) ** 2) / (n - 1)      # unbiased, like np.cov
        cov = jnp.maximum(var * factor2, 1e-12)         # guard near-constant inputs
        col = jnp.transpose(row)                        # [n, 1]
        diff = col - row                                # [n, n]
        e = jnp.exp(-0.5 * diff * diff / cov)
        # 1/(n*sqrt(2*pi*cov)) dropped: it cancels after p / sum(p)
        return jnp.sum(e, axis=1, keepdims=True)        # [n, 1]

    kls = []
    for i in range(2 * NUM_HEADS):               # i<4: vs "pre" sums, i>=4: vs "now"
        head = i % NUM_HEADS
        src = sums[NUM_HEADS + head] if i < NUM_HEADS else sums[head]
        d1 = outs[head] + noise[2 * i:2 * i + 1, :]
        d2 = src + noise[2 * i + 1:2 * i + 2, :]
        p = kde_pdf(d1)
        q = kde_pdf(d2)
        p = p / jnp.sum(p)
        q = q / jnp.sum(q)
        kls.append(jnp.sum(p * jnp.log(p / q)))

    loss_pre = kls[0] + kls[1] + kls[2] + kls[3]
    loss_now = kls[4] + kls[5] + kls[6] + kls[7]
    out_ref[...] = jnp.reshape(a * loss_pre + (1.0 - a) * loss_now, (1, 1))


# --------------------------------------------------------------------------
# Host-side packing: 4 per-head GGC parameter sets -> lane-packed block matrices.
# --------------------------------------------------------------------------
def _pack_params(params_list, D):
    L = params_list[0]["w"].shape[0]
    D4 = NUM_HEADS * D
    w_blk = jnp.zeros((L, D4, D4), jnp.float32)
    wih_cat = jnp.zeros((D4, 3 * D4), jnp.float32)
    whh_cat = jnp.zeros((D4, 3 * D4), jnp.float32)
    bih_cat = jnp.zeros((1, 3 * D4), jnp.float32)
    bhh_cat = jnp.zeros((1, 3 * D4), jnp.float32)
    for k, p in enumerate(params_list):
        r0, r1 = k * D, (k + 1) * D
        w_blk = w_blk.at[:, r0:r1, r0:r1].set(p["w"])
        for g in range(3):                       # gate blocks (r, z, n) along lanes
            c0, c1 = g * D4 + k * D, g * D4 + (k + 1) * D
            wih_cat = wih_cat.at[r0:r1, c0:c1].set(p["wih"][g])
            whh_cat = whh_cat.at[r0:r1, c0:c1].set(p["whh"][g])
            bih_cat = bih_cat.at[0, c0:c1].set(p["bih"][g])
            bhh_cat = bhh_cat.at[0, c0:c1].set(p["bhh"][g])
    return w_blk, wih_cat, whh_cat, bih_cat, bhh_cat


# --------------------------------------------------------------------------
# graph_loss.forward
# --------------------------------------------------------------------------
def graph_loss_forward(pair_now, person_1_now, person_2_now, scene_now,
                       pair_pre, person_1_pre, person_2_pre, scene_pre,
                       params_list, num_layers, a, noise_key):
    entities = [pair_now, person_1_now, person_2_now, scene_now,
                pair_pre, person_1_pre, person_2_pre, scene_pre]
    B, D = entities[0].shape
    x_all = jnp.concatenate([t.astype(jnp.float32) for t in entities], axis=0)  # [8B, D]
    noise = 0.01 * jax.random.normal(noise_key, (4 * NUM_HEADS, D), jnp.float32)
    w_blk, wih_cat, whh_cat, bih_cat, bhh_cat = _pack_params(params_list, D)

    kernel = functools.partial(_graph_loss_kernel, num_layers=num_layers,
                               n_feat=D, batch=B, a=float(a))
    out = pl.pallas_call(
        kernel,
        out_shape=jax.ShapeDtypeStruct((1, 1), jnp.float32),
        in_specs=[pl.BlockSpec(memory_space=pltpu.MemorySpace.VMEM)] * 7,
        out_specs=pl.BlockSpec(memory_space=pltpu.MemorySpace.VMEM),
    )(x_all, w_blk, wih_cat, whh_cat, bih_cat, bhh_cat, noise)
    return out[0, 0]


def init_ggc_params(key, D, num_layers):
    ks = jax.random.split(key, 5)
    bound = 1.0 / float(D) ** 0.5
    u = lambda k, shape: jax.random.uniform(k, shape, jnp.float32, -bound, bound)
    return dict(
        w=u(ks[0], (num_layers, D, D)),
        wih=u(ks[1], (3, D, D)),
        whh=u(ks[2], (3, D, D)),
        bih=u(ks[3], (3, D)),
        bhh=u(ks[4], (3, D)),
    )


if __name__ == "__main__":
    B, D = 8, 32
    NUM_LAYERS = 3
    A = 0.5

    key = jax.random.PRNGKey(0)
    k_in, k_par, k_noise = jax.random.split(key, 3)
    in_keys = jax.random.split(k_in, 8)

    # 8 inputs, each [B, D]
    (pair_now, person_1_now, person_2_now, scene_now,
     pair_pre, person_1_pre, person_2_pre, scene_pre) = [
        jax.random.normal(k, (B, D), jnp.float32) for k in in_keys]

    # a fresh (deterministic) parameter set per gated_graph_convolution call,
    # mirroring the PyTorch module creating a new GatedGraphConv each time.
    params_list = [init_ggc_params(k, D, NUM_LAYERS)
                   for k in jax.random.split(k_par, 4)]

    loss_fn = jax.jit(graph_loss_forward, static_argnums=(9, 10))
    loss = loss_fn(pair_now, person_1_now, person_2_now, scene_now,
                   pair_pre, person_1_pre, person_2_pre, scene_pre,
                   params_list, NUM_LAYERS, A, k_noise)
    jax.block_until_ready(loss)
    assert loss.shape == () and jnp.isfinite(loss)
    print("KERNEL_OK")
</pallas_src>

<mosaic_0001>
module attributes {stable_mosaic.version = 11 : i64} {
  func.func @_graph_loss_kernel(%arg0: memref<64x32xf32, #tpu.memory_space<vmem>>, %arg1: memref<3x128x128xf32, #tpu.memory_space<vmem>>, %arg2: memref<128x384xf32, #tpu.memory_space<vmem>>, %arg3: memref<128x384xf32, #tpu.memory_space<vmem>>, %arg4: memref<1x384xf32, #tpu.memory_space<vmem>>, %arg5: memref<1x384xf32, #tpu.memory_space<vmem>>, %arg6: memref<16x32xf32, #tpu.memory_space<vmem>>, %arg7: memref<1x1xf32, #tpu.memory_space<vmem>>) attributes {dimension_semantics = [], scalar_prefetch = 0 : i64, scratch_operands = 0 : i64, tpu.core_type = #tpu.core_type<tc>} {
    %c0 = arith.constant 0 : index
    %c0_0 = arith.constant 0 : index
    %0 = vector.load %arg0[%c0, %c0_0] : memref<64x32xf32, #tpu.memory_space<vmem>>, vector<64x32xf32>
    %c0_1 = arith.constant 0 : index
    %c0_2 = arith.constant 0 : index
    %1 = vector.load %arg6[%c0_1, %c0_2] : memref<16x32xf32, #tpu.memory_space<vmem>>, vector<16x32xf32>
    %2 = vector.extract_strided_slice %0 {offsets = [0, 0], sizes = [8, 32], strides = [1, 1]} : vector<64x32xf32> to vector<8x32xf32>
    %cst = arith.constant dense<0.000000e+00> : vector<32xf32>
    %3 = vector.multi_reduction <add>, %2, %cst [0] : vector<8x32xf32> to vector<32xf32>
    %4 = vector.shape_cast %3 : vector<32xf32> to vector<1x32xf32>
    %cst_3 = arith.constant 1.250000e-01 : f32
    %5 = vector.broadcast %cst_3 : f32 to vector<1x32xf32>
    %6 = arith.mulf %4, %5 : vector<1x32xf32>
    %7 = vector.extract_strided_slice %0 {offsets = [8, 0], sizes = [8, 32], strides = [1, 1]} : vector<64x32xf32> to vector<8x32xf32>
    %cst_4 = arith.constant dense<0.000000e+00> : vector<32xf32>
    %8 = vector.multi_reduction <add>, %7, %cst_4 [0] : vector<8x32xf32> to vector<32xf32>
    %9 = vector.shape_cast %8 : vector<32xf32> to vector<1x32xf32>
    %cst_5 = arith.constant 1.250000e-01 : f32
    %10 = vector.broadcast %cst_5 : f32 to vector<1x32xf32>
    %11 = arith.mulf %9, %10 : vector<1x32xf32>
    %12 = vector.extract_strided_slice %0 {offsets = [16, 0], sizes = [8, 32], strides = [1, 1]} : vector<64x32xf32> to vector<8x32xf32>
    %cst_6 = arith.constant dense<0.000000e+00> : vector<32xf32>
    %13 = vector.multi_reduction <add>, %12, %cst_6 [0] : vector<8x32xf32> to vector<32xf32>
    %14 = vector.shape_cast %13 : vector<32xf32> to vector<1x32xf32>
    %cst_7 = arith.constant 1.250000e-01 : f32
    %15 = vector.broadcast %cst_7 : f32 to vector<1x32xf32>
    %16 = arith.mulf %14, %15 : vector<1x32xf32>
    %17 = vector.extract_strided_slice %0 {offsets = [24, 0], sizes = [8, 32], strides = [1, 1]} : vector<64x32xf32> to vector<8x32xf32>
    %cst_8 = arith.constant dense<0.000000e+00> : vector<32xf32>
    %18 = vector.multi_reduction <add>, %17, %cst_8 [0] : vector<8x32xf32> to vector<32xf32>
    %19 = vector.shape_cast %18 : vector<32xf32> to vector<1x32xf32>
    %cst_9 = arith.constant 1.250000e-01 : f32
    %20 = vector.broadcast %cst_9 : f32 to vector<1x32xf32>
    %21 = arith.mulf %19, %20 : vector<1x32xf32>
    %22 = vector.extract_strided_slice %0 {offsets = [32, 0], sizes = [8, 32], strides = [1, 1]} : vector<64x32xf32> to vector<8x32xf32>
    %cst_10 = arith.constant dense<0.000000e+00> : vector<32xf32>
    %23 = vector.multi_reduction <add>, %22, %cst_10 [0] : vector<8x32xf32> to vector<32xf32>
    %24 = vector.shape_cast %23 : vector<32xf32> to vector<1x32xf32>
    %cst_11 = arith.constant 1.250000e-01 : f32
    %25 = vector.broadcast %cst_11 : f32 to vector<1x32xf32>
    %26 = arith.mulf %24, %25 : vector<1x32xf32>
    %27 = vector.extract_strided_slice %0 {offsets = [40, 0], sizes = [8, 32], strides = [1, 1]} : vector<64x32xf32> to vector<8x32xf32>
    %cst_12 = arith.constant dense<0.000000e+00> : vector<32xf32>
    %28 = vector.multi_reduction <add>, %27, %cst_12 [0] : vector<8x32xf32> to vector<32xf32>
    %29 = vector.shape_cast %28 : vector<32xf32> to vector<1x32xf32>
    %cst_13 = arith.constant 1.250000e-01 : f32
    %30 = vector.broadcast %cst_13 : f32 to vector<1x32xf32>
    %31 = arith.mulf %29, %30 : vector<1x32xf32>
    %32 = vector.extract_strided_slice %0 {offsets = [48, 0], sizes = [8, 32], strides = [1, 1]} : vector<64x32xf32> to vector<8x32xf32>
    %cst_14 = arith.constant dense<0.000000e+00> : vector<32xf32>
    %33 = vector.multi_reduction <add>, %32, %cst_14 [0] : vector<8x32xf32> to vector<32xf32>
    %34 = vector.shape_cast %33 : vector<32xf32> to vector<1x32xf32>
    %cst_15 = arith.constant 1.250000e-01 : f32
    %35 = vector.broadcast %cst_15 : f32 to vector<1x32xf32>
    %36 = arith.mulf %34, %35 : vector<1x32xf32>
    %37 = vector.extract_strided_slice %0 {offsets = [56, 0], sizes = [8, 32], strides = [1, 1]} : vector<64x32xf32> to vector<8x32xf32>
    %cst_16 = arith.constant dense<0.000000e+00> : vector<32xf32>
    %38 = vector.multi_reduction <add>, %37, %cst_16 [0] : vector<8x32xf32> to vector<32xf32>
    %39 = vector.shape_cast %38 : vector<32xf32> to vector<1x32xf32>
    %cst_17 = arith.constant 1.250000e-01 : f32
    %40 = vector.broadcast %cst_17 : f32 to vector<1x32xf32>
    %41 = arith.mulf %39, %40 : vector<1x32xf32>
    %42 = tpu.concatenate %6, %11, %16, %21 in 1 : vector<1x32xf32>, vector<1x32xf32>, vector<1x32xf32>, vector<1x32xf32> -> vector<1x128xf32>
    %43 = tpu.concatenate %26, %31, %36, %41 in 0 : vector<1x32xf32>, vector<1x32xf32>, vector<1x32xf32>, vector<1x32xf32> -> vector<4x32xf32>
    %44 = tpu.concatenate %43, %43, %43, %43 in 1 : vector<4x32xf32>, vector<4x32xf32>, vector<4x32xf32>, vector<4x32xf32> -> vector<4x128xf32>
    %45 = tpu.concatenate %42, %44 in 0 : vector<1x128xf32>, vector<4x128xf32> -> vector<5x128xf32>
    %c0_18 = arith.constant 0 : index
    %c0_19 = arith.constant 0 : index
    %46 = vector.load %arg2[%c0_18, %c0_19] : memref<128x384xf32, #tpu.memory_space<vmem>>, vector<128x384xf32>
    %c0_20 = arith.constant 0 : index
    %c0_21 = arith.constant 0 : index
    %47 = vector.load %arg3[%c0_20, %c0_21] : memref<128x384xf32, #tpu.memory_space<vmem>>, vector<128x384xf32>
    %c0_22 = arith.constant 0 : index
    %c0_23 = arith.constant 0 : index
    %48 = vector.load %arg4[%c0_22, %c0_23] : memref<1x384xf32, #tpu.memory_space<vmem>>, vector<1x384xf32>
    %c0_24 = arith.constant 0 : index
    %c0_25 = arith.constant 0 : index
    %49 = vector.load %arg5[%c0_24, %c0_25] : memref<1x384xf32, #tpu.memory_space<vmem>>, vector<1x384xf32>
    %cst_26 = arith.constant 0.000000e+00 : f32
    %50 = vector.broadcast %cst_26 : f32 to vector<4x384xf32>
    %51 = vector.extract_strided_slice %45 {offsets = [1, 0], sizes = [4, 128], strides = [1, 1]} : vector<5x128xf32> to vector<4x128xf32>
    %cst_27 = arith.constant dense<0.000000e+00> : vector<128xf32>
    %52 = vector.multi_reduction <add>, %51, %cst_27 [0] : vector<4x128xf32> to vector<128xf32>
    %53 = vector.shape_cast %52 : vector<128xf32> to vector<1x128xf32>
    %c0_28 = arith.constant 0 : index
    %c0_29 = arith.constant 0 : index
    %c0_30 = arith.constant 0 : index
    %54 = vector.load %arg1[%c0_28, %c0_29, %c0_30] : memref<3x128x128xf32, #tpu.memory_space<vmem>>, vector<1x128x128xf32>
    %55 = vector.shape_cast %54 : vector<1x128x128xf32> to vector<128x128xf32>
    %cst_31 = arith.constant dense<0.000000e+00> : vector<1x128xf32>
    %56 = tpu.matmul %53, %55, %cst_31 {dimension_numbers = #tpu.dot_dimension_numbers<[1], [0], [0], [1], [0, 0, 1, 1], [], []>} : vector<1x128xf32>, vector<128x128xf32>, vector<1x128xf32> -> vector<1x128xf32>
    %cst_32 = arith.constant dense<0.000000e+00> : vector<1x384xf32>
    %57 = tpu.matmul %56, %46, %cst_32 {dimension_numbers = #tpu.dot_dimension_numbers<[1], [0], [0], [1], [0, 0, 1, 1], [], []>} : vector<1x128xf32>, vector<128x384xf32>, vector<1x384xf32> -> vector<1x384xf32>
    %58 = tpu.concatenate %57, %50 in 0 : vector<1x384xf32>, vector<4x384xf32> -> vector<5x384xf32>
    %59 = vector.broadcast %48 : vector<1x384xf32> to vector<5x384xf32>
    %60 = arith.addf %58, %59 : vector<5x384xf32>
    %cst_33 = arith.constant dense<0.000000e+00> : vector<5x384xf32>
    %61 = tpu.matmul %45, %47, %cst_33 {dimension_numbers = #tpu.dot_dimension_numbers<[1], [0], [0], [1], [0, 0, 1, 1], [], []>} : vector<5x128xf32>, vector<128x384xf32>, vector<5x384xf32> -> vector<5x384xf32>
    %62 = vector.broadcast %49 : vector<1x384xf32> to vector<5x384xf32>
    %63 = arith.addf %61, %62 : vector<5x384xf32>
    %64 = vector.extract_strided_slice %60 {offsets = [0, 0], sizes = [5, 128], strides = [1, 1]} : vector<5x384xf32> to vector<5x128xf32>
    %65 = vector.extract_strided_slice %63 {offsets = [0, 0], sizes = [5, 128], strides = [1, 1]} : vector<5x384xf32> to vector<5x128xf32>
    %66 = arith.addf %64, %65 : vector<5x128xf32>
    %67 = arith.negf %66 : vector<5x128xf32>
    %68 = math.exp %67 : vector<5x128xf32>
    %cst_34 = arith.constant 1.000000e+00 : f32
    %69 = vector.broadcast %cst_34 : f32 to vector<5x128xf32>
    %70 = arith.addf %69, %68 : vector<5x128xf32>
    %71 = arith.divf %69, %70 : vector<5x128xf32>
    %72 = vector.extract_strided_slice %60 {offsets = [0, 128], sizes = [5, 128], strides = [1, 1]} : vector<5x384xf32> to vector<5x128xf32>
    %73 = vector.extract_strided_slice %63 {offsets = [0, 128], sizes = [5, 128], strides = [1, 1]} : vector<5x384xf32> to vector<5x128xf32>
    %74 = arith.addf %72, %73 : vector<5x128xf32>
    %75 = arith.negf %74 : vector<5x128xf32>
    %76 = math.exp %75 : vector<5x128xf32>
    %cst_35 = arith.constant 1.000000e+00 : f32
    %77 = vector.broadcast %cst_35 : f32 to vector<5x128xf32>
    %78 = arith.addf %77, %76 : vector<5x128xf32>
    %79 = arith.divf %77, %78 : vector<5x128xf32>
    %80 = vector.extract_strided_slice %60 {offsets = [0, 256], sizes = [5, 128], strides = [1, 1]} : vector<5x384xf32> to vector<5x128xf32>
    %81 = vector.extract_strided_slice %63 {offsets = [0, 256], sizes = [5, 128], strides = [1, 1]} : vector<5x384xf32> to vector<5x128xf32>
    %82 = arith.mulf %71, %81 : vector<5x128xf32>
    %83 = arith.addf %80, %82 : vector<5x128xf32>
    %84 = math.tanh %83 : vector<5x128xf32>
    %cst_36 = arith.constant 1.000000e+00 : f32
    %85 = vector.broadcast %cst_36 : f32 to vector<5x128xf32>
    %86 = arith.subf %85, %79 : vector<5x128xf32>
    %87 = arith.mulf %86, %84 : vector<5x128xf32>
    %88 = arith.mulf %79, %45 : vector<5x128xf32>
    %89 = arith.addf %87, %88 : vector<5x128xf32>
    %90 = vector.extract_strided_slice %89 {offsets = [1, 0], sizes = [4, 128], strides = [1, 1]} : vector<5x128xf32> to vector<4x128xf32>
    %cst_37 = arith.constant dense<0.000000e+00> : vector<128xf32>
    %91 = vector.multi_reduction <add>, %90, %cst_37 [0] : vector<4x128xf32> to vector<128xf32>
    %92 = vector.shape_cast %91 : vector<128xf32> to vector<1x128xf32>
    %c1 = arith.constant 1 : index
    %c0_38 = arith.constant 0 : index
    %c0_39 = arith.constant 0 : index
    %93 = vector.load %arg1[%c1, %c0_38, %c0_39] : memref<3x128x128xf32, #tpu.memory_space<vmem>>, vector<1x128x128xf32>
    %94 = vector.shape_cast %93 : vector<1x128x128xf32> to vector<128x128xf32>
    %cst_40 = arith.constant dense<0.000000e+00> : vector<1x128xf32>
    %95 = tpu.matmul %92, %94, %cst_40 {dimension_numbers = #tpu.dot_dimension_numbers<[1], [0], [0], [1], [0, 0, 1, 1], [], []>} : vector<1x128xf32>, vector<128x128xf32>, vector<1x128xf32> -> vector<1x128xf32>
    %cst_41 = arith.constant dense<0.000000e+00> : vector<1x384xf32>
    %96 = tpu.matmul %95, %46, %cst_41 {dimension_numbers = #tpu.dot_dimension_numbers<[1], [0], [0], [1], [0, 0, 1, 1], [], []>} : vector<1x128xf32>, vector<128x384xf32>, vector<1x384xf32> -> vector<1x384xf32>
    %97 = tpu.concatenate %96, %50 in 0 : vector<1x384xf32>, vector<4x384xf32> -> vector<5x384xf32>
    %98 = vector.broadcast %48 : vector<1x384xf32> to vector<5x384xf32>
    %99 = arith.addf %97, %98 : vector<5x384xf32>
    %cst_42 = arith.constant dense<0.000000e+00> : vector<5x384xf32>
    %100 = tpu.matmul %89, %47, %cst_42 {dimension_numbers = #tpu.dot_dimension_numbers<[1], [0], [0], [1], [0, 0, 1, 1], [], []>} : vector<5x128xf32>, vector<128x384xf32>, vector<5x384xf32> -> vector<5x384xf32>
    %101 = vector.broadcast %49 : vector<1x384xf32> to vector<5x384xf32>
    %102 = arith.addf %100, %101 : vector<5x384xf32>
    %103 = vector.extract_strided_slice %99 {offsets = [0, 0], sizes = [5, 128], strides = [1, 1]} : vector<5x384xf32> to vector<5x128xf32>
    %104 = vector.extract_strided_slice %102 {offsets = [0, 0], sizes = [5, 128], strides = [1, 1]} : vector<5x384xf32> to vector<5x128xf32>
    %105 = arith.addf %103, %104 : vector<5x128xf32>
    %106 = arith.negf %105 : vector<5x128xf32>
    %107 = math.exp %106 : vector<5x128xf32>
    %cst_43 = arith.constant 1.000000e+00 : f32
    %108 = vector.broadcast %cst_43 : f32 to vector<5x128xf32>
    %109 = arith.addf %108, %107 : vector<5x128xf32>
    %110 = arith.divf %108, %109 : vector<5x128xf32>
    %111 = vector.extract_strided_slice %99 {offsets = [0, 128], sizes = [5, 128], strides = [1, 1]} : vector<5x384xf32> to vector<5x128xf32>
    %112 = vector.extract_strided_slice %102 {offsets = [0, 128], sizes = [5, 128], strides = [1, 1]} : vector<5x384xf32> to vector<5x128xf32>
    %113 = arith.addf %111, %112 : vector<5x128xf32>
    %114 = arith.negf %113 : vector<5x128xf32>
    %115 = math.exp %114 : vector<5x128xf32>
    %cst_44 = arith.constant 1.000000e+00 : f32
    %116 = vector.broadcast %cst_44 : f32 to vector<5x128xf32>
    %117 = arith.addf %116, %115 : vector<5x128xf32>
    %118 = arith.divf %116, %117 : vector<5x128xf32>
    %119 = vector.extract_strided_slice %99 {offsets = [0, 256], sizes = [5, 128], strides = [1, 1]} : vector<5x384xf32> to vector<5x128xf32>
    %120 = vector.extract_strided_slice %102 {offsets = [0, 256], sizes = [5, 128], strides = [1, 1]} : vector<5x384xf32> to vector<5x128xf32>
    %121 = arith.mulf %110, %120 : vector<5x128xf32>
    %122 = arith.addf %119, %121 : vector<5x128xf32>
    %123 = math.tanh %122 : vector<5x128xf32>
    %cst_45 = arith.constant 1.000000e+00 : f32
    %124 = vector.broadcast %cst_45 : f32 to vector<5x128xf32>
    %125 = arith.subf %124, %118 : vector<5x128xf32>
    %126 = arith.mulf %125, %123 : vector<5x128xf32>
    %127 = arith.mulf %118, %89 : vector<5x128xf32>
    %128 = arith.addf %126, %127 : vector<5x128xf32>
    %129 = vector.extract_strided_slice %128 {offsets = [1, 0], sizes = [4, 128], strides = [1, 1]} : vector<5x128xf32> to vector<4x128xf32>
    %cst_46 = arith.constant dense<0.000000e+00> : vector<128xf32>
    %130 = vector.multi_reduction <add>, %129, %cst_46 [0] : vector<4x128xf32> to vector<128xf32>
    %131 = vector.shape_cast %130 : vector<128xf32> to vector<1x128xf32>
    %c2 = arith.constant 2 : index
    %c0_47 = arith.constant 0 : index
    %c0_48 = arith.constant 0 : index
    %132 = vector.load %arg1[%c2, %c0_47, %c0_48] : memref<3x128x128xf32, #tpu.memory_space<vmem>>, vector<1x128x128xf32>
    %133 = vector.shape_cast %132 : vector<1x128x128xf32> to vector<128x128xf32>
    %cst_49 = arith.constant dense<0.000000e+00> : vector<1x128xf32>
    %134 = tpu.matmul %131, %133, %cst_49 {dimension_numbers = #tpu.dot_dimension_numbers<[1], [0], [0], [1], [0, 0, 1, 1], [], []>} : vector<1x128xf32>, vector<128x128xf32>, vector<1x128xf32> -> vector<1x128xf32>
    %cst_50 = arith.constant dense<0.000000e+00> : vector<1x384xf32>
    %135 = tpu.matmul %134, %46, %cst_50 {dimension_numbers = #tpu.dot_dimension_numbers<[1], [0], [0], [1], [0, 0, 1, 1], [], []>} : vector<1x128xf32>, vector<128x384xf32>, vector<1x384xf32> -> vector<1x384xf32>
    %136 = tpu.concatenate %135, %50 in 0 : vector<1x384xf32>, vector<4x384xf32> -> vector<5x384xf32>
    %137 = vector.broadcast %48 : vector<1x384xf32> to vector<5x384xf32>
    %138 = arith.addf %136, %137 : vector<5x384xf32>
    %cst_51 = arith.constant dense<0.000000e+00> : vector<5x384xf32>
    %139 = tpu.matmul %128, %47, %cst_51 {dimension_numbers = #tpu.dot_dimension_numbers<[1], [0], [0], [1], [0, 0, 1, 1], [], []>} : vector<5x128xf32>, vector<128x384xf32>, vector<5x384xf32> -> vector<5x384xf32>
    %140 = vector.broadcast %49 : vector<1x384xf32> to vector<5x384xf32>
    %141 = arith.addf %139, %140 : vector<5x384xf32>
    %142 = vector.extract_strided_slice %138 {offsets = [0, 0], sizes = [5, 128], strides = [1, 1]} : vector<5x384xf32> to vector<5x128xf32>
    %143 = vector.extract_strided_slice %141 {offsets = [0, 0], sizes = [5, 128], strides = [1, 1]} : vector<5x384xf32> to vector<5x128xf32>
    %144 = arith.addf %142, %143 : vector<5x128xf32>
    %145 = arith.negf %144 : vector<5x128xf32>
    %146 = math.exp %145 : vector<5x128xf32>
    %cst_52 = arith.constant 1.000000e+00 : f32
    %147 = vector.broadcast %cst_52 : f32 to vector<5x128xf32>
    %148 = arith.addf %147, %146 : vector<5x128xf32>
    %149 = arith.divf %147, %148 : vector<5x128xf32>
    %150 = vector.extract_strided_slice %138 {offsets = [0, 128], sizes = [5, 128], strides = [1, 1]} : vector<5x384xf32> to vector<5x128xf32>
    %151 = vector.extract_strided_slice %141 {offsets = [0, 128], sizes = [5, 128], strides = [1, 1]} : vector<5x384xf32> to vector<5x128xf32>
    %152 = arith.addf %150, %151 : vector<5x128xf32>
    %153 = arith.negf %152 : vector<5x128xf32>
    %154 = math.exp %153 : vector<5x128xf32>
    %cst_53 = arith.constant 1.000000e+00 : f32
    %155 = vector.broadcast %cst_53 : f32 to vector<5x128xf32>
    %156 = arith.addf %155, %154 : vector<5x128xf32>
    %157 = arith.divf %155, %156 : vector<5x128xf32>
    %158 = vector.extract_strided_slice %138 {offsets = [0, 256], sizes = [5, 128], strides = [1, 1]} : vector<5x384xf32> to vector<5x128xf32>
    %159 = vector.extract_strided_slice %141 {offsets = [0, 256], sizes = [5, 128], strides = [1, 1]} : vector<5x384xf32> to vector<5x128xf32>
    %160 = arith.mulf %149, %159 : vector<5x128xf32>
    %161 = arith.addf %158, %160 : vector<5x128xf32>
    %162 = math.tanh %161 : vector<5x128xf32>
    %cst_54 = arith.constant 1.000000e+00 : f32
    %163 = vector.broadcast %cst_54 : f32 to vector<5x128xf32>
    %164 = arith.subf %163, %157 : vector<5x128xf32>
    %165 = arith.mulf %164, %162 : vector<5x128xf32>
    %166 = arith.mulf %157, %128 : vector<5x128xf32>
    %167 = arith.addf %165, %166 : vector<5x128xf32>
    %168 = vector.extract_strided_slice %167 {offsets = [0, 0], sizes = [1, 32], strides = [1, 1]} : vector<5x128xf32> to vector<1x32xf32>
    %169 = vector.extract_strided_slice %167 {offsets = [0, 32], sizes = [1, 32], strides = [1, 1]} : vector<5x128xf32> to vector<1x32xf32>
    %170 = vector.extract_strided_slice %167 {offsets = [0, 64], sizes = [1, 32], strides = [1, 1]} : vector<5x128xf32> to vector<1x32xf32>
    %171 = vector.extract_strided_slice %167 {offsets = [0, 96], sizes = [1, 32], strides = [1, 1]} : vector<5x128xf32> to vector<1x32xf32>
    %172 = vector.extract_strided_slice %1 {offsets = [0, 0], sizes = [1, 32], strides = [1, 1]} : vector<16x32xf32> to vector<1x32xf32>
    %173 = arith.addf %168, %172 : vector<1x32xf32>
    %174 = vector.extract_strided_slice %1 {offsets = [1, 0], sizes = [1, 32], strides = [1, 1]} : vector<16x32xf32> to vector<1x32xf32>
    %175 = arith.addf %24, %174 : vector<1x32xf32>
    %176 = vector.shape_cast %173 : vector<1x32xf32> to vector<1x1x32xf32>
    %cst_55 = arith.constant dense<0.000000e+00> : vector<1xf32>
    %177 = vector.multi_reduction <add>, %176, %cst_55 [1, 2] : vector<1x1x32xf32> to vector<1xf32>
    %178 = vector.shape_cast %177 : vector<1xf32> to vector<1x1x1xf32>
    %179 = vector.extract %178[0, 0, 0] : f32 from vector<1x1x1xf32>
    %cst_56 = arith.constant 3.200000e+01 : f32
    %180 = arith.divf %179, %cst_56 : f32
    %181 = vector.broadcast %180 : f32 to vector<1x32xf32>
    %182 = arith.subf %173, %181 : vector<1x32xf32>
    %183 = arith.mulf %182, %182 : vector<1x32xf32>
    %184 = vector.shape_cast %183 : vector<1x32xf32> to vector<1x1x32xf32>
    %cst_57 = arith.constant dense<0.000000e+00> : vector<1xf32>
    %185 = vector.multi_reduction <add>, %184, %cst_57 [1, 2] : vector<1x1x32xf32> to vector<1xf32>
    %186 = vector.shape_cast %185 : vector<1xf32> to vector<1x1x1xf32>
    %187 = vector.extract %186[0, 0, 0] : f32 from vector<1x1x1xf32>
    %cst_58 = arith.constant 3.100000e+01 : f32
    %188 = arith.divf %187, %cst_58 : f32
    %cst_59 = arith.constant 0.280488789 : f32
    %189 = arith.mulf %188, %cst_59 : f32
    %cst_60 = arith.constant 9.99999996E-13 : f32
    %190 = arith.maximumf %189, %cst_60 : f32
    %191 = tpu.transpose %173, [1, 0] : vector<1x32xf32> -> vector<32x1xf32>
    %192 = vector.broadcast %191 : vector<32x1xf32> to vector<32x32xf32>
    %193 = vector.broadcast %173 : vector<1x32xf32> to vector<32x32xf32>
    %194 = arith.subf %192, %193 : vector<32x32xf32>
    %cst_61 = arith.constant -5.000000e-01 : f32
    %195 = vector.broadcast %cst_61 : f32 to vector<32x32xf32>
    %196 = arith.mulf %195, %194 : vector<32x32xf32>
    %197 = arith.mulf %196, %194 : vector<32x32xf32>
    %198 = vector.broadcast %190 : f32 to vector<32x32xf32>
    %199 = arith.divf %197, %198 : vector<32x32xf32>
    %200 = math.exp %199 : vector<32x32xf32>
    %cst_62 = arith.constant dense<0.000000e+00> : vector<32xf32>
    %201 = vector.multi_reduction <add>, %200, %cst_62 [1] : vector<32x32xf32> to vector<32xf32>
    %202 = vector.shape_cast %201 : vector<32xf32> to vector<32x1xf32>
    %203 = vector.shape_cast %175 : vector<1x32xf32> to vector<1x1x32xf32>
    %cst_63 = arith.constant dense<0.000000e+00> : vector<1xf32>
    %204 = vector.multi_reduction <add>, %203, %cst_63 [1, 2] : vector<1x1x32xf32> to vector<1xf32>
    %205 = vector.shape_cast %204 : vector<1xf32> to vector<1x1x1xf32>
    %206 = vector.extract %205[0, 0, 0] : f32 from vector<1x1x1xf32>
    %cst_64 = arith.constant 3.200000e+01 : f32
    %207 = arith.divf %206, %cst_64 : f32
    %208 = vector.broadcast %207 : f32 to vector<1x32xf32>
    %209 = arith.subf %175, %208 : vector<1x32xf32>
    %210 = arith.mulf %209, %209 : vector<1x32xf32>
    %211 = vector.shape_cast %210 : vector<1x32xf32> to vector<1x1x32xf32>
    %cst_65 = arith.constant dense<0.000000e+00> : vector<1xf32>
    %212 = vector.multi_reduction <add>, %211, %cst_65 [1, 2] : vector<1x1x32xf32> to vector<1xf32>
    %213 = vector.shape_cast %212 : vector<1xf32> to vector<1x1x1xf32>
    %214 = vector.extract %213[0, 0, 0] : f32 from vector<1x1x1xf32>
    %cst_66 = arith.constant 3.100000e+01 : f32
    %215 = arith.divf %214, %cst_66 : f32
    %cst_67 = arith.constant 0.280488789 : f32
    %216 = arith.mulf %215, %cst_67 : f32
    %cst_68 = arith.constant 9.99999996E-13 : f32
    %217 = arith.maximumf %216, %cst_68 : f32
    %218 = tpu.transpose %175, [1, 0] : vector<1x32xf32> -> vector<32x1xf32>
    %219 = vector.broadcast %218 : vector<32x1xf32> to vector<32x32xf32>
    %220 = vector.broadcast %175 : vector<1x32xf32> to vector<32x32xf32>
    %221 = arith.subf %219, %220 : vector<32x32xf32>
    %cst_69 = arith.constant -5.000000e-01 : f32
    %222 = vector.broadcast %cst_69 : f32 to vector<32x32xf32>
    %223 = arith.mulf %222, %221 : vector<32x32xf32>
    %224 = arith.mulf %223, %221 : vector<32x32xf32>
    %225 = vector.broadcast %217 : f32 to vector<32x32xf32>
    %226 = arith.divf %224, %225 : vector<32x32xf32>
    %227 = math.exp %226 : vector<32x32xf32>
    %cst_70 = arith.constant dense<0.000000e+00> : vector<32xf32>
    %228 = vector.multi_reduction <add>, %227, %cst_70 [1] : vector<32x32xf32> to vector<32xf32>
    %229 = vector.shape_cast %228 : vector<32xf32> to vector<32x1xf32>
    %230 = vector.shape_cast %202 : vector<32x1xf32> to vector<1x32x1xf32>
    %cst_71 = arith.constant dense<0.000000e+00> : vector<1xf32>
    %231 = vector.multi_reduction <add>, %230, %cst_71 [1, 2] : vector<1x32x1xf32> to vector<1xf32>
    %232 = vector.shape_cast %231 : vector<1xf32> to vector<1x1x1xf32>
    %233 = vector.extract %232[0, 0, 0] : f32 from vector<1x1x1xf32>
    %234 = vector.broadcast %233 : f32 to vector<32x1xf32>
    %235 = arith.divf %202, %234 : vector<32x1xf32>
    %236 = vector.shape_cast %229 : vector<32x1xf32> to vector<1x32x1xf32>
    %cst_72 = arith.constant dense<0.000000e+00> : vector<1xf32>
    %237 = vector.multi_reduction <add>, %236, %cst_72 [1, 2] : vector<1x32x1xf32> to vector<1xf32>
    %238 = vector.shape_cast %237 : vector<1xf32> to vector<1x1x1xf32>
    %239 = vector.extract %238[0, 0, 0] : f32 from vector<1x1x1xf32>
    %240 = vector.broadcast %239 : f32 to vector<32x1xf32>
    %241 = arith.divf %229, %240 : vector<32x1xf32>
    %242 = arith.divf %235, %241 : vector<32x1xf32>
    %243 = math.log %242 : vector<32x1xf32>
    %244 = arith.mulf %235, %243 : vector<32x1xf32>
    %245 = vector.shape_cast %244 : vector<32x1xf32> to vector<1x32x1xf32>
    %cst_73 = arith.constant dense<0.000000e+00> : vector<1xf32>
    %246 = vector.multi_reduction <add>, %245, %cst_73 [1, 2] : vector<1x32x1xf32> to vector<1xf32>
    %247 = vector.shape_cast %246 : vector<1xf32> to vector<1x1x1xf32>
    %248 = vector.extract %247[0, 0, 0] : f32 from vector<1x1x1xf32>
    %249 = vector.extract_strided_slice %1 {offsets = [2, 0], sizes = [1, 32], strides = [1, 1]} : vector<16x32xf32> to vector<1x32xf32>
    %250 = arith.addf %169, %249 : vector<1x32xf32>
    %251 = vector.extract_strided_slice %1 {offsets = [3, 0], sizes = [1, 32], strides = [1, 1]} : vector<16x32xf32> to vector<1x32xf32>
    %252 = arith.addf %29, %251 : vector<1x32xf32>
    %253 = vector.shape_cast %250 : vector<1x32xf32> to vector<1x1x32xf32>
    %cst_74 = arith.constant dense<0.000000e+00> : vector<1xf32>
    %254 = vector.multi_reduction <add>, %253, %cst_74 [1, 2] : vector<1x1x32xf32> to vector<1xf32>
    %255 = vector.shape_cast %254 : vector<1xf32> to vector<1x1x1xf32>
    %256 = vector.extract %255[0, 0, 0] : f32 from vector<1x1x1xf32>
    %cst_75 = arith.constant 3.200000e+01 : f32
    %257 = arith.divf %256, %cst_75 : f32
    %258 = vector.broadcast %257 : f32 to vector<1x32xf32>
    %259 = arith.subf %250, %258 : vector<1x32xf32>
    %260 = arith.mulf %259, %259 : vector<1x32xf32>
    %261 = vector.shape_cast %260 : vector<1x32xf32> to vector<1x1x32xf32>
    %cst_76 = arith.constant dense<0.000000e+00> : vector<1xf32>
    %262 = vector.multi_reduction <add>, %261, %cst_76 [1, 2] : vector<1x1x32xf32> to vector<1xf32>
    %263 = vector.shape_cast %262 : vector<1xf32> to vector<1x1x1xf32>
    %264 = vector.extract %263[0, 0, 0] : f32 from vector<1x1x1xf32>
    %cst_77 = arith.constant 3.100000e+01 : f32
    %265 = arith.divf %264, %cst_77 : f32
    %cst_78 = arith.constant 0.280488789 : f32
    %266 = arith.mulf %265, %cst_78 : f32
    %cst_79 = arith.constant 9.99999996E-13 : f32
    %267 = arith.maximumf %266, %cst_79 : f32
    %268 = tpu.transpose %250, [1, 0] : vector<1x32xf32> -> vector<32x1xf32>
    %269 = vector.broadcast %268 : vector<32x1xf32> to vector<32x32xf32>
    %270 = vector.broadcast %250 : vector<1x32xf32> to vector<32x32xf32>
    %271 = arith.subf %269, %270 : vector<32x32xf32>
    %cst_80 = arith.constant -5.000000e-01 : f32
    %272 = vector.broadcast %cst_80 : f32 to vector<32x32xf32>
    %273 = arith.mulf %272, %271 : vector<32x32xf32>
    %274 = arith.mulf %273, %271 : vector<32x32xf32>
    %275 = vector.broadcast %267 : f32 to vector<32x32xf32>
    %276 = arith.divf %274, %275 : vector<32x32xf32>
    %277 = math.exp %276 : vector<32x32xf32>
    %cst_81 = arith.constant dense<0.000000e+00> : vector<32xf32>
    %278 = vector.multi_reduction <add>, %277, %cst_81 [1] : vector<32x32xf32> to vector<32xf32>
    %279 = vector.shape_cast %278 : vector<32xf32> to vector<32x1xf32>
    %280 = vector.shape_cast %252 : vector<1x32xf32> to vector<1x1x32xf32>
    %cst_82 = arith.constant dense<0.000000e+00> : vector<1xf32>
    %281 = vector.multi_reduction <add>, %280, %cst_82 [1, 2] : vector<1x1x32xf32> to vector<1xf32>
    %282 = vector.shape_cast %281 : vector<1xf32> to vector<1x1x1xf32>
    %283 = vector.extract %282[0, 0, 0] : f32 from vector<1x1x1xf32>
    %cst_83 = arith.constant 3.200000e+01 : f32
    %284 = arith.divf %283, %cst_83 : f32
    %285 = vector.broadcast %284 : f32 to vector<1x32xf32>
    %286 = arith.subf %252, %285 : vector<1x32xf32>
    %287 = arith.mulf %286, %286 : vector<1x32xf32>
    %288 = vector.shape_cast %287 : vector<1x32xf32> to vector<1x1x32xf32>
    %cst_84 = arith.constant dense<0.000000e+00> : vector<1xf32>
    %289 = vector.multi_reduction <add>, %288, %cst_84 [1, 2] : vector<1x1x32xf32> to vector<1xf32>
    %290 = vector.shape_cast %289 : vector<1xf32> to vector<1x1x1xf32>
    %291 = vector.extract %290[0, 0, 0] : f32 from vector<1x1x1xf32>
    %cst_85 = arith.constant 3.100000e+01 : f32
    %292 = arith.divf %291, %cst_85 : f32
    %cst_86 = arith.constant 0.280488789 : f32
    %293 = arith.mulf %292, %cst_86 : f32
    %cst_87 = arith.constant 9.99999996E-13 : f32
    %294 = arith.maximumf %293, %cst_87 : f32
    %295 = tpu.transpose %252, [1, 0] : vector<1x32xf32> -> vector<32x1xf32>
    %296 = vector.broadcast %295 : vector<32x1xf32> to vector<32x32xf32>
    %297 = vector.broadcast %252 : vector<1x32xf32> to vector<32x32xf32>
    %298 = arith.subf %296, %297 : vector<32x32xf32>
    %cst_88 = arith.constant -5.000000e-01 : f32
    %299 = vector.broadcast %cst_88 : f32 to vector<32x32xf32>
    %300 = arith.mulf %299, %298 : vector<32x32xf32>
    %301 = arith.mulf %300, %298 : vector<32x32xf32>
    %302 = vector.broadcast %294 : f32 to vector<32x32xf32>
    %303 = arith.divf %301, %302 : vector<32x32xf32>
    %304 = math.exp %303 : vector<32x32xf32>
    %cst_89 = arith.constant dense<0.000000e+00> : vector<32xf32>
    %305 = vector.multi_reduction <add>, %304, %cst_89 [1] : vector<32x32xf32> to vector<32xf32>
    %306 = vector.shape_cast %305 : vector<32xf32> to vector<32x1xf32>
    %307 = vector.shape_cast %279 : vector<32x1xf32> to vector<1x32x1xf32>
    %cst_90 = arith.constant dense<0.000000e+00> : vector<1xf32>
    %308 = vector.multi_reduction <add>, %307, %cst_90 [1, 2] : vector<1x32x1xf32> to vector<1xf32>
    %309 = vector.shape_cast %308 : vector<1xf32> to vector<1x1x1xf32>
    %310 = vector.extract %309[0, 0, 0] : f32 from vector<1x1x1xf32>
    %311 = vector.broadcast %310 : f32 to vector<32x1xf32>
    %312 = arith.divf %279, %311 : vector<32x1xf32>
    %313 = vector.shape_cast %306 : vector<32x1xf32> to vector<1x32x1xf32>
    %cst_91 = arith.constant dense<0.000000e+00> : vector<1xf32>
    %314 = vector.multi_reduction <add>, %313, %cst_91 [1, 2] : vector<1x32x1xf32> to vector<1xf32>
    %315 = vector.shape_cast %314 : vector<1xf32> to vector<1x1x1xf32>
    %316 = vector.extract %315[0, 0, 0] : f32 from vector<1x1x1xf32>
    %317 = vector.broadcast %316 : f32 to vector<32x1xf32>
    %318 = arith.divf %306, %317 : vector<32x1xf32>
    %319 = arith.divf %312, %318 : vector<32x1xf32>
    %320 = math.log %319 : vector<32x1xf32>
    %321 = arith.mulf %312, %320 : vector<32x1xf32>
    %322 = vector.shape_cast %321 : vector<32x1xf32> to vector<1x32x1xf32>
    %cst_92 = arith.constant dense<0.000000e+00> : vector<1xf32>
    %323 = vector.multi_reduction <add>, %322, %cst_92 [1, 2] : vector<1x32x1xf32> to vector<1xf32>
    %324 = vector.shape_cast %323 : vector<1xf32> to vector<1x1x1xf32>
    %325 = vector.extract %324[0, 0, 0] : f32 from vector<1x1x1xf32>
    %326 = vector.extract_strided_slice %1 {offsets = [4, 0], sizes = [1, 32], strides = [1, 1]} : vector<16x32xf32> to vector<1x32xf32>
    %327 = arith.addf %170, %326 : vector<1x32xf32>
    %328 = vector.extract_strided_slice %1 {offsets = [5, 0], sizes = [1, 32], strides = [1, 1]} : vector<16x32xf32> to vector<1x32xf32>
    %329 = arith.addf %34, %328 : vector<1x32xf32>
    %330 = vector.shape_cast %327 : vector<1x32xf32> to vector<1x1x32xf32>
    %cst_93 = arith.constant dense<0.000000e+00> : vector<1xf32>
    %331 = vector.multi_reduction <add>, %330, %cst_93 [1, 2] : vector<1x1x32xf32> to vector<1xf32>
    %332 = vector.shape_cast %331 : vector<1xf32> to vector<1x1x1xf32>
    %333 = vector.extract %332[0, 0, 0] : f32 from vector<1x1x1xf32>
    %cst_94 = arith.constant 3.200000e+01 : f32
    %334 = arith.divf %333, %cst_94 : f32
    %335 = vector.broadcast %334 : f32 to vector<1x32xf32>
    %336 = arith.subf %327, %335 : vector<1x32xf32>
    %337 = arith.mulf %336, %336 : vector<1x32xf32>
    %338 = vector.shape_cast %337 : vector<1x32xf32> to vector<1x1x32xf32>
    %cst_95 = arith.constant dense<0.000000e+00> : vector<1xf32>
    %339 = vector.multi_reduction <add>, %338, %cst_95 [1, 2] : vector<1x1x32xf32> to vector<1xf32>
    %340 = vector.shape_cast %339 : vector<1xf32> to vector<1x1x1xf32>
    %341 = vector.extract %340[0, 0, 0] : f32 from vector<1x1x1xf32>
    %cst_96 = arith.constant 3.100000e+01 : f32
    %342 = arith.divf %341, %cst_96 : f32
    %cst_97 = arith.constant 0.280488789 : f32
    %343 = arith.mulf %342, %cst_97 : f32
    %cst_98 = arith.constant 9.99999996E-13 : f32
    %344 = arith.maximumf %343, %cst_98 : f32
    %345 = tpu.transpose %327, [1, 0] : vector<1x32xf32> -> vector<32x1xf32>
    %346 = vector.broadcast %345 : vector<32x1xf32> to vector<32x32xf32>
    %347 = vector.broadcast %327 : vector<1x32xf32> to vector<32x32xf32>
    %348 = arith.subf %346, %347 : vector<32x32xf32>
    %cst_99 = arith.constant -5.000000e-01 : f32
    %349 = vector.broadcast %cst_99 : f32 to vector<32x32xf32>
    %350 = arith.mulf %349, %348 : vector<32x32xf32>
    %351 = arith.mulf %350, %348 : vector<32x32xf32>
    %352 = vector.broadcast %344 : f32 to vector<32x32xf32>
    %353 = arith.divf %351, %352 : vector<32x32xf32>
    %354 = math.exp %353 : vector<32x32xf32>
    %cst_100 = arith.constant dense<0.000000e+00> : vector<32xf32>
    %355 = vector.multi_reduction <add>, %354, %cst_100 [1] : vector<32x32xf32> to vector<32xf32>
    %356 = vector.shape_cast %355 : vector<32xf32> to vector<32x1xf32>
    %357 = vector.shape_cast %329 : vector<1x32xf32> to vector<1x1x32xf32>
    %cst_101 = arith.constant dense<0.000000e+00> : vector<1xf32>
    %358 = vector.multi_reduction <add>, %357, %cst_101 [1, 2] : vector<1x1x32xf32> to vector<1xf32>
    %359 = vector.shape_cast %358 : vector<1xf32> to vector<1x1x1xf32>
    %360 = vector.extract %359[0, 0, 0] : f32 from vector<1x1x1xf32>
    %cst_102 = arith.constant 3.200000e+01 : f32
    %361 = arith.divf %360, %cst_102 : f32
    %362 = vector.broadcast %361 : f32 to vector<1x32xf32>
    %363 = arith.subf %329, %362 : vector<1x32xf32>
    %364 = arith.mulf %363, %363 : vector<1x32xf32>
    %365 = vector.shape_cast %364 : vector<1x32xf32> to vector<1x1x32xf32>
    %cst_103 = arith.constant dense<0.000000e+00> : vector<1xf32>
    %366 = vector.multi_reduction <add>, %365, %cst_103 [1, 2] : vector<1x1x32xf32> to vector<1xf32>
    %367 = vector.shape_cast %366 : vector<1xf32> to vector<1x1x1xf32>
    %368 = vector.extract %367[0, 0, 0] : f32 from vector<1x1x1xf32>
    %cst_104 = arith.constant 3.100000e+01 : f32
    %369 = arith.divf %368, %cst_104 : f32
    %cst_105 = arith.constant 0.280488789 : f32
    %370 = arith.mulf %369, %cst_105 : f32
    %cst_106 = arith.constant 9.99999996E-13 : f32
    %371 = arith.maximumf %370, %cst_106 : f32
    %372 = tpu.transpose %329, [1, 0] : vector<1x32xf32> -> vector<32x1xf32>
    %373 = vector.broadcast %372 : vector<32x1xf32> to vector<32x32xf32>
    %374 = vector.broadcast %329 : vector<1x32xf32> to vector<32x32xf32>
    %375 = arith.subf %373, %374 : vector<32x32xf32>
    %cst_107 = arith.constant -5.000000e-01 : f32
    %376 = vector.broadcast %cst_107 : f32 to vector<32x32xf32>
    %377 = arith.mulf %376, %375 : vector<32x32xf32>
    %378 = arith.mulf %377, %375 : vector<32x32xf32>
    %379 = vector.broadcast %371 : f32 to vector<32x32xf32>
    %380 = arith.divf %378, %379 : vector<32x32xf32>
    %381 = math.exp %380 : vector<32x32xf32>
    %cst_108 = arith.constant dense<0.000000e+00> : vector<32xf32>
    %382 = vector.multi_reduction <add>, %381, %cst_108 [1] : vector<32x32xf32> to vector<32xf32>
    %383 = vector.shape_cast %382 : vector<32xf32> to vector<32x1xf32>
    %384 = vector.shape_cast %356 : vector<32x1xf32> to vector<1x32x1xf32>
    %cst_109 = arith.constant dense<0.000000e+00> : vector<1xf32>
    %385 = vector.multi_reduction <add>, %384, %cst_109 [1, 2] : vector<1x32x1xf32> to vector<1xf32>
    %386 = vector.shape_cast %385 : vector<1xf32> to vector<1x1x1xf32>
    %387 = vector.extract %386[0, 0, 0] : f32 from vector<1x1x1xf32>
    %388 = vector.broadcast %387 : f32 to vector<32x1xf32>
    %389 = arith.divf %356, %388 : vector<32x1xf32>
    %390 = vector.shape_cast %383 : vector<32x1xf32> to vector<1x32x1xf32>
    %cst_110 = arith.constant dense<0.000000e+00> : vector<1xf32>
    %391 = vector.multi_reduction <add>, %390, %cst_110 [1, 2] : vector<1x32x1xf32> to vector<1xf32>
    %392 = vector.shape_cast %391 : vector<1xf32> to vector<1x1x1xf32>
    %393 = vector.extract %392[0, 0, 0] : f32 from vector<1x1x1xf32>
    %394 = vector.broadcast %393 : f32 to vector<32x1xf32>
    %395 = arith.divf %383, %394 : vector<32x1xf32>
    %396 = arith.divf %389, %395 : vector<32x1xf32>
    %397 = math.log %396 : vector<32x1xf32>
    %398 = arith.mulf %389, %397 : vector<32x1xf32>
    %399 = vector.shape_cast %398 : vector<32x1xf32> to vector<1x32x1xf32>
    %cst_111 = arith.constant dense<0.000000e+00> : vector<1xf32>
    %400 = vector.multi_reduction <add>, %399, %cst_111 [1, 2] : vector<1x32x1xf32> to vector<1xf32>
    %401 = vector.shape_cast %400 : vector<1xf32> to vector<1x1x1xf32>
    %402 = vector.extract %401[0, 0, 0] : f32 from vector<1x1x1xf32>
    %403 = vector.extract_strided_slice %1 {offsets = [6, 0], sizes = [1, 32], strides = [1, 1]} : vector<16x32xf32> to vector<1x32xf32>
    %404 = arith.addf %171, %403 : vector<1x32xf32>
    %405 = vector.extract_strided_slice %1 {offsets = [7, 0], sizes = [1, 32], strides = [1, 1]} : vector<16x32xf32> to vector<1x32xf32>
    %406 = arith.addf %39, %405 : vector<1x32xf32>
    %407 = vector.shape_cast %404 : vector<1x32xf32> to vector<1x1x32xf32>
    %cst_112 = arith.constant dense<0.000000e+00> : vector<1xf32>
    %408 = vector.multi_reduction <add>, %407, %cst_112 [1, 2] : vector<1x1x32xf32> to vector<1xf32>
    %409 = vector.shape_cast %408 : vector<1xf32> to vector<1x1x1xf32>
    %410 = vector.extract %409[0, 0, 0] : f32 from vector<1x1x1xf32>
    %cst_113 = arith.constant 3.200000e+01 : f32
    %411 = arith.divf %410, %cst_113 : f32
    %412 = vector.broadcast %411 : f32 to vector<1x32xf32>
    %413 = arith.subf %404, %412 : vector<1x32xf32>
    %414 = arith.mulf %413, %413 : vector<1x32xf32>
    %415 = vector.shape_cast %414 : vector<1x32xf32> to vector<1x1x32xf32>
    %cst_114 = arith.constant dense<0.000000e+00> : vector<1xf32>
    %416 = vector.multi_reduction <add>, %415, %cst_114 [1, 2] : vector<1x1x32xf32> to vector<1xf32>
    %417 = vector.shape_cast %416 : vector<1xf32> to vector<1x1x1xf32>
    %418 = vector.extract %417[0, 0, 0] : f32 from vector<1x1x1xf32>
    %cst_115 = arith.constant 3.100000e+01 : f32
    %419 = arith.divf %418, %cst_115 : f32
    %cst_116 = arith.constant 0.280488789 : f32
    %420 = arith.mulf %419, %cst_116 : f32
    %cst_117 = arith.constant 9.99999996E-13 : f32
    %421 = arith.maximumf %420, %cst_117 : f32
    %422 = tpu.transpose %404, [1, 0] : vector<1x32xf32> -> vector<32x1xf32>
    %423 = vector.broadcast %422 : vector<32x1xf32> to vector<32x32xf32>
    %424 = vector.broadcast %404 : vector<1x32xf32> to vector<32x32xf32>
    %425 = arith.subf %423, %424 : vector<32x32xf32>
    %cst_118 = arith.constant -5.000000e-01 : f32
    %426 = vector.broadcast %cst_118 : f32 to vector<32x32xf32>
    %427 = arith.mulf %426, %425 : vector<32x32xf32>
    %428 = arith.mulf %427, %425 : vector<32x32xf32>
    %429 = vector.broadcast %421 : f32 to vector<32x32xf32>
    %430 = arith.divf %428, %429 : vector<32x32xf32>
    %431 = math.exp %430 : vector<32x32xf32>
    %cst_119 = arith.constant dense<0.000000e+00> : vector<32xf32>
    %432 = vector.multi_reduction <add>, %431, %cst_119 [1] : vector<32x32xf32> to vector<32xf32>
    %433 = vector.shape_cast %432 : vector<32xf32> to vector<32x1xf32>
    %434 = vector.shape_cast %406 : vector<1x32xf32> to vector<1x1x32xf32>
    %cst_120 = arith.constant dense<0.000000e+00> : vector<1xf32>
    %435 = vector.multi_reduction <add>, %434, %cst_120 [1, 2] : vector<1x1x32xf32> to vector<1xf32>
    %436 = vector.shape_cast %435 : vector<1xf32> to vector<1x1x1xf32>
    %437 = vector.extract %436[0, 0, 0] : f32 from vector<1x1x1xf32>
    %cst_121 = arith.constant 3.200000e+01 : f32
    %438 = arith.divf %437, %cst_121 : f32
    %439 = vector.broadcast %438 : f32 to vector<1x32xf32>
    %440 = arith.subf %406, %439 : vector<1x32xf32>
    %441 = arith.mulf %440, %440 : vector<1x32xf32>
    %442 = vector.shape_cast %441 : vector<1x32xf32> to vector<1x1x32xf32>
    %cst_122 = arith.constant dense<0.000000e+00> : vector<1xf32>
    %443 = vector.multi_reduction <add>, %442, %cst_122 [1, 2] : vector<1x1x32xf32> to vector<1xf32>
    %444 = vector.shape_cast %443 : vector<1xf32> to vector<1x1x1xf32>
    %445 = vector.extract %444[0, 0, 0] : f32 from vector<1x1x1xf32>
    %cst_123 = arith.constant 3.100000e+01 : f32
    %446 = arith.divf %445, %cst_123 : f32
    %cst_124 = arith.constant 0.280488789 : f32
    %447 = arith.mulf %446, %cst_124 : f32
    %cst_125 = arith.constant 9.99999996E-13 : f32
    %448 = arith.maximumf %447, %cst_125 : f32
    %449 = tpu.transpose %406, [1, 0] : vector<1x32xf32> -> vector<32x1xf32>
    %450 = vector.broadcast %449 : vector<32x1xf32> to vector<32x32xf32>
    %451 = vector.broadcast %406 : vector<1x32xf32> to vector<32x32xf32>
    %452 = arith.subf %450, %451 : vector<32x32xf32>
    %cst_126 = arith.constant -5.000000e-01 : f32
    %453 = vector.broadcast %cst_126 : f32 to vector<32x32xf32>
    %454 = arith.mulf %453, %452 : vector<32x32xf32>
    %455 = arith.mulf %454, %452 : vector<32x32xf32>
    %456 = vector.broadcast %448 : f32 to vector<32x32xf32>
    %457 = arith.divf %455, %456 : vector<32x32xf32>
    %458 = math.exp %457 : vector<32x32xf32>
    %cst_127 = arith.constant dense<0.000000e+00> : vector<32xf32>
    %459 = vector.multi_reduction <add>, %458, %cst_127 [1] : vector<32x32xf32> to vector<32xf32>
    %460 = vector.shape_cast %459 : vector<32xf32> to vector<32x1xf32>
    %461 = vector.shape_cast %433 : vector<32x1xf32> to vector<1x32x1xf32>
    %cst_128 = arith.constant dense<0.000000e+00> : vector<1xf32>
    %462 = vector.multi_reduction <add>, %461, %cst_128 [1, 2] : vector<1x32x1xf32> to vector<1xf32>
    %463 = vector.shape_cast %462 : vector<1xf32> to vector<1x1x1xf32>
    %464 = vector.extract %463[0, 0, 0] : f32 from vector<1x1x1xf32>
    %465 = vector.broadcast %464 : f32 to vector<32x1xf32>
    %466 = arith.divf %433, %465 : vector<32x1xf32>
    %467 = vector.shape_cast %460 : vector<32x1xf32> to vector<1x32x1xf32>
    %cst_129 = arith.constant dense<0.000000e+00> : vector<1xf32>
    %468 = vector.multi_reduction <add>, %467, %cst_129 [1, 2] : vector<1x32x1xf32> to vector<1xf32>
    %469 = vector.shape_cast %468 : vector<1xf32> to vector<1x1x1xf32>
    %470 = vector.extract %469[0, 0, 0] : f32 from vector<1x1x1xf32>
    %471 = vector.broadcast %470 : f32 to vector<32x1xf32>
    %472 = arith.divf %460, %471 : vector<32x1xf32>
    %473 = arith.divf %466, %472 : vector<32x1xf32>
    %474 = math.log %473 : vector<32x1xf32>
    %475 = arith.mulf %466, %474 : vector<32x1xf32>
    %476 = vector.shape_cast %475 : vector<32x1xf32> to vector<1x32x1xf32>
    %cst_130 = arith.constant dense<0.000000e+00> : vector<1xf32>
    %477 = vector.multi_reduction <add>, %476, %cst_130 [1, 2] : vector<1x32x1xf32> to vector<1xf32>
    %478 = vector.shape_cast %477 : vector<1xf32> to vector<1x1x1xf32>
    %479 = vector.extract %478[0, 0, 0] : f32 from vector<1x1x1xf32>
    %480 = vector.extract_strided_slice %1 {offsets = [8, 0], sizes = [1, 32], strides = [1, 1]} : vector<16x32xf32> to vector<1x32xf32>
    %481 = arith.addf %168, %480 : vector<1x32xf32>
    %482 = vector.extract_strided_slice %1 {offsets = [9, 0], sizes = [1, 32], strides = [1, 1]} : vector<16x32xf32> to vector<1x32xf32>
    %483 = arith.addf %4, %482 : vector<1x32xf32>
    %484 = vector.shape_cast %481 : vector<1x32xf32> to vector<1x1x32xf32>
    %cst_131 = arith.constant dense<0.000000e+00> : vector<1xf32>
    %485 = vector.multi_reduction <add>, %484, %cst_131 [1, 2] : vector<1x1x32xf32> to vector<1xf32>
    %486 = vector.shape_cast %485 : vector<1xf32> to vector<1x1x1xf32>
    %487 = vector.extract %486[0, 0, 0] : f32 from vector<1x1x1xf32>
    %cst_132 = arith.constant 3.200000e+01 : f32
    %488 = arith.divf %487, %cst_132 : f32
    %489 = vector.broadcast %488 : f32 to vector<1x32xf32>
    %490 = arith.subf %481, %489 : vector<1x32xf32>
    %491 = arith.mulf %490, %490 : vector<1x32xf32>
    %492 = vector.shape_cast %491 : vector<1x32xf32> to vector<1x1x32xf32>
    %cst_133 = arith.constant dense<0.000000e+00> : vector<1xf32>
    %493 = vector.multi_reduction <add>, %492, %cst_133 [1, 2] : vector<1x1x32xf32> to vector<1xf32>
    %494 = vector.shape_cast %493 : vector<1xf32> to vector<1x1x1xf32>
    %495 = vector.extract %494[0, 0, 0] : f32 from vector<1x1x1xf32>
    %cst_134 = arith.constant 3.100000e+01 : f32
    %496 = arith.divf %495, %cst_134 : f32
    %cst_135 = arith.constant 0.280488789 : f32
    %497 = arith.mulf %496, %cst_135 : f32
    %cst_136 = arith.constant 9.99999996E-13 : f32
    %498 = arith.maximumf %497, %cst_136 : f32
    %499 = tpu.transpose %481, [1, 0] : vector<1x32xf32> -> vector<32x1xf32>
    %500 = vector.broadcast %499 : vector<32x1xf32> to vector<32x32xf32>
    %501 = vector.broadcast %481 : vector<1x32xf32> to vector<32x32xf32>
    %502 = arith.subf %500, %501 : vector<32x32xf32>
    %cst_137 = arith.constant -5.000000e-01 : f32
    %503 = vector.broadcast %cst_137 : f32 to vector<32x32xf32>
    %504 = arith.mulf %503, %502 : vector<32x32xf32>
    %505 = arith.mulf %504, %502 : vector<32x32xf32>
    %506 = vector.broadcast %498 : f32 to vector<32x32xf32>
    %507 = arith.divf %505, %506 : vector<32x32xf32>
    %508 = math.exp %507 : vector<32x32xf32>
    %cst_138 = arith.constant dense<0.000000e+00> : vector<32xf32>
    %509 = vector.multi_reduction <add>, %508, %cst_138 [1] : vector<32x32xf32> to vector<32xf32>
    %510 = vector.shape_cast %509 : vector<32xf32> to vector<32x1xf32>
    %511 = vector.shape_cast %483 : vector<1x32xf32> to vector<1x1x32xf32>
    %cst_139 = arith.constant dense<0.000000e+00> : vector<1xf32>
    %512 = vector.multi_reduction <add>, %511, %cst_139 [1, 2] : vector<1x1x32xf32> to vector<1xf32>
    %513 = vector.shape_cast %512 : vector<1xf32> to vector<1x1x1xf32>
    %514 = vector.extract %513[0, 0, 0] : f32 from vector<1x1x1xf32>
    %cst_140 = arith.constant 3.200000e+01 : f32
    %515 = arith.divf %514, %cst_140 : f32
    %516 = vector.broadcast %515 : f32 to vector<1x32xf32>
    %517 = arith.subf %483, %516 : vector<1x32xf32>
    %518 = arith.mulf %517, %517 : vector<1x32xf32>
    %519 = vector.shape_cast %518 : vector<1x32xf32> to vector<1x1x32xf32>
    %cst_141 = arith.constant dense<0.000000e+00> : vector<1xf32>
    %520 = vector.multi_reduction <add>, %519, %cst_141 [1, 2] : vector<1x1x32xf32> to vector<1xf32>
    %521 = vector.shape_cast %520 : vector<1xf32> to vector<1x1x1xf32>
    %522 = vector.extract %521[0, 0, 0] : f32 from vector<1x1x1xf32>
    %cst_142 = arith.constant 3.100000e+01 : f32
    %523 = arith.divf %522, %cst_142 : f32
    %cst_143 = arith.constant 0.280488789 : f32
    %524 = arith.mulf %523, %cst_143 : f32
    %cst_144 = arith.constant 9.99999996E-13 : f32
    %525 = arith.maximumf %524, %cst_144 : f32
    %526 = tpu.transpose %483, [1, 0] : vector<1x32xf32> -> vector<32x1xf32>
    %527 = vector.broadcast %526 : vector<32x1xf32> to vector<32x32xf32>
    %528 = vector.broadcast %483 : vector<1x32xf32> to vector<32x32xf32>
    %529 = arith.subf %527, %528 : vector<32x32xf32>
    %cst_145 = arith.constant -5.000000e-01 : f32
    %530 = vector.broadcast %cst_145 : f32 to vector<32x32xf32>
    %531 = arith.mulf %530, %529 : vector<32x32xf32>
    %532 = arith.mulf %531, %529 : vector<32x32xf32>
    %533 = vector.broadcast %525 : f32 to vector<32x32xf32>
    %534 = arith.divf %532, %533 : vector<32x32xf32>
    %535 = math.exp %534 : vector<32x32xf32>
    %cst_146 = arith.constant dense<0.000000e+00> : vector<32xf32>
    %536 = vector.multi_reduction <add>, %535, %cst_146 [1] : vector<32x32xf32> to vector<32xf32>
    %537 = vector.shape_cast %536 : vector<32xf32> to vector<32x1xf32>
    %538 = vector.shape_cast %510 : vector<32x1xf32> to vector<1x32x1xf32>
    %cst_147 = arith.constant dense<0.000000e+00> : vector<1xf32>
    %539 = vector.multi_reduction <add>, %538, %cst_147 [1, 2] : vector<1x32x1xf32> to vector<1xf32>
    %540 = vector.shape_cast %539 : vector<1xf32> to vector<1x1x1xf32>
    %541 = vector.extract %540[0, 0, 0] : f32 from vector<1x1x1xf32>
    %542 = vector.broadcast %541 : f32 to vector<32x1xf32>
    %543 = arith.divf %510, %542 : vector<32x1xf32>
    %544 = vector.shape_cast %537 : vector<32x1xf32> to vector<1x32x1xf32>
    %cst_148 = arith.constant dense<0.000000e+00> : vector<1xf32>
    %545 = vector.multi_reduction <add>, %544, %cst_148 [1, 2] : vector<1x32x1xf32> to vector<1xf32>
    %546 = vector.shape_cast %545 : vector<1xf32> to vector<1x1x1xf32>
    %547 = vector.extract %546[0, 0, 0] : f32 from vector<1x1x1xf32>
    %548 = vector.broadcast %547 : f32 to vector<32x1xf32>
    %549 = arith.divf %537, %548 : vector<32x1xf32>
    %550 = arith.divf %543, %549 : vector<32x1xf32>
    %551 = math.log %550 : vector<32x1xf32>
    %552 = arith.mulf %543, %551 : vector<32x1xf32>
    %553 = vector.shape_cast %552 : vector<32x1xf32> to vector<1x32x1xf32>
    %cst_149 = arith.constant dense<0.000000e+00> : vector<1xf32>
    %554 = vector.multi_reduction <add>, %553, %cst_149 [1, 2] : vector<1x32x1xf32> to vector<1xf32>
    %555 = vector.shape_cast %554 : vector<1xf32> to vector<1x1x1xf32>
    %556 = vector.extract %555[0, 0, 0] : f32 from vector<1x1x1xf32>
    %557 = vector.extract_strided_slice %1 {offsets = [10, 0], sizes = [1, 32], strides = [1, 1]} : vector<16x32xf32> to vector<1x32xf32>
    %558 = arith.addf %169, %557 : vector<1x32xf32>
    %559 = vector.extract_strided_slice %1 {offsets = [11, 0], sizes = [1, 32], strides = [1, 1]} : vector<16x32xf32> to vector<1x32xf32>
    %560 = arith.addf %9, %559 : vector<1x32xf32>
    %561 = vector.shape_cast %558 : vector<1x32xf32> to vector<1x1x32xf32>
    %cst_150 = arith.constant dense<0.000000e+00> : vector<1xf32>
    %562 = vector.multi_reduction <add>, %561, %cst_150 [1, 2] : vector<1x1x32xf32> to vector<1xf32>
    %563 = vector.shape_cast %562 : vector<1xf32> to vector<1x1x1xf32>
    %564 = vector.extract %563[0, 0, 0] : f32 from vector<1x1x1xf32>
    %cst_151 = arith.constant 3.200000e+01 : f32
    %565 = arith.divf %564, %cst_151 : f32
    %566 = vector.broadcast %565 : f32 to vector<1x32xf32>
    %567 = arith.subf %558, %566 : vector<1x32xf32>
    %568 = arith.mulf %567, %567 : vector<1x32xf32>
    %569 = vector.shape_cast %568 : vector<1x32xf32> to vector<1x1x32xf32>
    %cst_152 = arith.constant dense<0.000000e+00> : vector<1xf32>
    %570 = vector.multi_reduction <add>, %569, %cst_152 [1, 2] : vector<1x1x32xf32> to vector<1xf32>
    %571 = vector.shape_cast %570 : vector<1xf32> to vector<1x1x1xf32>
    %572 = vector.extract %571[0, 0, 0] : f32 from vector<1x1x1xf32>
    %cst_153 = arith.constant 3.100000e+01 : f32
    %573 = arith.divf %572, %cst_153 : f32
    %cst_154 = arith.constant 0.280488789 : f32
    %574 = arith.mulf %573, %cst_154 : f32
    %cst_155 = arith.constant 9.99999996E-13 : f32
    %575 = arith.maximumf %574, %cst_155 : f32
    %576 = tpu.transpose %558, [1, 0] : vector<1x32xf32> -> vector<32x1xf32>
    %577 = vector.broadcast %576 : vector<32x1xf32> to vector<32x32xf32>
    %578 = vector.broadcast %558 : vector<1x32xf32> to vector<32x32xf32>
    %579 = arith.subf %577, %578 : vector<32x32xf32>
    %cst_156 = arith.constant -5.000000e-01 : f32
    %580 = vector.broadcast %cst_156 : f32 to vector<32x32xf32>
    %581 = arith.mulf %580, %579 : vector<32x32xf32>
    %582 = arith.mulf %581, %579 : vector<32x32xf32>
    %583 = vector.broadcast %575 : f32 to vector<32x32xf32>
    %584 = arith.divf %582, %583 : vector<32x32xf32>
    %585 = math.exp %584 : vector<32x32xf32>
    %cst_157 = arith.constant dense<0.000000e+00> : vector<32xf32>
    %586 = vector.multi_reduction <add>, %585, %cst_157 [1] : vector<32x32xf32> to vector<32xf32>
    %587 = vector.shape_cast %586 : vector<32xf32> to vector<32x1xf32>
    %588 = vector.shape_cast %560 : vector<1x32xf32> to vector<1x1x32xf32>
    %cst_158 = arith.constant dense<0.000000e+00> : vector<1xf32>
    %589 = vector.multi_reduction <add>, %588, %cst_158 [1, 2] : vector<1x1x32xf32> to vector<1xf32>
    %590 = vector.shape_cast %589 : vector<1xf32> to vector<1x1x1xf32>
    %591 = vector.extract %590[0, 0, 0] : f32 from vector<1x1x1xf32>
    %cst_159 = arith.constant 3.200000e+01 : f32
    %592 = arith.divf %591, %cst_159 : f32
    %593 = vector.broadcast %592 : f32 to vector<1x32xf32>
    %594 = arith.subf %560, %593 : vector<1x32xf32>
    %595 = arith.mulf %594, %594 : vector<1x32xf32>
    %596 = vector.shape_cast %595 : vector<1x32xf32> to vector<1x1x32xf32>
    %cst_160 = arith.constant dense<0.000000e+00> : vector<1xf32>
    %597 = vector.multi_reduction <add>, %596, %cst_160 [1, 2] : vector<1x1x32xf32> to vector<1xf32>
    %598 = vector.shape_cast %597 : vector<1xf32> to vector<1x1x1xf32>
    %599 = vector.extract %598[0, 0, 0] : f32 from vector<1x1x1xf32>
    %cst_161 = arith.constant 3.100000e+01 : f32
    %600 = arith.divf %599, %cst_161 : f32
    %cst_162 = arith.constant 0.280488789 : f32
    %601 = arith.mulf %600, %cst_162 : f32
    %cst_163 = arith.constant 9.99999996E-13 : f32
    %602 = arith.maximumf %601, %cst_163 : f32
    %603 = tpu.transpose %560, [1, 0] : vector<1x32xf32> -> vector<32x1xf32>
    %604 = vector.broadcast %603 : vector<32x1xf32> to vector<32x32xf32>
    %605 = vector.broadcast %560 : vector<1x32xf32> to vector<32x32xf32>
    %606 = arith.subf %604, %605 : vector<32x32xf32>
    %cst_164 = arith.constant -5.000000e-01 : f32
    %607 = vector.broadcast %cst_164 : f32 to vector<32x32xf32>
    %608 = arith.mulf %607, %606 : vector<32x32xf32>
    %609 = arith.mulf %608, %606 : vector<32x32xf32>
    %610 = vector.broadcast %602 : f32 to vector<32x32xf32>
    %611 = arith.divf %609, %610 : vector<32x32xf32>
    %612 = math.exp %611 : vector<32x32xf32>
    %cst_165 = arith.constant dense<0.000000e+00> : vector<32xf32>
    %613 = vector.multi_reduction <add>, %612, %cst_165 [1] : vector<32x32xf32> to vector<32xf32>
    %614 = vector.shape_cast %613 : vector<32xf32> to vector<32x1xf32>
    %615 = vector.shape_cast %587 : vector<32x1xf32> to vector<1x32x1xf32>
    %cst_166 = arith.constant dense<0.000000e+00> : vector<1xf32>
    %616 = vector.multi_reduction <add>, %615, %cst_166 [1, 2] : vector<1x32x1xf32> to vector<1xf32>
    %617 = vector.shape_cast %616 : vector<1xf32> to vector<1x1x1xf32>
    %618 = vector.extract %617[0, 0, 0] : f32 from vector<1x1x1xf32>
    %619 = vector.broadcast %618 : f32 to vector<32x1xf32>
    %620 = arith.divf %587, %619 : vector<32x1xf32>
    %621 = vector.shape_cast %614 : vector<32x1xf32> to vector<1x32x1xf32>
    %cst_167 = arith.constant dense<0.000000e+00> : vector<1xf32>
    %622 = vector.multi_reduction <add>, %621, %cst_167 [1, 2] : vector<1x32x1xf32> to vector<1xf32>
    %623 = vector.shape_cast %622 : vector<1xf32> to vector<1x1x1xf32>
    %624 = vector.extract %623[0, 0, 0] : f32 from vector<1x1x1xf32>
    %625 = vector.broadcast %624 : f32 to vector<32x1xf32>
    %626 = arith.divf %614, %625 : vector<32x1xf32>
    %627 = arith.divf %620, %626 : vector<32x1xf32>
    %628 = math.log %627 : vector<32x1xf32>
    %629 = arith.mulf %620, %628 : vector<32x1xf32>
    %630 = vector.shape_cast %629 : vector<32x1xf32> to vector<1x32x1xf32>
    %cst_168 = arith.constant dense<0.000000e+00> : vector<1xf32>
    %631 = vector.multi_reduction <add>, %630, %cst_168 [1, 2] : vector<1x32x1xf32> to vector<1xf32>
    %632 = vector.shape_cast %631 : vector<1xf32> to vector<1x1x1xf32>
    %633 = vector.extract %632[0, 0, 0] : f32 from vector<1x1x1xf32>
    %634 = vector.extract_strided_slice %1 {offsets = [12, 0], sizes = [1, 32], strides = [1, 1]} : vector<16x32xf32> to vector<1x32xf32>
    %635 = arith.addf %170, %634 : vector<1x32xf32>
    %636 = vector.extract_strided_slice %1 {offsets = [13, 0], sizes = [1, 32], strides = [1, 1]} : vector<16x32xf32> to vector<1x32xf32>
    %637 = arith.addf %14, %636 : vector<1x32xf32>
    %638 = vector.shape_cast %635 : vector<1x32xf32> to vector<1x1x32xf32>
    %cst_169 = arith.constant dense<0.000000e+00> : vector<1xf32>
    %639 = vector.multi_reduction <add>, %638, %cst_169 [1, 2] : vector<1x1x32xf32> to vector<1xf32>
    %640 = vector.shape_cast %639 : vector<1xf32> to vector<1x1x1xf32>
    %641 = vector.extract %640[0, 0, 0] : f32 from vector<1x1x1xf32>
    %cst_170 = arith.constant 3.200000e+01 : f32
    %642 = arith.divf %641, %cst_170 : f32
    %643 = vector.broadcast %642 : f32 to vector<1x32xf32>
    %644 = arith.subf %635, %643 : vector<1x32xf32>
    %645 = arith.mulf %644, %644 : vector<1x32xf32>
    %646 = vector.shape_cast %645 : vector<1x32xf32> to vector<1x1x32xf32>
    %cst_171 = arith.constant dense<0.000000e+00> : vector<1xf32>
    %647 = vector.multi_reduction <add>, %646, %cst_171 [1, 2] : vector<1x1x32xf32> to vector<1xf32>
    %648 = vector.shape_cast %647 : vector<1xf32> to vector<1x1x1xf32>
    %649 = vector.extract %648[0, 0, 0] : f32 from vector<1x1x1xf32>
    %cst_172 = arith.constant 3.100000e+01 : f32
    %650 = arith.divf %649, %cst_172 : f32
    %cst_173 = arith.constant 0.280488789 : f32
    %651 = arith.mulf %650, %cst_173 : f32
    %cst_174 = arith.constant 9.99999996E-13 : f32
    %652 = arith.maximumf %651, %cst_174 : f32
    %653 = tpu.transpose %635, [1, 0] : vector<1x32xf32> -> vector<32x1xf32>
    %654 = vector.broadcast %653 : vector<32x1xf32> to vector<32x32xf32>
    %655 = vector.broadcast %635 : vector<1x32xf32> to vector<32x32xf32>
    %656 = arith.subf %654, %655 : vector<32x32xf32>
    %cst_175 = arith.constant -5.000000e-01 : f32
    %657 = vector.broadcast %cst_175 : f32 to vector<32x32xf32>
    %658 = arith.mulf %657, %656 : vector<32x32xf32>
    %659 = arith.mulf %658, %656 : vector<32x32xf32>
    %660 = vector.broadcast %652 : f32 to vector<32x32xf32>
    %661 = arith.divf %659, %660 : vector<32x32xf32>
    %662 = math.exp %661 : vector<32x32xf32>
    %cst_176 = arith.constant dense<0.000000e+00> : vector<32xf32>
    %663 = vector.multi_reduction <add>, %662, %cst_176 [1] : vector<32x32xf32> to vector<32xf32>
    %664 = vector.shape_cast %663 : vector<32xf32> to vector<32x1xf32>
    %665 = vector.shape_cast %637 : vector<1x32xf32> to vector<1x1x32xf32>
    %cst_177 = arith.constant dense<0.000000e+00> : vector<1xf32>
    %666 = vector.multi_reduction <add>, %665, %cst_177 [1, 2] : vector<1x1x32xf32> to vector<1xf32>
    %667 = vector.shape_cast %666 : vector<1xf32> to vector<1x1x1xf32>
    %668 = vector.extract %667[0, 0, 0] : f32 from vector<1x1x1xf32>
    %cst_178 = arith.constant 3.200000e+01 : f32
    %669 = arith.divf %668, %cst_178 : f32
    %670 = vector.broadcast %669 : f32 to vector<1x32xf32>
    %671 = arith.subf %637, %670 : vector<1x32xf32>
    %672 = arith.mulf %671, %671 : vector<1x32xf32>
    %673 = vector.shape_cast %672 : vector<1x32xf32> to vector<1x1x32xf32>
    %cst_179 = arith.constant dense<0.000000e+00> : vector<1xf32>
    %674 = vector.multi_reduction <add>, %673, %cst_179 [1, 2] : vector<1x1x32xf32> to vector<1xf32>
    %675 = vector.shape_cast %674 : vector<1xf32> to vector<1x1x1xf32>
    %676 = vector.extract %675[0, 0, 0] : f32 from vector<1x1x1xf32>
    %cst_180 = arith.constant 3.100000e+01 : f32
    %677 = arith.divf %676, %cst_180 : f32
    %cst_181 = arith.constant 0.280488789 : f32
    %678 = arith.mulf %677, %cst_181 : f32
    %cst_182 = arith.constant 9.99999996E-13 : f32
    %679 = arith.maximumf %678, %cst_182 : f32
    %680 = tpu.transpose %637, [1, 0] : vector<1x32xf32> -> vector<32x1xf32>
    %681 = vector.broadcast %680 : vector<32x1xf32> to vector<32x32xf32>
    %682 = vector.broadcast %637 : vector<1x32xf32> to vector<32x32xf32>
    %683 = arith.subf %681, %682 : vector<32x32xf32>
    %cst_183 = arith.constant -5.000000e-01 : f32
    %684 = vector.broadcast %cst_183 : f32 to vector<32x32xf32>
    %685 = arith.mulf %684, %683 : vector<32x32xf32>
    %686 = arith.mulf %685, %683 : vector<32x32xf32>
    %687 = vector.broadcast %679 : f32 to vector<32x32xf32>
    %688 = arith.divf %686, %687 : vector<32x32xf32>
    %689 = math.exp %688 : vector<32x32xf32>
    %cst_184 = arith.constant dense<0.000000e+00> : vector<32xf32>
    %690 = vector.multi_reduction <add>, %689, %cst_184 [1] : vector<32x32xf32> to vector<32xf32>
    %691 = vector.shape_cast %690 : vector<32xf32> to vector<32x1xf32>
    %692 = vector.shape_cast %664 : vector<32x1xf32> to vector<1x32x1xf32>
    %cst_185 = arith.constant dense<0.000000e+00> : vector<1xf32>
    %693 = vector.multi_reduction <add>, %692, %cst_185 [1, 2] : vector<1x32x1xf32> to vector<1xf32>
    %694 = vector.shape_cast %693 : vector<1xf32> to vector<1x1x1xf32>
    %695 = vector.extract %694[0, 0, 0] : f32 from vector<1x1x1xf32>
    %696 = vector.broadcast %695 : f32 to vector<32x1xf32>
    %697 = arith.divf %664, %696 : vector<32x1xf32>
    %698 = vector.shape_cast %691 : vector<32x1xf32> to vector<1x32x1xf32>
    %cst_186 = arith.constant dense<0.000000e+00> : vector<1xf32>
    %699 = vector.multi_reduction <add>, %698, %cst_186 [1, 2] : vector<1x32x1xf32> to vector<1xf32>
    %700 = vector.shape_cast %699 : vector<1xf32> to vector<1x1x1xf32>
    %701 = vector.extract %700[0, 0, 0] : f32 from vector<1x1x1xf32>
    %702 = vector.broadcast %701 : f32 to vector<32x1xf32>
    %703 = arith.divf %691, %702 : vector<32x1xf32>
    %704 = arith.divf %697, %703 : vector<32x1xf32>
    %705 = math.log %704 : vector<32x1xf32>
    %706 = arith.mulf %697, %705 : vector<32x1xf32>
    %707 = vector.shape_cast %706 : vector<32x1xf32> to vector<1x32x1xf32>
    %cst_187 = arith.constant dense<0.000000e+00> : vector<1xf32>
    %708 = vector.multi_reduction <add>, %707, %cst_187 [1, 2] : vector<1x32x1xf32> to vector<1xf32>
    %709 = vector.shape_cast %708 : vector<1xf32> to vector<1x1x1xf32>
    %710 = vector.extract %709[0, 0, 0] : f32 from vector<1x1x1xf32>
    %711 = vector.extract_strided_slice %1 {offsets = [14, 0], sizes = [1, 32], strides = [1, 1]} : vector<16x32xf32> to vector<1x32xf32>
    %712 = arith.addf %171, %711 : vector<1x32xf32>
    %713 = vector.extract_strided_slice %1 {offsets = [15, 0], sizes = [1, 32], strides = [1, 1]} : vector<16x32xf32> to vector<1x32xf32>
    %714 = arith.addf %19, %713 : vector<1x32xf32>
    %715 = vector.shape_cast %712 : vector<1x32xf32> to vector<1x1x32xf32>
    %cst_188 = arith.constant dense<0.000000e+00> : vector<1xf32>
    %716 = vector.multi_reduction <add>, %715, %cst_188 [1, 2] : vector<1x1x32xf32> to vector<1xf32>
    %717 = vector.shape_cast %716 : vector<1xf32> to vector<1x1x1xf32>
    %718 = vector.extract %717[0, 0, 0] : f32 from vector<1x1x1xf32>
    %cst_189 = arith.constant 3.200000e+01 : f32
    %719 = arith.divf %718, %cst_189 : f32
    %720 = vector.broadcast %719 : f32 to vector<1x32xf32>
    %721 = arith.subf %712, %720 : vector<1x32xf32>
    %722 = arith.mulf %721, %721 : vector<1x32xf32>
    %723 = vector.shape_cast %722 : vector<1x32xf32> to vector<1x1x32xf32>
    %cst_190 = arith.constant dense<0.000000e+00> : vector<1xf32>
    %724 = vector.multi_reduction <add>, %723, %cst_190 [1, 2] : vector<1x1x32xf32> to vector<1xf32>
    %725 = vector.shape_cast %724 : vector<1xf32> to vector<1x1x1xf32>
    %726 = vector.extract %725[0, 0, 0] : f32 from vector<1x1x1xf32>
    %cst_191 = arith.constant 3.100000e+01 : f32
    %727 = arith.divf %726, %cst_191 : f32
    %cst_192 = arith.constant 0.280488789 : f32
    %728 = arith.mulf %727, %cst_192 : f32
    %cst_193 = arith.constant 9.99999996E-13 : f32
    %729 = arith.maximumf %728, %cst_193 : f32
    %730 = tpu.transpose %712, [1, 0] : vector<1x32xf32> -> vector<32x1xf32>
    %731 = vector.broadcast %730 : vector<32x1xf32> to vector<32x32xf32>
    %732 = vector.broadcast %712 : vector<1x32xf32> to vector<32x32xf32>
    %733 = arith.subf %731, %732 : vector<32x32xf32>
    %cst_194 = arith.constant -5.000000e-01 : f32
    %734 = vector.broadcast %cst_194 : f32 to vector<32x32xf32>
    %735 = arith.mulf %734, %733 : vector<32x32xf32>
    %736 = arith.mulf %735, %733 : vector<32x32xf32>
    %737 = vector.broadcast %729 : f32 to vector<32x32xf32>
    %738 = arith.divf %736, %737 : vector<32x32xf32>
    %739 = math.exp %738 : vector<32x32xf32>
    %cst_195 = arith.constant dense<0.000000e+00> : vector<32xf32>
    %740 = vector.multi_reduction <add>, %739, %cst_195 [1] : vector<32x32xf32> to vector<32xf32>
    %741 = vector.shape_cast %740 : vector<32xf32> to vector<32x1xf32>
    %742 = vector.shape_cast %714 : vector<1x32xf32> to vector<1x1x32xf32>
    %cst_196 = arith.constant dense<0.000000e+00> : vector<1xf32>
    %743 = vector.multi_reduction <add>, %742, %cst_196 [1, 2] : vector<1x1x32xf32> to vector<1xf32>
    %744 = vector.shape_cast %743 : vector<1xf32> to vector<1x1x1xf32>
    %745 = vector.extract %744[0, 0, 0] : f32 from vector<1x1x1xf32>
    %cst_197 = arith.constant 3.200000e+01 : f32
    %746 = arith.divf %745, %cst_197 : f32
    %747 = vector.broadcast %746 : f32 to vector<1x32xf32>
    %748 = arith.subf %714, %747 : vector<1x32xf32>
    %749 = arith.mulf %748, %748 : vector<1x32xf32>
    %750 = vector.shape_cast %749 : vector<1x32xf32> to vector<1x1x32xf32>
    %cst_198 = arith.constant dense<0.000000e+00> : vector<1xf32>
    %751 = vector.multi_reduction <add>, %750, %cst_198 [1, 2] : vector<1x1x32xf32> to vector<1xf32>
    %752 = vector.shape_cast %751 : vector<1xf32> to vector<1x1x1xf32>
    %753 = vector.extract %752[0, 0, 0] : f32 from vector<1x1x1xf32>
    %cst_199 = arith.constant 3.100000e+01 : f32
    %754 = arith.divf %753, %cst_199 : f32
    %cst_200 = arith.constant 0.280488789 : f32
    %755 = arith.mulf %754, %cst_200 : f32
    %cst_201 = arith.constant 9.99999996E-13 : f32
    %756 = arith.maximumf %755, %cst_201 : f32
    %757 = tpu.transpose %714, [1, 0] : vector<1x32xf32> -> vector<32x1xf32>
    %758 = vector.broadcast %757 : vector<32x1xf32> to vector<32x32xf32>
    %759 = vector.broadcast %714 : vector<1x32xf32> to vector<32x32xf32>
    %760 = arith.subf %758, %759 : vector<32x32xf32>
    %cst_202 = arith.constant -5.000000e-01 : f32
    %761 = vector.broadcast %cst_202 : f32 to vector<32x32xf32>
    %762 = arith.mulf %761, %760 : vector<32x32xf32>
    %763 = arith.mulf %762, %760 : vector<32x32xf32>
    %764 = vector.broadcast %756 : f32 to vector<32x32xf32>
    %765 = arith.divf %763, %764 : vector<32x32xf32>
    %766 = math.exp %765 : vector<32x32xf32>
    %cst_203 = arith.constant dense<0.000000e+00> : vector<32xf32>
    %767 = vector.multi_reduction <add>, %766, %cst_203 [1] : vector<32x32xf32> to vector<32xf32>
    %768 = vector.shape_cast %767 : vector<32xf32> to vector<32x1xf32>
    %769 = vector.shape_cast %741 : vector<32x1xf32> to vector<1x32x1xf32>
    %cst_204 = arith.constant dense<0.000000e+00> : vector<1xf32>
    %770 = vector.multi_reduction <add>, %769, %cst_204 [1, 2] : vector<1x32x1xf32> to vector<1xf32>
    %771 = vector.shape_cast %770 : vector<1xf32> to vector<1x1x1xf32>
    %772 = vector.extract %771[0, 0, 0] : f32 from vector<1x1x1xf32>
    %773 = vector.broadcast %772 : f32 to vector<32x1xf32>
    %774 = arith.divf %741, %773 : vector<32x1xf32>
    %775 = vector.shape_cast %768 : vector<32x1xf32> to vector<1x32x1xf32>
    %cst_205 = arith.constant dense<0.000000e+00> : vector<1xf32>
    %776 = vector.multi_reduction <add>, %775, %cst_205 [1, 2] : vector<1x32x1xf32> to vector<1xf32>
    %777 = vector.shape_cast %776 : vector<1xf32> to vector<1x1x1xf32>
    %778 = vector.extract %777[0, 0, 0] : f32 from vector<1x1x1xf32>
    %779 = vector.broadcast %778 : f32 to vector<32x1xf32>
    %780 = arith.divf %768, %779 : vector<32x1xf32>
    %781 = arith.divf %774, %780 : vector<32x1xf32>
    %782 = math.log %781 : vector<32x1xf32>
    %783 = arith.mulf %774, %782 : vector<32x1xf32>
    %784 = vector.shape_cast %783 : vector<32x1xf32> to vector<1x32x1xf32>
    %cst_206 = arith.constant dense<0.000000e+00> : vector<1xf32>
    %785 = vector.multi_reduction <add>, %784, %cst_206 [1, 2] : vector<1x32x1xf32> to vector<1xf32>
    %786 = vector.shape_cast %785 : vector<1xf32> to vector<1x1x1xf32>
    %787 = vector.extract %786[0, 0, 0] : f32 from vector<1x1x1xf32>
    %788 = arith.addf %248, %325 : f32
    %789 = arith.addf %788, %402 : f32
    %790 = arith.addf %789, %479 : f32
    %791 = arith.addf %556, %633 : f32
    %792 = arith.addf %791, %710 : f32
    %793 = arith.addf %792, %787 : f32
    %cst_207 = arith.constant 5.000000e-01 : f32
    %794 = arith.mulf %cst_207, %790 : f32
    %cst_208 = arith.constant 5.000000e-01 : f32
    %795 = arith.mulf %cst_208, %793 : f32
    %796 = arith.addf %794, %795 : f32
    %797 = vector.broadcast %796 : f32 to vector<1x1xf32>
    %c0_209 = arith.constant 0 : index
    %c0_210 = arith.constant 0 : index
    %798 = vector.load %arg7[%c0_209, %c0_210] : memref<1x1xf32, #tpu.memory_space<vmem>>, vector<1x1xf32>
    tpu.vector_store %arg7[%c0_209, %c0_210], %797 {strides = array<i32>} : memref<1x1xf32, #tpu.memory_space<vmem>>, vector<1x1xf32>,
    return
  }
}

</mosaic_0001>

<llo_original>
// kernel: graph_loss_forward.1
$region0: #{graph_loss_forward.1}
  #allocation0 [shape = 'u32[]', space=smem, size = 0x4, offset = 0x4, fixed_abs, tag = 'smem constant byte address 0x4 - core index']
  #allocation1 [shape = 'u32[144,128]{1,0:T(1,128)}', space=vmem, size = 0x12000, scoped, tag = 'internal scratch']
  %s0 = inlined_call_operand.vmem [shape: f32[64,32], index: 0, kind: input, shape index: {}]
  %s1 = inlined_call_operand.vmem [shape: f32[3,128,128], index: 1, kind: input, shape index: {}]
  %s2 = inlined_call_operand.vmem [shape: f32[128,384], index: 2, kind: input, shape index: {}]
  %s3 = inlined_call_operand.vmem [shape: f32[128,384], index: 3, kind: input, shape index: {}]
  %s4 = inlined_call_operand.vmem [shape: f32[1,384], index: 4, kind: input, shape index: {}]
  %s5 = inlined_call_operand.vmem [shape: f32[1,384], index: 5, kind: input, shape index: {}]
  %s6 = inlined_call_operand.vmem [shape: f32[16,32], index: 6, kind: input, shape index: {}]
  %s7 = inlined_call_operand.hbm [shape: f32[1,1], index: 7, kind: output, shape index: {}]
  %s8 = sld [smem:[#allocation0]]
  $region38: #{graph_loss_forward.1} parent=0
    _
  %s10 = ssub.s32 1, %s8
  %s11 = scalar_select 0, %s10, %s8
  $region1: #{graph_loss_forward.1} parent=0
    #allocation2 [shape = 'u8[512]{0}', space=vmem, size = 0x400, scoped, tag = 'output window, operand 0, single buffered']
    #allocation3 [shape = 's32[1]{0}', space=sflag, size = 0x4, scoped, tag = 'scoped memory for graph_loss_forward.1']
    %12 = vsyncpa [#allocation3], 0
    // Predicated region
    $region2: #{graph_loss_forward.1} parent=1 // pred_check
      _
    $region3: #{graph_loss_forward.1} parent=1 // pred_check_branch
      %14 = sbr.rel (0) target = $region5
    $region4: #{graph_loss_forward.1} parent=1 // pred_region
      _
    $region5: #{graph_loss_forward.1} parent=1 // pred_fallthru
      _
    // Predicated region
    $region6: #{graph_loss_forward.1} parent=1 // pred_check
      _
    $region7: #{graph_loss_forward.1} parent=1 // pred_check_branch
      %16 = sbr.rel (0) target = $region9
    $region8: #{graph_loss_forward.1} parent=1 // pred_region
      _
    $region9: #{graph_loss_forward.1} parent=1 // pred_fallthru
      _
    // Predicated region
    $region10: #{graph_loss_forward.1} parent=1 // pred_check
      _
    $region11: #{graph_loss_forward.1} parent=1 // pred_check_branch
      %18 = sbr.rel (0) target = $region13
    $region12: #{graph_loss_forward.1} parent=1 // pred_region
      _
    $region13: #{graph_loss_forward.1} parent=1 // pred_fallthru
      _
    // Predicated region
    $region14: #{graph_loss_forward.1} parent=1 // pred_check
      _
    $region15: #{graph_loss_forward.1} parent=1 // pred_check_branch
      %20 = sbr.rel (0) target = $region17
    $region16: #{graph_loss_forward.1} parent=1 // pred_region
      _
    $region17: #{graph_loss_forward.1} parent=1 // pred_fallthru
      _
    // Predicated region
    $region18: #{graph_loss_forward.1} parent=1 // pred_check
      _
    $region19: #{graph_loss_forward.1} parent=1 // pred_check_branch
      %22 = sbr.rel (0) target = $region21
    $region20: #{graph_loss_forward.1} parent=1 // pred_region
      _
    $region21: #{graph_loss_forward.1} parent=1 // pred_fallthru
      _
    // Predicated region
    $region22: #{graph_loss_forward.1} parent=1 // pred_check
      _
    $region23: #{graph_loss_forward.1} parent=1 // pred_check_branch
      %24 = sbr.rel (0) target = $region25
    $region24: #{graph_loss_forward.1} parent=1 // pred_region
      _
    $region25: #{graph_loss_forward.1} parent=1 // pred_fallthru
      _
    // Predicated region
    $region26: #{graph_loss_forward.1} parent=1 // pred_check
      _
    $region27: #{graph_loss_forward.1} parent=1 // pred_check_branch
      %26 = sbr.rel (0) target = $region29
    $region28: #{graph_loss_forward.1} parent=1 // pred_region
      _
    $region29: #{graph_loss_forward.1} parent=1 // pred_fallthru
      _
    %v27 = vld [vmem:[%s0] sm:$0xff]
    %v28 = vld [vmem:[%s0 + $0x8] sm:$0xff]
    %v29 = vld [vmem:[%s0 + $0x10] sm:$0xff]
    %v30 = vld [vmem:[%s0 + $0x18] sm:$0xff]
    %v31 = vld [vmem:[%s0 + $0x20] sm:$0xff]
    %v32 = vld [vmem:[%s0 + $0x28] sm:$0xff]
    %v33 = vld [vmem:[%s0 + $0x30] sm:$0xff]
    %v34 = vld [vmem:[%s0 + $0x38] sm:$0xff]
    %v35 = vld [vmem:[%s6] sm:$0xff]
    %v36 = vld [vmem:[%s6 + $0x8] sm:$0xff]
    %vm37 = vcmask 261120
    %v38 = vsel %vm37, %v27, 0.0
    %v39 = vrot.slane %v38, 4
    %v40 = vadd.f32 %v38, %v39
    %v41 = vrot.slane %v40, 2
    %v42 = vadd.f32 %v40, %v41
    %v43 = vrot.slane %v42, 1
    %v44 = vadd.f32 %v42, %v43
    %v45 = vmul.f32 %v44, 0.125
    %v46 = vsel %vm37, %v28, 0.0
    %v47 = vrot.slane %v46, 4
    %v48 = vadd.f32 %v46, %v47
    %v49 = vrot.slane %v48, 2
    %v50 = vadd.f32 %v48, %v49
    %v51 = vrot.slane %v50, 1
    %v52 = vadd.f32 %v50, %v51
    %v53 = vmul.f32 %v52, 0.125
    %v54 = vsel %vm37, %v29, 0.0
    %v55 = vrot.slane %v54, 4
    %v56 = vadd.f32 %v54, %v55
    %v57 = vrot.slane %v56, 2
    %v58 = vadd.f32 %v56, %v57
    %v59 = vrot.slane %v58, 1
    %v60 = vadd.f32 %v58, %v59
    %v61 = vmul.f32 %v60, 0.125
    %v62 = vsel %vm37, %v30, 0.0
    %v63 = vrot.slane %v62, 4
    %v64 = vadd.f32 %v62, %v63
    %v65 = vrot.slane %v64, 2
    %v66 = vadd.f32 %v64, %v65
    %v67 = vrot.slane %v66, 1
    %v68 = vadd.f32 %v66, %v67
    %v69 = vmul.f32 %v68, 0.125
    %v70 = vsel %vm37, %v31, 0.0
    %v71 = vrot.slane %v70, 4
    %v72 = vadd.f32 %v70, %v71
    %v73 = vrot.slane %v72, 2
    %v74 = vadd.f32 %v72, %v73
    %v75 = vrot.slane %v74, 1
    %v76 = vadd.f32 %v74, %v75
    %v77 = vmul.f32 %v76, 0.125
    %v78 = vsel %vm37, %v32, 0.0
    %v79 = vrot.slane %v78, 4
    %v80 = vadd.f32 %v78, %v79
    %v81 = vrot.slane %v80, 2
    %v82 = vadd.f32 %v80, %v81
    %v83 = vrot.slane %v82, 1
    %v84 = vadd.f32 %v82, %v83
    %v85 = vmul.f32 %v84, 0.125
    %v86 = vsel %vm37, %v33, 0.0
    %v87 = vrot.slane %v86, 4
    %v88 = vadd.f32 %v86, %v87
    %v89 = vrot.slane %v88, 2
    %v90 = vadd.f32 %v88, %v89
    %v91 = vrot.slane %v90, 1
    %v92 = vadd.f32 %v90, %v91
    %v93 = vmul.f32 %v92, 0.125
    %v94 = vsel %vm37, %v34, 0.0
    %v95 = vrot.slane %v94, 4
    %v96 = vadd.f32 %v94, %v95
    %v97 = vrot.slane %v96, 2
    %v98 = vadd.f32 %v96, %v97
    %v99 = vrot.slane %v98, 1
    %v100 = vadd.f32 %v98, %v99
    %v101 = vmul.f32 %v100, 0.125
    %103 = vrot.lane.b32.xlu0 %v53, 32
    %v104 = vpop.permute.xlu0 %103
    %107 = vrot.lane.b32.xlu0 %v61, 64
    %v108 = vpop.permute.xlu0 %107
    %111 = vrot.lane.b32.xlu0 %v69, 96
    %v112 = vpop.permute.xlu0 %111
    %v114 = vsel %vm37, %v45, %v104
    %vm115 = vcmask 523264
    %v116 = vsel %vm115, %v114, %v108
    %vm117 = vcmask 785408
    %v118 = vsel %vm117, %v116, %v112
    %vm119 = vcmask 1040384
    %v120 = vsel %vm119, %v77, %v85
    %vm121 = vcmask 1041408
    %v122 = vsel %vm121, %v120, %v93
    %vm123 = vcmask 1042432
    %v124 = vsel %vm123, %v122, %v101
    %126 = vrot.lane.b32.xlu0 %v124, 32
    %v127 = vpop.permute.xlu0 %126
    %129 = vrot.lane.b32.xlu0 %v124, 64
    %v130 = vpop.permute.xlu0 %129
    %132 = vrot.lane.b32.xlu0 %v124, 96
    %v133 = vpop.permute.xlu0 %132
    %v135 = vsel %vm37, %v124, %v127
    %v136 = vsel %vm115, %v135, %v130
    %v137 = vsel %vm117, %v136, %v133
    %v139 = vrot.slane %v137, 7
    %v141 = vsel %vm119, %v118, %v139
    %v142 = vld [vmem:[%s2] sm:$0xff]
    %v143 = vld [vmem:[%s2 + $0x8] sm:$0xff]
    %v144 = vld [vmem:[%s2 + $0x10] sm:$0xff]
    %v145 = vld [vmem:[%s2 + $0x18] sm:$0xff]
    %v146 = vld [vmem:[%s2 + $0x20] sm:$0xff]
    %v147 = vld [vmem:[%s2 + $0x28] sm:$0xff]
    %v148 = vld [vmem:[%s2 + $0x30] sm:$0xff]
    %v149 = vld [vmem:[%s2 + $0x38] sm:$0xff]
    %v150 = vld [vmem:[%s2 + $0x40] sm:$0xff]
    %v151 = vld [vmem:[%s2 + $0x48] sm:$0xff]
    %v152 = vld [vmem:[%s2 + $0x50] sm:$0xff]
    %v153 = vld [vmem:[%s2 + $0x58] sm:$0xff]
    %v154 = vld [vmem:[%s2 + $0x60] sm:$0xff]
    %v155 = vld [vmem:[%s2 + $0x68] sm:$0xff]
    %v156 = vld [vmem:[%s2 + $0x70] sm:$0xff]
    %v157 = vld [vmem:[%s2 + $0x78] sm:$0xff]
    %v158 = vld [vmem:[%s2 + $0x80] sm:$0xff]
    %v159 = vld [vmem:[%s2 + $0x88] sm:$0xff]
    %v160 = vld [vmem:[%s2 + $0x90] sm:$0xff]
    %v161 = vld [vmem:[%s2 + $0x98] sm:$0xff]
    %v162 = vld [vmem:[%s2 + $0xa0] sm:$0xff]
    %v163 = vld [vmem:[%s2 + $0xa8] sm:$0xff]
    %v164 = vld [vmem:[%s2 + $0xb0] sm:$0xff]
    %v165 = vld [vmem:[%s2 + $0xb8] sm:$0xff]
    %v166 = vld [vmem:[%s2 + $0xc0] sm:$0xff]
    %v167 = vld [vmem:[%s2 + $0xc8] sm:$0xff]
    %v168 = vld [vmem:[%s2 + $0xd0] sm:$0xff]
    %v169 = vld [vmem:[%s2 + $0xd8] sm:$0xff]
    %v170 = vld [vmem:[%s2 + $0xe0] sm:$0xff]
    %v171 = vld [vmem:[%s2 + $0xe8] sm:$0xff]
    %v172 = vld [vmem:[%s2 + $0xf0] sm:$0xff]
    %v173 = vld [vmem:[%s2 + $0xf8] sm:$0xff]
    %v174 = vld [vmem:[%s2 + $0x100] sm:$0xff]
    %v175 = vld [vmem:[%s2 + $0x108] sm:$0xff]
    %v176 = vld [vmem:[%s2 + $0x110] sm:$0xff]
    %v177 = vld [vmem:[%s2 + $0x118] sm:$0xff]
    %v178 = vld [vmem:[%s2 + $0x120] sm:$0xff]
    %v179 = vld [vmem:[%s2 + $0x128] sm:$0xff]
    %v180 = vld [vmem:[%s2 + $0x130] sm:$0xff]
    %v181 = vld [vmem:[%s2 + $0x138] sm:$0xff]
    %v182 = vld [vmem:[%s2 + $0x140] sm:$0xff]
    %v183 = vld [vmem:[%s2 + $0x148] sm:$0xff]
    %v184 = vld [vmem:[%s2 + $0x150] sm:$0xff]
    %v185 = vld [vmem:[%s2 + $0x158] sm:$0xff]
    %v186 = vld [vmem:[%s2 + $0x160] sm:$0xff]
    %v187 = vld [vmem:[%s2 + $0x168] sm:$0xff]
    %v188 = vld [vmem:[%s2 + $0x170] sm:$0xff]
    %v189 = vld [vmem:[%s2 + $0x178] sm:$0xff]
    %v190 = vld [vmem:[%s3] sm:$0xff]
    %v191 = vld [vmem:[%s3 + $0x8] sm:$0xff]
    %v192 = vld [vmem:[%s3 + $0x10] sm:$0xff]
    %v193 = vld [vmem:[%s3 + $0x18] sm:$0xff]
    %v194 = vld [vmem:[%s3 + $0x20] sm:$0xff]
    %v195 = vld [vmem:[%s3 + $0x28] sm:$0xff]
    %v196 = vld [vmem:[%s3 + $0x30] sm:$0xff]
    %v197 = vld [vmem:[%s3 + $0x38] sm:$0xff]
    %v198 = vld [vmem:[%s3 + $0x40] sm:$0xff]
    %v199 = vld [vmem:[%s3 + $0x48] sm:$0xff]
    %v200 = vld [vmem:[%s3 + $0x50] sm:$0xff]
    %v201 = vld [vmem:[%s3 + $0x58] sm:$0xff]
    %v202 = vld [vmem:[%s3 + $0x60] sm:$0xff]
    %v203 = vld [vmem:[%s3 + $0x68] sm:$0xff]
    %v204 = vld [vmem:[%s3 + $0x70] sm:$0xff]
    %v205 = vld [vmem:[%s3 + $0x78] sm:$0xff]
    %v206 = vld [vmem:[%s3 + $0x80] sm:$0xff]
    %v207 = vld [vmem:[%s3 + $0x88] sm:$0xff]
    %v208 = vld [vmem:[%s3 + $0x90] sm:$0xff]
    %v209 = vld [vmem:[%s3 + $0x98] sm:$0xff]
    %v210 = vld [vmem:[%s3 + $0xa0] sm:$0xff]
    %v211 = vld [vmem:[%s3 + $0xa8] sm:$0xff]
    %v212 = vld [vmem:[%s3 + $0xb0] sm:$0xff]
    %v213 = vld [vmem:[%s3 + $0xb8] sm:$0xff]
    %v214 = vld [vmem:[%s3 + $0xc0] sm:$0xff]
    %v215 = vld [vmem:[%s3 + $0xc8] sm:$0xff]
    %v216 = vld [vmem:[%s3 + $0xd0] sm:$0xff]
    %v217 = vld [vmem:[%s3 + $0xd8] sm:$0xff]
    %v218 = vld [vmem:[%s3 + $0xe0] sm:$0xff]
    %v219 = vld [vmem:[%s3 + $0xe8] sm:$0xff]
    %v220 = vld [vmem:[%s3 + $0xf0] sm:$0xff]
    %v221 = vld [vmem:[%s3 + $0xf8] sm:$0xff]
    %v222 = vld [vmem:[%s3 + $0x100] sm:$0xff]
    %v223 = vld [vmem:[%s3 + $0x108] sm:$0xff]
    %v224 = vld [vmem:[%s3 + $0x110] sm:$0xff]
    %v225 = vld [vmem:[%s3 + $0x118] sm:$0xff]
    %v226 = vld [vmem:[%s3 + $0x120] sm:$0xff]
    %v227 = vld [vmem:[%s3 + $0x128] sm:$0xff]
    %v228 = vld [vmem:[%s3 + $0x130] sm:$0xff]
    %v229 = vld [vmem:[%s3 + $0x138] sm:$0xff]
    %v230 = vld [vmem:[%s3 + $0x140] sm:$0xff]
    %v231 = vld [vmem:[%s3 + $0x148] sm:$0xff]
    %v232 = vld [vmem:[%s3 + $0x150] sm:$0xff]
    %v233 = vld [vmem:[%s3 + $0x158] sm:$0xff]
    %v234 = vld [vmem:[%s3 + $0x160] sm:$0xff]
    %v235 = vld [vmem:[%s3 + $0x168] sm:$0xff]
    %v236 = vld [vmem:[%s3 + $0x170] sm:$0xff]
    %v237 = vld [vmem:[%s3 + $0x178] sm:$0xff]
    %v238 = vld [vmem:[%s4] sm:$0x7]
    %v239 = vld [vmem:[%s5] sm:$0x7]
    %v241 = vrot.slane %v141, 1
    %vm243 = vcmask 1043456
    %v244 = vsel %vm243, %v241, 0.0
    %v245 = vrot.slane %v244, 4
    %v246 = vadd.f32 %v244, %v245
    %v247 = vrot.slane %v246, 2
    %v248 = vadd.f32 %v246, %v247
    %v249 = vrot.slane %v248, 1
    %v250 = vadd.f32 %v248, %v249
    %v251 = vld [vmem:[%s1] sm:$0xff]
    %v252 = vld [vmem:[%s1 + $0x8] sm:$0xff]
    %v253 = vld [vmem:[%s1 + $0x10] sm:$0xff]
    %v254 = vld [vmem:[%s1 + $0x18] sm:$0xff]
    %v255 = vld [vmem:[%s1 + $0x20] sm:$0xff]
    %v256 = vld [vmem:[%s1 + $0x28] sm:$0xff]
    %v257 = vld [vmem:[%s1 + $0x30] sm:$0xff]
    %v258 = vld [vmem:[%s1 + $0x38] sm:$0xff]
    %v259 = vld [vmem:[%s1 + $0x40] sm:$0xff]
    %v260 = vld [vmem:[%s1 + $0x48] sm:$0xff]
    %v261 = vld [vmem:[%s1 + $0x50] sm:$0xff]
    %v262 = vld [vmem:[%s1 + $0x58] sm:$0xff]
    %v263 = vld [vmem:[%s1 + $0x60] sm:$0xff]
    %v264 = vld [vmem:[%s1 + $0x68] sm:$0xff]
    %v265 = vld [vmem:[%s1 + $0x70] sm:$0xff]
    %v266 = vld [vmem:[%s1 + $0x78] sm:$0xff]
    %267 = vmatprep.subr.mxu0 0.0
    %268 = vmatpush1.msra.mxu0 %v251
    %269 = vmatprep.subr.mxu0 0.0
    %270 = vmatpush1.msra.mxu0 %v252
    %271 = vmatprep.subr.mxu0 0.0
    %272 = vmatpush1.msra.mxu0 %v253
    %273 = vmatprep.subr.mxu0 0.0
    %274 = vmatpush1.msra.mxu0 %v254
    %275 = vmatprep.subr.mxu0 0.0
    %276 = vmatpush1.msra.mxu0 %v255
    %277 = vmatprep.subr.mxu0 0.0
    %278 = vmatpush1.msra.mxu0 %v256
    %279 = vmatprep.subr.mxu0 0.0
    %280 = vmatpush1.msra.mxu0 %v257
    %281 = vmatprep.subr.mxu0 0.0
    %282 = vmatpush1.msra.mxu0 %v258
    %283 = vmatprep.subr.mxu0 0.0
    %284 = vmatpush1.msra.mxu0 %v259
    %285 = vmatprep.subr.mxu0 0.0
    %286 = vmatpush1.msra.mxu0 %v260
    %287 = vmatprep.subr.mxu0 0.0
    %288 = vmatpush1.msra.mxu0 %v261
    %289 = vmatprep.subr.mxu0 0.0
    %290 = vmatpush1.msra.mxu0 %v262
    %291 = vmatprep.subr.mxu0 0.0
    %292 = vmatpush1.msra.mxu0 %v263
    %293 = vmatprep.subr.mxu0 0.0
    %294 = vmatpush1.msra.mxu0 %v264
    %295 = vmatprep.subr.mxu0 0.0
    %296 = vmatpush1.msra.mxu0 %v265
    %297 = vmatprep.subr.mxu0 0.0
    %298 = vmatpush1.msra.mxu0 %v266
    %299 = vmatprep.subr.mxu0 0.0
    %300 = vmatpush1.msra.mxu0 0.0
    %301 = vmatprep.subr.mxu0 0.0
    %302 = vmatpush1.msra.mxu0 0.0
    %303 = vmatprep.subr.mxu0 0.0
    %304 = vmatpush1.msra.mxu0 0.0
    %305 = vmatprep.subr.mxu0 0.0
    %306 = vmatpush1.msra.mxu0 0.0
    %307 = vmatprep.subr.mxu0 0.0
    %308 = vmatpush1.msra.mxu0 0.0
    %309 = vmatprep.subr.mxu0 0.0
    %310 = vmatpush1.msra.mxu0 0.0
    %311 = vmatprep.subr.mxu0 0.0
    %312 = vmatpush1.msra.mxu0 0.0
    %313 = vmatprep.subr.mxu0 0.0
    %314 = vmatpush1.msra.mxu0 0.0
    %315 = vmatprep.subr.mxu0 0.0
    %316 = vmatpush1.msra.mxu0 0.0
    %317 = vmatprep.subr.mxu0 0.0
    %318 = vmatpush1.msra.mxu0 0.0
    %319 = vmatprep.subr.mxu0 0.0
    %320 = vmatpush1.msra.mxu0 0.0
    %321 = vmatprep.subr.mxu0 0.0
    %322 = vmatpush1.msra.mxu0 0.0
    %323 = vmatprep.subr.mxu0 0.0
    %324 = vmatpush1.msra.mxu0 0.0
    %325 = vmatprep.subr.mxu0 0.0
    %326 = vmatpush1.msra.mxu0 0.0
    %327 = vmatprep.subr.mxu0 0.0
    %328 = vmatpush1.msra.mxu0 0.0
    %329 = vmatprep.subr.mxu0 0.0
    %330 = vmatpush1.msra.mxu0 0.0
    %331 = vmatprep.mubr.f32.mxu0 0.0
    %332 = vmatmul.mubr.f32.gmra.mrb[0].mxu0 %v250
    %v333 = vpop.f32.mrb[0].mxu0
    %v334 = vadd.f32 0.0, %v333
    %v335 = vpop.f32.mrb[0].mxu0
    %336 = vdwg.mxu0
    %337 = vmatprep.subr.mxu0 %v143
    %338 = vmatpush1.msra.mxu0 %v142
    %339 = vmatprep.subr.mxu0 %v146
    %340 = vmatpush1.msra.mxu0 %v145
    %341 = vmatprep.subr.mxu0 %v149
    %342 = vmatpush1.msra.mxu0 %v148
    %343 = vmatprep.subr.mxu0 %v152
    %344 = vmatpush1.msra.mxu0 %v151
    %345 = vmatprep.subr.mxu0 %v155
    %346 = vmatpush1.msra.mxu0 %v154
    %347 = vmatprep.subr.mxu0 %v158
    %348 = vmatpush1.msra.mxu0 %v157
    %349 = vmatprep.subr.mxu0 %v161
    %350 = vmatpush1.msra.mxu0 %v160
    %351 = vmatprep.subr.mxu0 %v164
    %352 = vmatpush1.msra.mxu0 %v163
    %353 = vmatprep.subr.mxu0 %v167
    %354 = vmatpush1.msra.mxu0 %v166
    %355 = vmatprep.subr.mxu0 %v170
    %356 = vmatpush1.msra.mxu0 %v169
    %357 = vmatprep.subr.mxu0 %v173
    %358 = vmatpush1.msra.mxu0 %v172
    %359 = vmatprep.subr.mxu0 %v176
    %360 = vmatpush1.msra.mxu0 %v175
    %361 = vmatprep.subr.mxu0 %v179
    %362 = vmatpush1.msra.mxu0 %v178
    %363 = vmatprep.subr.mxu0 %v182
    %364 = vmatpush1.msra.mxu0 %v181
    %365 = vmatprep.subr.mxu0 %v185
    %366 = vmatpush1.msra.mxu0 %v184
    %367 = vmatprep.subr.mxu0 %v188
    %368 = vmatpush1.msra.mxu0 %v187
    %369 = vmatprep.subr.mxu0 0.0
    %370 = vmatpush1.msra.mxu0 0.0
    %371 = vmatprep.subr.mxu0 0.0
    %372 = vmatpush1.msra.mxu0 0.0
    %373 = vmatprep.subr.mxu0 0.0
    %374 = vmatpush1.msra.mxu0 0.0
    %375 = vmatprep.subr.mxu0 0.0
    %376 = vmatpush1.msra.mxu0 0.0
    %377 = vmatprep.subr.mxu0 0.0
    %378 = vmatpush1.msra.mxu0 0.0
    %379 = vmatprep.subr.mxu0 0.0
    %380 = vmatpush1.msra.mxu0 0.0
    %381 = vmatprep.subr.mxu0 0.0
    %382 = vmatpush1.msra.mxu0 0.0
    %383 = vmatprep.subr.mxu0 0.0
    %384 = vmatpush1.msra.mxu0 0.0
    %385 = vmatprep.subr.mxu0 0.0
    %386 = vmatpush1.msra.mxu0 0.0
    %387 = vmatprep.subr.mxu0 0.0
    %388 = vmatpush1.msra.mxu0 0.0
    %389 = vmatprep.subr.mxu0 0.0
    %390 = vmatpush1.msra.mxu0 0.0
    %391 = vmatprep.subr.mxu0 0.0
    %392 = vmatpush1.msra.mxu0 0.0
    %393 = vmatprep.subr.mxu0 0.0
    %394 = vmatpush1.msra.mxu0 0.0
    %395 = vmatprep.subr.mxu0 0.0
    %396 = vmatpush1.msra.mxu0 0.0
    %397 = vmatprep.subr.mxu0 0.0
    %398 = vmatpush1.msra.mxu0 0.0
    %399 = vmatprep.subr.mxu0 0.0
    %400 = vmatpush1.msra.mxu0 0.0
    %401 = vmatprep.mubr.f32.mxu0 0.0
    %402 = vmatmul.mubr.f32.gmra.mrb[0].mxu0 %v334
    %v403 = vpop.f32.mrb[0].mxu0
    %v404 = vadd.f32 0.0, %v403
    %v405 = vpop.f32.mrb[0].mxu0
    %v406 = vadd.f32 0.0, %v405
    %407 = vdwg.mxu0
    %408 = vmatprep.subr.mxu0 0.0
    %409 = vmatpush1.msra.mxu0 %v144
    %410 = vmatprep.subr.mxu0 0.0
    %411 = vmatpush1.msra.mxu0 %v147
    %412 = vmatprep.subr.mxu0 0.0
    %413 = vmatpush1.msra.mxu0 %v150
    %414 = vmatprep.subr.mxu0 0.0
    %415 = vmatpush1.msra.mxu0 %v153
    %416 = vmatprep.subr.mxu0 0.0
    %417 = vmatpush1.msra.mxu0 %v156
    %418 = vmatprep.subr.mxu0 0.0
    %419 = vmatpush1.msra.mxu0 %v159
    %420 = vmatprep.subr.mxu0 0.0
    %421 = vmatpush1.msra.mxu0 %v162
    %422 = vmatprep.subr.mxu0 0.0
    %423 = vmatpush1.msra.mxu0 %v165
    %424 = vmatprep.subr.mxu0 0.0
    %425 = vmatpush1.msra.mxu0 %v168
    %426 = vmatprep.subr.mxu0 0.0
    %427 = vmatpush1.msra.mxu0 %v171
    %428 = vmatprep.subr.mxu0 0.0
    %429 = vmatpush1.msra.mxu0 %v174
    %430 = vmatprep.subr.mxu0 0.0
    %431 = vmatpush1.msra.mxu0 %v177
    %432 = vmatprep.subr.mxu0 0.0
    %433 = vmatpush1.msra.mxu0 %v180
    %434 = vmatprep.subr.mxu0 0.0
    %435 = vmatpush1.msra.mxu0 %v183
    %436 = vmatprep.subr.mxu0 0.0
    %437 = vmatpush1.msra.mxu0 %v186
    %438 = vmatprep.subr.mxu0 0.0
    %439 = vmatpush1.msra.mxu0 %v189
    %440 = vmatprep.subr.mxu0 0.0
    %441 = vmatpush1.msra.mxu0 0.0
    %442 = vmatprep.subr.mxu0 0.0
    %443 = vmatpush1.msra.mxu0 0.0
    %444 = vmatprep.subr.mxu0 0.0
    %445 = vmatpush1.msra.mxu0 0.0
    %446 = vmatprep.subr.mxu0 0.0
    %447 = vmatpush1.msra.mxu0 0.0
    %448 = vmatprep.subr.mxu0 0.0
    %449 = vmatpush1.msra.mxu0 0.0
    %450 = vmatprep.subr.mxu0 0.0
    %451 = vmatpush1.msra.mxu0 0.0
    %452 = vmatprep.subr.mxu0 0.0
    %453 = vmatpush1.msra.mxu0 0.0
    %454 = vmatprep.subr.mxu0 0.0
    %455 = vmatpush1.msra.mxu0 0.0
    %456 = vmatprep.subr.mxu0 0.0
    %457 = vmatpush1.msra.mxu0 0.0
    %458 = vmatprep.subr.mxu0 0.0
    %459 = vmatpush1.msra.mxu0 0.0
    %460 = vmatprep.subr.mxu0 0.0
    %461 = vmatpush1.msra.mxu0 0.0
    %462 = vmatprep.subr.mxu0 0.0
    %463 = vmatpush1.msra.mxu0 0.0
    %464 = vmatprep.subr.mxu0 0.0
    %465 = vmatpush1.msra.mxu0 0.0
    %466 = vmatprep.subr.mxu0 0.0
    %467 = vmatpush1.msra.mxu0 0.0
    %468 = vmatprep.subr.mxu0 0.0
    %469 = vmatpush1.msra.mxu0 0.0
    %470 = vmatprep.subr.mxu0 0.0
    %471 = vmatpush1.msra.mxu0 0.0
    %472 = vmatprep.mubr.f32.mxu0 0.0
    %473 = vmatmul.mubr.f32.gmra.mrb[0].mxu0 %v334
    %v474 = vpop.f32.mrb[0].mxu0
    %v475 = vadd.f32 0.0, %v474
    %v476 = vpop.f32.mrb[0].mxu0
    %477 = vdwg.mxu0
    %v478 = vsel %vm119, %v404, 0.0
    %v479 = vsel %vm119, %v406, 0.0
    %v480 = vsel %vm119, %v475, 0.0
    %v482 = vlaneseq
    %v483 = vshrl.u32 %v482, 7
    %v484 = vsub.s32 0, %v483
    %v485 = vrot.slane %v238, %v484
    %v486 = vlaneseq
    %v487 = vshrl.u32 %v486, 7
    %v488 = vsub.s32 1, %v487
    %v489 = vrot.slane %v238, %v488
    %v490 = vlaneseq
    %v491 = vshrl.u32 %v490, 7
    %v492 = vsub.s32 2, %v491
    %v493 = vrot.slane %v238, %v492
    %v497 = vadd.f32 %v478, %v485
    %v498 = vadd.f32 %v479, %v489
    %v499 = vadd.f32 %v480, %v493
    %v501 = vlaneseq
    %v502 = vshrl.u32 %v501, 7
    %v503 = vsub.s32 0, %v502
    %v504 = vrot.slane %v239, %v503
    %v505 = vlaneseq
    %v506 = vshrl.u32 %v505, 7
    %v507 = vsub.s32 1, %v506
    %v508 = vrot.slane %v239, %v507
    %v509 = vlaneseq
    %v510 = vshrl.u32 %v509, 7
    %v511 = vsub.s32 2, %v510
    %v512 = vrot.slane %v239, %v511
    %516 = vmatprep.subr.mxu0 %v191
    %517 = vmatpush1.msra.mxu0 %v190
    %518 = vmatprep.subr.mxu0 %v194
    %519 = vmatpush1.msra.mxu0 %v193
    %520 = vmatprep.subr.mxu0 %v197
    %521 = vmatpush1.msra.mxu0 %v196
    %522 = vmatprep.subr.mxu0 %v200
    %523 = vmatpush1.msra.mxu0 %v199
    %524 = vmatprep.subr.mxu0 %v203
    %525 = vmatpush1.msra.mxu0 %v202
    %526 = vmatprep.subr.mxu0 %v206
    %527 = vmatpush1.msra.mxu0 %v205
    %528 = vmatprep.subr.mxu0 %v209
    %529 = vmatpush1.msra.mxu0 %v208
    %530 = vmatprep.subr.mxu0 %v212
    %531 = vmatpush1.msra.mxu0 %v211
    %532 = vmatprep.subr.mxu0 %v215
    %533 = vmatpush1.msra.mxu0 %v214
    %534 = vmatprep.subr.mxu0 %v218
    %535 = vmatpush1.msra.mxu0 %v217
    %536 = vmatprep.subr.mxu0 %v221
    %537 = vmatpush1.msra.mxu0 %v220
    %538 = vmatprep.subr.mxu0 %v224
    %539 = vmatpush1.msra.mxu0 %v223
    %540 = vmatprep.subr.mxu0 %v227
    %541 = vmatpush1.msra.mxu0 %v226
    %542 = vmatprep.subr.mxu0 %v230
    %543 = vmatpush1.msra.mxu0 %v229
    %544 = vmatprep.subr.mxu0 %v233
    %545 = vmatpush1.msra.mxu0 %v232
    %546 = vmatprep.subr.mxu0 %v236
    %547 = vmatpush1.msra.mxu0 %v235
    %548 = vmatprep.subr.mxu0 0.0
    %549 = vmatpush1.msra.mxu0 0.0
    %550 = vmatprep.subr.mxu0 0.0
    %551 = vmatpush1.msra.mxu0 0.0
    %552 = vmatprep.subr.mxu0 0.0
    %553 = vmatpush1.msra.mxu0 0.0
    %554 = vmatprep.subr.mxu0 0.0
    %555 = vmatpush1.msra.mxu0 0.0
    %556 = vmatprep.subr.mxu0 0.0
    %557 = vmatpush1.msra.mxu0 0.0
    %558 = vmatprep.subr.mxu0 0.0
    %559 = vmatpush1.msra.mxu0 0.0
    %560 = vmatprep.subr.mxu0 0.0
    %561 = vmatpush1.msra.mxu0 0.0
    %562 = vmatprep.subr.mxu0 0.0
    %563 = vmatpush1.msra.mxu0 0.0
    %564 = vmatprep.subr.mxu0 0.0
    %565 = vmatpush1.msra.mxu0 0.0
    %566 = vmatprep.subr.mxu0 0.0
    %567 = vmatpush1.msra.mxu0 0.0
    %568 = vmatprep.subr.mxu0 0.0
    %569 = vmatpush1.msra.mxu0 0.0
    %570 = vmatprep.subr.mxu0 0.0
    %571 = vmatpush1.msra.mxu0 0.0
    %572 = vmatprep.subr.mxu0 0.0
    %573 = vmatpush1.msra.mxu0 0.0
    %574 = vmatprep.subr.mxu0 0.0
    %575 = vmatpush1.msra.mxu0 0.0
    %576 = vmatprep.subr.mxu0 0.0
    %577 = vmatpush1.msra.mxu0 0.0
    %578 = vmatprep.subr.mxu0 0.0
    %579 = vmatpush1.msra.mxu0 0.0
    %580 = vmatprep.mubr.f32.mxu0 0.0
    %581 = vmatmul.mubr.f32.gmra.mrb[0].mxu0 %v141
    %v582 = vpop.f32.mrb[0].mxu0
    %v583 = vadd.f32 %v504, %v582
    %v584 = vpop.f32.mrb[0].mxu0
    %v585 = vadd.f32 %v508, %v584
    %586 = vdwg.mxu0
    %587 = vmatprep.subr.mxu0 0.0
    %588 = vmatpush1.msra.mxu0 %v192
    %589 = vmatprep.subr.mxu0 0.0
    %590 = vmatpush1.msra.mxu0 %v195
    %591 = vmatprep.subr.mxu0 0.0
    %592 = vmatpush1.msra.mxu0 %v198
    %593 = vmatprep.subr.mxu0 0.0
    %594 = vmatpush1.msra.mxu0 %v201
    %595 = vmatprep.subr.mxu0 0.0
    %596 = vmatpush1.msra.mxu0 %v204
    %597 = vmatprep.subr.mxu0 0.0
    %598 = vmatpush1.msra.mxu0 %v207
    %599 = vmatprep.subr.mxu0 0.0
    %600 = vmatpush1.msra.mxu0 %v210
    %601 = vmatprep.subr.mxu0 0.0
    %602 = vmatpush1.msra.mxu0 %v213
    %603 = vmatprep.subr.mxu0 0.0
    %604 = vmatpush1.msra.mxu0 %v216
    %605 = vmatprep.subr.mxu0 0.0
    %606 = vmatpush1.msra.mxu0 %v219
    %607 = vmatprep.subr.mxu0 0.0
    %608 = vmatpush1.msra.mxu0 %v222
    %609 = vmatprep.subr.mxu0 0.0
    %610 = vmatpush1.msra.mxu0 %v225
    %611 = vmatprep.subr.mxu0 0.0
    %612 = vmatpush1.msra.mxu0 %v228
    %613 = vmatprep.subr.mxu0 0.0
    %614 = vmatpush1.msra.mxu0 %v231
    %615 = vmatprep.subr.mxu0 0.0
    %616 = vmatpush1.msra.mxu0 %v234
    %617 = vmatprep.subr.mxu0 0.0
    %618 = vmatpush1.msra.mxu0 %v237
    %619 = vmatprep.subr.mxu0 0.0
    %620 = vmatpush1.msra.mxu0 0.0
    %621 = vmatprep.subr.mxu0 0.0
    %622 = vmatpush1.msra.mxu0 0.0
    %623 = vmatprep.subr.mxu0 0.0
    %624 = vmatpush1.msra.mxu0 0.0
    %625 = vmatprep.subr.mxu0 0.0
    %626 = vmatpush1.msra.mxu0 0.0
    %627 = vmatprep.subr.mxu0 0.0
    %628 = vmatpush1.msra.mxu0 0.0
    %629 = vmatprep.subr.mxu0 0.0
    %630 = vmatpush1.msra.mxu0 0.0
    %631 = vmatprep.subr.mxu0 0.0
    %632 = vmatpush1.msra.mxu0 0.0
    %633 = vmatprep.subr.mxu0 0.0
    %634 = vmatpush1.msra.mxu0 0.0
    %635 = vmatprep.subr.mxu0 0.0
    %636 = vmatpush1.msra.mxu0 0.0
    %637 = vmatprep.subr.mxu0 0.0
    %638 = vmatpush1.msra.mxu0 0.0
    %639 = vmatprep.subr.mxu0 0.0
    %640 = vmatpush1.msra.mxu0 0.0
    %641 = vmatprep.subr.mxu0 0.0
    %642 = vmatpush1.msra.mxu0 0.0
    %643 = vmatprep.subr.mxu0 0.0
    %644 = vmatpush1.msra.mxu0 0.0
    %645 = vmatprep.subr.mxu0 0.0
    %646 = vmatpush1.msra.mxu0 0.0
    %647 = vmatprep.subr.mxu0 0.0
    %648 = vmatpush1.msra.mxu0 0.0
    %649 = vmatprep.subr.mxu0 0.0
    %650 = vmatpush1.msra.mxu0 0.0
    %651 = vmatprep.mubr.f32.mxu0 0.0
    %652 = vmatmul.mubr.f32.gmra.mrb[0].mxu0 %v141
    %v653 = vpop.f32.mrb[0].mxu0
    %v654 = vadd.f32 %v512, %v653
    %v655 = vpop.f32.mrb[0].mxu0
    %656 = vdwg.mxu0
    %v657 = vadd.f32 %v497, %v583
    %v658 = vxor.u32 %v657, 2147483648
    %v659 = vmul.f32 %v658, 1.442695
    %v660 = vpow.pop %v659
    %v661 = vadd.f32 %v660, 1.0
    %v662 = vrcp.pop %v661
    %v663 = vmul.f32 1.0, %v662
    %v664 = vadd.f32 %v498, %v585
    %v665 = vxor.u32 %v664, 2147483648
    %v666 = vmul.f32 %v665, 1.442695
    %v667 = vpow.pop %v666
    %v668 = vadd.f32 %v667, 1.0
    %v669 = vrcp.pop %v668
    %v670 = vmul.f32 1.0, %v669
    %v671 = vmul.f32 %v663, %v654
    %v672 = vadd.f32 %v499, %v671
    %v673 = vtanh.pop %v672
    %v674 = vsub.f32 1.0, %v670
    %v675 = vmul.f32 %v674, %v673
    %v676 = vmul.f32 %v670, %v141
    %v677 = vadd.f32 %v675, %v676
    %v679 = vrot.slane %v677, 1
    %v681 = vsel %vm243, %v679, 0.0
    %v682 = vrot.slane %v681, 4
    %v683 = vadd.f32 %v681, %v682
    %v684 = vrot.slane %v683, 2
    %v685 = vadd.f32 %v683, %v684
    %v686 = vrot.slane %v685, 1
    %v687 = vadd.f32 %v685, %v686
    %s688 = scalar_lea.vmem %s1, 128
    %v689 = vld [vmem:[%s688] sm:$0xff]
    %v690 = vld [vmem:[%s688 + $0x8] sm:$0xff]
    %v691 = vld [vmem:[%s688 + $0x10] sm:$0xff]
    %v692 = vld [vmem:[%s688 + $0x18] sm:$0xff]
    %v693 = vld [vmem:[%s688 + $0x20] sm:$0xff]
    %v694 = vld [vmem:[%s688 + $0x28] sm:$0xff]
    %v695 = vld [vmem:[%s688 + $0x30] sm:$0xff]
    %v696 = vld [vmem:[%s688 + $0x38] sm:$0xff]
    %v697 = vld [vmem:[%s688 + $0x40] sm:$0xff]
    %v698 = vld [vmem:[%s688 + $0x48] sm:$0xff]
    %v699 = vld [vmem:[%s688 + $0x50] sm:$0xff]
    %v700 = vld [vmem:[%s688 + $0x58] sm:$0xff]
    %v701 = vld [vmem:[%s688 + $0x60] sm:$0xff]
    %v702 = vld [vmem:[%s688 + $0x68] sm:$0xff]
    %v703 = vld [vmem:[%s688 + $0x70] sm:$0xff]
    %v704 = vld [vmem:[%s688 + $0x78] sm:$0xff]
    %705 = vmatprep.subr.mxu0 0.0
    %706 = vmatpush1.msra.mxu0 %v689
    %707 = vmatprep.subr.mxu0 0.0
    %708 = vmatpush1.msra.mxu0 %v690
    %709 = vmatprep.subr.mxu0 0.0
    %710 = vmatpush1.msra.mxu0 %v691
    %711 = vmatprep.subr.mxu0 0.0
    %712 = vmatpush1.msra.mxu0 %v692
    %713 = vmatprep.subr.mxu0 0.0
    %714 = vmatpush1.msra.mxu0 %v693
    %715 = vmatprep.subr.mxu0 0.0
    %716 = vmatpush1.msra.mxu0 %v694
    %717 = vmatprep.subr.mxu0 0.0
    %718 = vmatpush1.msra.mxu0 %v695
    %719 = vmatprep.subr.mxu0 0.0
    %720 = vmatpush1.msra.mxu0 %v696
    %721 = vmatprep.subr.mxu0 0.0
    %722 = vmatpush1.msra.mxu0 %v697
    %723 = vmatprep.subr.mxu0 0.0
    %724 = vmatpush1.msra.mxu0 %v698
    %725 = vmatprep.subr.mxu0 0.0
    %726 = vmatpush1.msra.mxu0 %v699
    %727 = vmatprep.subr.mxu0 0.0
    %728 = vmatpush1.msra.mxu0 %v700
    %729 = vmatprep.subr.mxu0 0.0
    %730 = vmatpush1.msra.mxu0 %v701
    %731 = vmatprep.subr.mxu0 0.0
    %732 = vmatpush1.msra.mxu0 %v702
    %733 = vmatprep.subr.mxu0 0.0
    %734 = vmatpush1.msra.mxu0 %v703
    %735 = vmatprep.subr.mxu0 0.0
    %736 = vmatpush1.msra.mxu0 %v704
    %737 = vmatprep.subr.mxu0 0.0
    %738 = vmatpush1.msra.mxu0 0.0
    %739 = vmatprep.subr.mxu0 0.0
    %740 = vmatpush1.msra.mxu0 0.0
    %741 = vmatprep.subr.mxu0 0.0
    %742 = vmatpush1.msra.mxu0 0.0
    %743 = vmatprep.subr.mxu0 0.0
    %744 = vmatpush1.msra.mxu0 0.0
    %745 = vmatprep.subr.mxu0 0.0
    %746 = vmatpush1.msra.mxu0 0.0
    %747 = vmatprep.subr.mxu0 0.0
    %748 = vmatpush1.msra.mxu0 0.0
    %749 = vmatprep.subr.mxu0 0.0
    %750 = vmatpush1.msra.mxu0 0.0
    %751 = vmatprep.subr.mxu0 0.0
    %752 = vmatpush1.msra.mxu0 0.0
    %753 = vmatprep.subr.mxu0 0.0
    %754 = vmatpush1.msra.mxu0 0.0
    %755 = vmatprep.subr.mxu0 0.0
    %756 = vmatpush1.msra.mxu0 0.0
    %757 = vmatprep.subr.mxu0 0.0
    %758 = vmatpush1.msra.mxu0 0.0
    %759 = vmatprep.subr.mxu0 0.0
    %760 = vmatpush1.msra.mxu0 0.0
    %761 = vmatprep.subr.mxu0 0.0
    %762 = vmatpush1.msra.mxu0 0.0
    %763 = vmatprep.subr.mxu0 0.0
    %764 = vmatpush1.msra.mxu0 0.0
    %765 = vmatprep.subr.mxu0 0.0
    %766 = vmatpush1.msra.mxu0 0.0
    %767 = vmatprep.subr.mxu0 0.0
    %768 = vmatpush1.msra.mxu0 0.0
    %769 = vmatprep.mubr.f32.mxu0 0.0
    %770 = vmatmul.mubr.f32.gmra.mrb[0].mxu0 %v687
    %v771 = vpop.f32.mrb[0].mxu0
    %v772 = vadd.f32 0.0, %v771
    %v773 = vpop.f32.mrb[0].mxu0
    %774 = vdwg.mxu0
    %775 = vmatprep.subr.mxu0 %v143
    %776 = vmatpush1.msra.mxu0 %v142
    %777 = vmatprep.subr.mxu0 %v146
    %778 = vmatpush1.msra.mxu0 %v145
    %779 = vmatprep.subr.mxu0 %v149
    %780 = vmatpush1.msra.mxu0 %v148
    %781 = vmatprep.subr.mxu0 %v152
    %782 = vmatpush1.msra.mxu0 %v151
    %783 = vmatprep.subr.mxu0 %v155
    %784 = vmatpush1.msra.mxu0 %v154
    %785 = vmatprep.subr.mxu0 %v158
    %786 = vmatpush1.msra.mxu0 %v157
    %787 = vmatprep.subr.mxu0 %v161
    %788 = vmatpush1.msra.mxu0 %v160
    %789 = vmatprep.subr.mxu0 %v164
    %790 = vmatpush1.msra.mxu0 %v163
    %791 = vmatprep.subr.mxu0 %v167
    %792 = vmatpush1.msra.mxu0 %v166
    %793 = vmatprep.subr.mxu0 %v170
    %794 = vmatpush1.msra.mxu0 %v169
    %795 = vmatprep.subr.mxu0 %v173
    %796 = vmatpush1.msra.mxu0 %v172
    %797 = vmatprep.subr.mxu0 %v176
    %798 = vmatpush1.msra.mxu0 %v175
    %799 = vmatprep.subr.mxu0 %v179
    %800 = vmatpush1.msra.mxu0 %v178
    %801 = vmatprep.subr.mxu0 %v182
    %802 = vmatpush1.msra.mxu0 %v181
    %803 = vmatprep.subr.mxu0 %v185
    %804 = vmatpush1.msra.mxu0 %v184
    %805 = vmatprep.subr.mxu0 %v188
    %806 = vmatpush1.msra.mxu0 %v187
    %807 = vmatprep.subr.mxu0 0.0
    %808 = vmatpush1.msra.mxu0 0.0
    %809 = vmatprep.subr.mxu0 0.0
    %810 = vmatpush1.msra.mxu0 0.0
    %811 = vmatprep.subr.mxu0 0.0
    %812 = vmatpush1.msra.mxu0 0.0
    %813 = vmatprep.subr.mxu0 0.0
    %814 = vmatpush1.msra.mxu0 0.0
    %815 = vmatprep.subr.mxu0 0.0
    %816 = vmatpush1.msra.mxu0 0.0
    %817 = vmatprep.subr.mxu0 0.0
    %818 = vmatpush1.msra.mxu0 0.0
    %819 = vmatprep.subr.mxu0 0.0
    %820 = vmatpush1.msra.mxu0 0.0
    %821 = vmatprep.subr.mxu0 0.0
    %822 = vmatpush1.msra.mxu0 0.0
    %823 = vmatprep.subr.mxu0 0.0
    %824 = vmatpush1.msra.mxu0 0.0
    %825 = vmatprep.subr.mxu0 0.0
    %826 = vmatpush1.msra.mxu0 0.0
    %827 = vmatprep.subr.mxu0 0.0
    %828 = vmatpush1.msra.mxu0 0.0
    %829 = vmatprep.subr.mxu0 0.0
    %830 = vmatpush1.msra.mxu0 0.0
    %831 = vmatprep.subr.mxu0 0.0
    %832 = vmatpush1.msra.mxu0 0.0
    %833 = vmatprep.subr.mxu0 0.0
    %834 = vmatpush1.msra.mxu0 0.0
    %835 = vmatprep.subr.mxu0 0.0
    %836 = vmatpush1.msra.mxu0 0.0
    %837 = vmatprep.subr.mxu0 0.0
    %838 = vmatpush1.msra.mxu0 0.0
    %839 = vmatprep.mubr.f32.mxu0 0.0
    %840 = vmatmul.mubr.f32.gmra.mrb[0].mxu0 %v772
    %v841 = vpop.f32.mrb[0].mxu0
    %v842 = vadd.f32 0.0, %v841
    %v843 = vpop.f32.mrb[0].mxu0
    %v844 = vadd.f32 0.0, %v843
    %845 = vdwg.mxu0
    %846 = vmatprep.subr.mxu0 0.0
    %847 = vmatpush1.msra.mxu0 %v144
    %848 = vmatprep.subr.mxu0 0.0
    %849 = vmatpush1.msra.mxu0 %v147
    %850 = vmatprep.subr.mxu0 0.0
    %851 = vmatpush1.msra.mxu0 %v150
    %852 = vmatprep.subr.mxu0 0.0
    %853 = vmatpush1.msra.mxu0 %v153
    %854 = vmatprep.subr.mxu0 0.0
    %855 = vmatpush1.msra.mxu0 %v156
    %856 = vmatprep.subr.mxu0 0.0
    %857 = vmatpush1.msra.mxu0 %v159
    %858 = vmatprep.subr.mxu0 0.0
    %859 = vmatpush1.msra.mxu0 %v162
    %860 = vmatprep.subr.mxu0 0.0
    %861 = vmatpush1.msra.mxu0 %v165
    %862 = vmatprep.subr.mxu0 0.0
    %863 = vmatpush1.msra.mxu0 %v168
    %864 = vmatprep.subr.mxu0 0.0
    %865 = vmatpush1.msra.mxu0 %v171
    %866 = vmatprep.subr.mxu0 0.0
    %867 = vmatpush1.msra.mxu0 %v174
    %868 = vmatprep.subr.mxu0 0.0
    %869 = vmatpush1.msra.mxu0 %v177
    %870 = vmatprep.subr.mxu0 0.0
    %871 = vmatpush1.msra.mxu0 %v180
    %872 = vmatprep.subr.mxu0 0.0
    %873 = vmatpush1.msra.mxu0 %v183
    %874 = vmatprep.subr.mxu0 0.0
    %875 = vmatpush1.msra.mxu0 %v186
    %876 = vmatprep.subr.mxu0 0.0
    %877 = vmatpush1.msra.mxu0 %v189
    %878 = vmatprep.subr.mxu0 0.0
    %879 = vmatpush1.msra.mxu0 0.0
    %880 = vmatprep.subr.mxu0 0.0
    %881 = vmatpush1.msra.mxu0 0.0
    %882 = vmatprep.subr.mxu0 0.0
    %883 = vmatpush1.msra.mxu0 0.0
    %884 = vmatprep.subr.mxu0 0.0
    %885 = vmatpush1.msra.mxu0 0.0
    %886 = vmatprep.subr.mxu0 0.0
    %887 = vmatpush1.msra.mxu0 0.0
    %888 = vmatprep.subr.mxu0 0.0
    %889 = vmatpush1.msra.mxu0 0.0
    %890 = vmatprep.subr.mxu0 0.0
    %891 = vmatpush1.msra.mxu0 0.0
    %892 = vmatprep.subr.mxu0 0.0
    %893 = vmatpush1.msra.mxu0 0.0
    %894 = vmatprep.subr.mxu0 0.0
    %895 = vmatpush1.msra.mxu0 0.0
    %896 = vmatprep.subr.mxu0 0.0
    %897 = vmatpush1.msra.mxu0 0.0
    %898 = vmatprep.subr.mxu0 0.0
    %899 = vmatpush1.msra.mxu0 0.0
    %900 = vmatprep.subr.mxu0 0.0
    %901 = vmatpush1.msra.mxu0 0.0
    %902 = vmatprep.subr.mxu0 0.0
    %903 = vmatpush1.msra.mxu0 0.0
    %904 = vmatprep.subr.mxu0 0.0
    %905 = vmatpush1.msra.mxu0 0.0
    %906 = vmatprep.subr.mxu0 0.0
    %907 = vmatpush1.msra.mxu0 0.0
    %908 = vmatprep.subr.mxu0 0.0
    %909 = vmatpush1.msra.mxu0 0.0
    %910 = vmatprep.mubr.f32.mxu0 0.0
    %911 = vmatmul.mubr.f32.gmra.mrb[0].mxu0 %v772
    %v912 = vpop.f32.mrb[0].mxu0
    %v913 = vadd.f32 0.0, %v912
    %v914 = vpop.f32.mrb[0].mxu0
    %915 = vdwg.mxu0
    %v916 = vsel %vm119, %v842, 0.0
    %v917 = vsel %vm119, %v844, 0.0
    %v918 = vsel %vm119, %v913, 0.0
    %v919 = vadd.f32 %v916, %v485
    %v920 = vadd.f32 %v917, %v489
    %v921 = vadd.f32 %v918, %v493
    %922 = vmatprep.subr.mxu0 %v191
    %923 = vmatpush1.msra.mxu0 %v190
    %924 = vmatprep.subr.mxu0 %v194
    %925 = vmatpush1.msra.mxu0 %v193
    %926 = vmatprep.subr.mxu0 %v197
    %927 = vmatpush1.msra.mxu0 %v196
    %928 = vmatprep.subr.mxu0 %v200
    %929 = vmatpush1.msra.mxu0 %v199
    %930 = vmatprep.subr.mxu0 %v203
    %931 = vmatpush1.msra.mxu0 %v202
    %932 = vmatprep.subr.mxu0 %v206
    %933 = vmatpush1.msra.mxu0 %v205
    %934 = vmatprep.subr.mxu0 %v209
    %935 = vmatpush1.msra.mxu0 %v208
    %936 = vmatprep.subr.mxu0 %v212
    %937 = vmatpush1.msra.mxu0 %v211
    %938 = vmatprep.subr.mxu0 %v215
    %939 = vmatpush1.msra.mxu0 %v214
    %940 = vmatprep.subr.mxu0 %v218
    %941 = vmatpush1.msra.mxu0 %v217
    %942 = vmatprep.subr.mxu0 %v221
    %943 = vmatpush1.msra.mxu0 %v220
    %944 = vmatprep.subr.mxu0 %v224
    %945 = vmatpush1.msra.mxu0 %v223
    %946 = vmatprep.subr.mxu0 %v227
    %947 = vmatpush1.msra.mxu0 %v226
    %948 = vmatprep.subr.mxu0 %v230
    %949 = vmatpush1.msra.mxu0 %v229
    %950 = vmatprep.subr.mxu0 %v233
    %951 = vmatpush1.msra.mxu0 %v232
    %952 = vmatprep.subr.mxu0 %v236
    %953 = vmatpush1.msra.mxu0 %v235
    %954 = vmatprep.subr.mxu0 0.0
    %955 = vmatpush1.msra.mxu0 0.0
    %956 = vmatprep.subr.mxu0 0.0
    %957 = vmatpush1.msra.mxu0 0.0
    %958 = vmatprep.subr.mxu0 0.0
    %959 = vmatpush1.msra.mxu0 0.0
    %960 = vmatprep.subr.mxu0 0.0
    %961 = vmatpush1.msra.mxu0 0.0
    %962 = vmatprep.subr.mxu0 0.0
    %963 = vmatpush1.msra.mxu0 0.0
    %964 = vmatprep.subr.mxu0 0.0
    %965 = vmatpush1.msra.mxu0 0.0
    %966 = vmatprep.subr.mxu0 0.0
    %967 = vmatpush1.msra.mxu0 0.0
    %968 = vmatprep.subr.mxu0 0.0
    %969 = vmatpush1.msra.mxu0 0.0
    %970 = vmatprep.subr.mxu0 0.0
    %971 = vmatpush1.msra.mxu0 0.0
    %972 = vmatprep.subr.mxu0 0.0
    %973 = vmatpush1.msra.mxu0 0.0
    %974 = vmatprep.subr.mxu0 0.0
    %975 = vmatpush1.msra.mxu0 0.0
    %976 = vmatprep.subr.mxu0 0.0
    %977 = vmatpush1.msra.mxu0 0.0
    %978 = vmatprep.subr.mxu0 0.0
    %979 = vmatpush1.msra.mxu0 0.0
    %980 = vmatprep.subr.mxu0 0.0
    %981 = vmatpush1.msra.mxu0 0.0
    %982 = vmatprep.subr.mxu0 0.0
    %983 = vmatpush1.msra.mxu0 0.0
    %984 = vmatprep.subr.mxu0 0.0
    %985 = vmatpush1.msra.mxu0 0.0
    %986 = vmatprep.mubr.f32.mxu0 0.0
    %987 = vmatmul.mubr.f32.gmra.mrb[0].mxu0 %v677
    %v988 = vpop.f32.mrb[0].mxu0
    %v989 = vadd.f32 %v504, %v988
    %v990 = vpop.f32.mrb[0].mxu0
    %v991 = vadd.f32 %v508, %v990
    %992 = vdwg.mxu0
    %993 = vmatprep.subr.mxu0 0.0
    %994 = vmatpush1.msra.mxu0 %v192
    %995 = vmatprep.subr.mxu0 0.0
    %996 = vmatpush1.msra.mxu0 %v195
    %997 = vmatprep.subr.mxu0 0.0
    %998 = vmatpush1.msra.mxu0 %v198
    %999 = vmatprep.subr.mxu0 0.0
    %1000 = vmatpush1.msra.mxu0 %v201
    %1001 = vmatprep.subr.mxu0 0.0
    %1002 = vmatpush1.msra.mxu0 %v204
    %1003 = vmatprep.subr.mxu0 0.0
    %1004 = vmatpush1.msra.mxu0 %v207
    %1005 = vmatprep.subr.mxu0 0.0
    %1006 = vmatpush1.msra.mxu0 %v210
    %1007 = vmatprep.subr.mxu0 0.0
    %1008 = vmatpush1.msra.mxu0 %v213
    %1009 = vmatprep.subr.mxu0 0.0
    %1010 = vmatpush1.msra.mxu0 %v216
    %1011 = vmatprep.subr.mxu0 0.0
    %1012 = vmatpush1.msra.mxu0 %v219
    %1013 = vmatprep.subr.mxu0 0.0
    %1014 = vmatpush1.msra.mxu0 %v222
    %1015 = vmatprep.subr.mxu0 0.0
    %1016 = vmatpush1.msra.mxu0 %v225
    %1017 = vmatprep.subr.mxu0 0.0
    %1018 = vmatpush1.msra.mxu0 %v228
    %1019 = vmatprep.subr.mxu0 0.0
    %1020 = vmatpush1.msra.mxu0 %v231
    %1021 = vmatprep.subr.mxu0 0.0
    %1022 = vmatpush1.msra.mxu0 %v234
    %1023 = vmatprep.subr.mxu0 0.0
    %1024 = vmatpush1.msra.mxu0 %v237
    %1025 = vmatprep.subr.mxu0 0.0
    %1026 = vmatpush1.msra.mxu0 0.0
    %1027 = vmatprep.subr.mxu0 0.0
    %1028 = vmatpush1.msra.mxu0 0.0
    %1029 = vmatprep.subr.mxu0 0.0
    %1030 = vmatpush1.msra.mxu0 0.0
    %1031 = vmatprep.subr.mxu0 0.0
    %1032 = vmatpush1.msra.mxu0 0.0
    %1033 = vmatprep.subr.mxu0 0.0
    %1034 = vmatpush1.msra.mxu0 0.0
    %1035 = vmatprep.subr.mxu0 0.0
    %1036 = vmatpush1.msra.mxu0 0.0
    %1037 = vmatprep.subr.mxu0 0.0
    %1038 = vmatpush1.msra.mxu0 0.0
    %1039 = vmatprep.subr.mxu0 0.0
    %1040 = vmatpush1.msra.mxu0 0.0
    %1041 = vmatprep.subr.mxu0 0.0
    %1042 = vmatpush1.msra.mxu0 0.0
    %1043 = vmatprep.subr.mxu0 0.0
    %1044 = vmatpush1.msra.mxu0 0.0
    %1045 = vmatprep.subr.mxu0 0.0
    %1046 = vmatpush1.msra.mxu0 0.0
    %1047 = vmatprep.subr.mxu0 0.0
    %1048 = vmatpush1.msra.mxu0 0.0
    %1049 = vmatprep.subr.mxu0 0.0
    %1050 = vmatpush1.msra.mxu0 0.0
    %1051 = vmatprep.subr.mxu0 0.0
    %1052 = vmatpush1.msra.mxu0 0.0
    %1053 = vmatprep.subr.mxu0 0.0
    %1054 = vmatpush1.msra.mxu0 0.0
    %1055 = vmatprep.subr.mxu0 0.0
    %1056 = vmatpush1.msra.mxu0 0.0
    %1057 = vmatprep.mubr.f32.mxu0 0.0
    %1058 = vmatmul.mubr.f32.gmra.mrb[0].mxu0 %v677
    %v1059 = vpop.f32.mrb[0].mxu0
    %v1060 = vadd.f32 %v512, %v1059
    %v1061 = vpop.f32.mrb[0].mxu0
    %1062 = vdwg.mxu0
    %v1063 = vadd.f32 %v919, %v989
    %v1064 = vxor.u32 %v1063, 2147483648
    %v1065 = vmul.f32 %v1064, 1.442695
    %v1066 = vpow.pop %v1065
    %v1067 = vadd.f32 %v1066, 1.0
    %v1068 = vrcp.pop %v1067
    %v1069 = vmul.f32 1.0, %v1068
    %v1070 = vadd.f32 %v920, %v991
    %v1071 = vxor.u32 %v1070, 2147483648
    %v1072 = vmul.f32 %v1071, 1.442695
    %v1073 = vpow.pop %v1072
    %v1074 = vadd.f32 %v1073, 1.0
    %v1075 = vrcp.pop %v1074
    %v1076 = vmul.f32 1.0, %v1075
    %v1077 = vmul.f32 %v1069, %v1060
    %v1078 = vadd.f32 %v921, %v1077
    %v1079 = vtanh.pop %v1078
    %v1080 = vsub.f32 1.0, %v1076
    %v1081 = vmul.f32 %v1080, %v1079
    %v1082 = vmul.f32 %v1076, %v677
    %v1083 = vadd.f32 %v1081, %v1082
    %v1085 = vrot.slane %v1083, 1
    %v1087 = vsel %vm243, %v1085, 0.0
    %v1088 = vrot.slane %v1087, 4
    %v1089 = vadd.f32 %v1087, %v1088
    %v1090 = vrot.slane %v1089, 2
    %v1091 = vadd.f32 %v1089, %v1090
    %v1092 = vrot.slane %v1091, 1
    %v1093 = vadd.f32 %v1091, %v1092
    %s1094 = scalar_lea.vmem %s1, 256
    %v1095 = vld [vmem:[%s1094] sm:$0xff]
    %v1096 = vld [vmem:[%s1094 + $0x8] sm:$0xff]
    %v1097 = vld [vmem:[%s1094 + $0x10] sm:$0xff]
    %v1098 = vld [vmem:[%s1094 + $0x18] sm:$0xff]
    %v1099 = vld [vmem:[%s1094 + $0x20] sm:$0xff]
    %v1100 = vld [vmem:[%s1094 + $0x28] sm:$0xff]
    %v1101 = vld [vmem:[%s1094 + $0x30] sm:$0xff]
    %v1102 = vld [vmem:[%s1094 + $0x38] sm:$0xff]
    %v1103 = vld [vmem:[%s1094 + $0x40] sm:$0xff]
    %v1104 = vld [vmem:[%s1094 + $0x48] sm:$0xff]
    %v1105 = vld [vmem:[%s1094 + $0x50] sm:$0xff]
    %v1106 = vld [vmem:[%s1094 + $0x58] sm:$0xff]
    %v1107 = vld [vmem:[%s1094 + $0x60] sm:$0xff]
    %v1108 = vld [vmem:[%s1094 + $0x68] sm:$0xff]
    %v1109 = vld [vmem:[%s1094 + $0x70] sm:$0xff]
    %v1110 = vld [vmem:[%s1094 + $0x78] sm:$0xff]
    %1111 = vmatprep.subr.mxu0 0.0
    %1112 = vmatpush1.msra.mxu0 %v1095
    %1113 = vmatprep.subr.mxu0 0.0
    %1114 = vmatpush1.msra.mxu0 %v1096
    %1115 = vmatprep.subr.mxu0 0.0
    %1116 = vmatpush1.msra.mxu0 %v1097
    %1117 = vmatprep.subr.mxu0 0.0
    %1118 = vmatpush1.msra.mxu0 %v1098
    %1119 = vmatprep.subr.mxu0 0.0
    %1120 = vmatpush1.msra.mxu0 %v1099
    %1121 = vmatprep.subr.mxu0 0.0
    %1122 = vmatpush1.msra.mxu0 %v1100
    %1123 = vmatprep.subr.mxu0 0.0
    %1124 = vmatpush1.msra.mxu0 %v1101
    %1125 = vmatprep.subr.mxu0 0.0
    %1126 = vmatpush1.msra.mxu0 %v1102
    %1127 = vmatprep.subr.mxu0 0.0
    %1128 = vmatpush1.msra.mxu0 %v1103
    %1129 = vmatprep.subr.mxu0 0.0
    %1130 = vmatpush1.msra.mxu0 %v1104
    %1131 = vmatprep.subr.mxu0 0.0
    %1132 = vmatpush1.msra.mxu0 %v1105
    %1133 = vmatprep.subr.mxu0 0.0
    %1134 = vmatpush1.msra.mxu0 %v1106
    %1135 = vmatprep.subr.mxu0 0.0
    %1136 = vmatpush1.msra.mxu0 %v1107
    %1137 = vmatprep.subr.mxu0 0.0
    %1138 = vmatpush1.msra.mxu0 %v1108
    %1139 = vmatprep.subr.mxu0 0.0
    %1140 = vmatpush1.msra.mxu0 %v1109
    %1141 = vmatprep.subr.mxu0 0.0
    %1142 = vmatpush1.msra.mxu0 %v1110
    %1143 = vmatprep.subr.mxu0 0.0
    %1144 = vmatpush1.msra.mxu0 0.0
    %1145 = vmatprep.subr.mxu0 0.0
    %1146 = vmatpush1.msra.mxu0 0.0
    %1147 = vmatprep.subr.mxu0 0.0
    %1148 = vmatpush1.msra.mxu0 0.0
    %1149 = vmatprep.subr.mxu0 0.0
    %1150 = vmatpush1.msra.mxu0 0.0
    %1151 = vmatprep.subr.mxu0 0.0
    %1152 = vmatpush1.msra.mxu0 0.0
    %1153 = vmatprep.subr.mxu0 0.0
    %1154 = vmatpush1.msra.mxu0 0.0
    %1155 = vmatprep.subr.mxu0 0.0
    %1156 = vmatpush1.msra.mxu0 0.0
    %1157 = vmatprep.subr.mxu0 0.0
    %1158 = vmatpush1.msra.mxu0 0.0
    %1159 = vmatprep.subr.mxu0 0.0
    %1160 = vmatpush1.msra.mxu0 0.0
    %1161 = vmatprep.subr.mxu0 0.0
    %1162 = vmatpush1.msra.mxu0 0.0
    %1163 = vmatprep.subr.mxu0 0.0
    %1164 = vmatpush1.msra.mxu0 0.0
    %1165 = vmatprep.subr.mxu0 0.0
    %1166 = vmatpush1.msra.mxu0 0.0
    %1167 = vmatprep.subr.mxu0 0.0
    %1168 = vmatpush1.msra.mxu0 0.0
    %1169 = vmatprep.subr.mxu0 0.0
    %1170 = vmatpush1.msra.mxu0 0.0
    %1171 = vmatprep.subr.mxu0 0.0
    %1172 = vmatpush1.msra.mxu0 0.0
    %1173 = vmatprep.subr.mxu0 0.0
    %1174 = vmatpush1.msra.mxu0 0.0
    %1175 = vmatprep.mubr.f32.mxu0 0.0
    %1176 = vmatmul.mubr.f32.gmra.mrb[0].mxu0 %v1093
    %v1177 = vpop.f32.mrb[0].mxu0
    %v1178 = vadd.f32 0.0, %v1177
    %v1179 = vpop.f32.mrb[0].mxu0
    %1180 = vdwg.mxu0
    %1181 = vmatprep.subr.mxu0 %v143
    %1182 = vmatpush1.msra.mxu0 %v142
    %1183 = vmatprep.subr.mxu0 %v146
    %1184 = vmatpush1.msra.mxu0 %v145
    %1185 = vmatprep.subr.mxu0 %v149
    %1186 = vmatpush1.msra.mxu0 %v148
    %1187 = vmatprep.subr.mxu0 %v152
    %1188 = vmatpush1.msra.mxu0 %v151
    %1189 = vmatprep.subr.mxu0 %v155
    %1190 = vmatpush1.msra.mxu0 %v154
    %1191 = vmatprep.subr.mxu0 %v158
    %1192 = vmatpush1.msra.mxu0 %v157
    %1193 = vmatprep.subr.mxu0 %v161
    %1194 = vmatpush1.msra.mxu0 %v160
    %1195 = vmatprep.subr.mxu0 %v164
    %1196 = vmatpush1.msra.mxu0 %v163
    %1197 = vmatprep.subr.mxu0 %v167
    %1198 = vmatpush1.msra.mxu0 %v166
    %1199 = vmatprep.subr.mxu0 %v170
    %1200 = vmatpush1.msra.mxu0 %v169
    %1201 = vmatprep.subr.mxu0 %v173
    %1202 = vmatpush1.msra.mxu0 %v172
    %1203 = vmatprep.subr.mxu0 %v176
    %1204 = vmatpush1.msra.mxu0 %v175
    %1205 = vmatprep.subr.mxu0 %v179
    %1206 = vmatpush1.msra.mxu0 %v178
    %1207 = vmatprep.subr.mxu0 %v182
    %1208 = vmatpush1.msra.mxu0 %v181
    %1209 = vmatprep.subr.mxu0 %v185
    %1210 = vmatpush1.msra.mxu0 %v184
    %1211 = vmatprep.subr.mxu0 %v188
    %1212 = vmatpush1.msra.mxu0 %v187
    %1213 = vmatprep.subr.mxu0 0.0
    %1214 = vmatpush1.msra.mxu0 0.0
    %1215 = vmatprep.subr.mxu0 0.0
    %1216 = vmatpush1.msra.mxu0 0.0
    %1217 = vmatprep.subr.mxu0 0.0
    %1218 = vmatpush1.msra.mxu0 0.0
    %1219 = vmatprep.subr.mxu0 0.0
    %1220 = vmatpush1.msra.mxu0 0.0
    %1221 = vmatprep.subr.mxu0 0.0
    %1222 = vmatpush1.msra.mxu0 0.0
    %1223 = vmatprep.subr.mxu0 0.0
    %1224 = vmatpush1.msra.mxu0 0.0
    %1225 = vmatprep.subr.mxu0 0.0
    %1226 = vmatpush1.msra.mxu0 0.0
    %1227 = vmatprep.subr.mxu0 0.0
    %1228 = vmatpush1.msra.mxu0 0.0
    %1229 = vmatprep.subr.mxu0 0.0
    %1230 = vmatpush1.msra.mxu0 0.0
    %1231 = vmatprep.subr.mxu0 0.0
    %1232 = vmatpush1.msra.mxu0 0.0
    %1233 = vmatprep.subr.mxu0 0.0
    %1234 = vmatpush1.msra.mxu0 0.0
    %1235 = vmatprep.subr.mxu0 0.0
    %1236 = vmatpush1.msra.mxu0 0.0
    %1237 = vmatprep.subr.mxu0 0.0
    %1238 = vmatpush1.msra.mxu0 0.0
    %1239 = vmatprep.subr.mxu0 0.0
    %1240 = vmatpush1.msra.mxu0 0.0
    %1241 = vmatprep.subr.mxu0 0.0
    %1242 = vmatpush1.msra.mxu0 0.0
    %1243 = vmatprep.subr.mxu0 0.0
    %1244 = vmatpush1.msra.mxu0 0.0
    %1245 = vmatprep.mubr.f32.mxu0 0.0
    %1246 = vmatmul.mubr.f32.gmra.mrb[0].mxu0 %v1178
    %v1247 = vpop.f32.mrb[0].mxu0
    %v1248 = vadd.f32 0.0, %v1247
    %v1249 = vpop.f32.mrb[0].mxu0
    %v1250 = vadd.f32 0.0, %v1249
    %1251 = vdwg.mxu0
    %1252 = vmatprep.subr.mxu0 0.0
    %1253 = vmatpush1.msra.mxu0 %v144
    %1254 = vmatprep.subr.mxu0 0.0
    %1255 = vmatpush1.msra.mxu0 %v147
    %1256 = vmatprep.subr.mxu0 0.0
    %1257 = vmatpush1.msra.mxu0 %v150
    %1258 = vmatprep.subr.mxu0 0.0
    %1259 = vmatpush1.msra.mxu0 %v153
    %1260 = vmatprep.subr.mxu0 0.0
    %1261 = vmatpush1.msra.mxu0 %v156
    %1262 = vmatprep.subr.mxu0 0.0
    %1263 = vmatpush1.msra.mxu0 %v159
    %1264 = vmatprep.subr.mxu0 0.0
    %1265 = vmatpush1.msra.mxu0 %v162
    %1266 = vmatprep.subr.mxu0 0.0
    %1267 = vmatpush1.msra.mxu0 %v165
    %1268 = vmatprep.subr.mxu0 0.0
    %1269 = vmatpush1.msra.mxu0 %v168
    %1270 = vmatprep.subr.mxu0 0.0
    %1271 = vmatpush1.msra.mxu0 %v171
    %1272 = vmatprep.subr.mxu0 0.0
    %1273 = vmatpush1.msra.mxu0 %v174
    %1274 = vmatprep.subr.mxu0 0.0
    %1275 = vmatpush1.msra.mxu0 %v177
    %1276 = vmatprep.subr.mxu0 0.0
    %1277 = vmatpush1.msra.mxu0 %v180
    %1278 = vmatprep.subr.mxu0 0.0
    %1279 = vmatpush1.msra.mxu0 %v183
    %1280 = vmatprep.subr.mxu0 0.0
    %1281 = vmatpush1.msra.mxu0 %v186
    %1282 = vmatprep.subr.mxu0 0.0
    %1283 = vmatpush1.msra.mxu0 %v189
    %1284 = vmatprep.subr.mxu0 0.0
    %1285 = vmatpush1.msra.mxu0 0.0
    %1286 = vmatprep.subr.mxu0 0.0
    %1287 = vmatpush1.msra.mxu0 0.0
    %1288 = vmatprep.subr.mxu0 0.0
    %1289 = vmatpush1.msra.mxu0 0.0
    %1290 = vmatprep.subr.mxu0 0.0
    %1291 = vmatpush1.msra.mxu0 0.0
    %1292 = vmatprep.subr.mxu0 0.0
    %1293 = vmatpush1.msra.mxu0 0.0
    %1294 = vmatprep.subr.mxu0 0.0
    %1295 = vmatpush1.msra.mxu0 0.0
    %1296 = vmatprep.subr.mxu0 0.0
    %1297 = vmatpush1.msra.mxu0 0.0
    %1298 = vmatprep.subr.mxu0 0.0
    %1299 = vmatpush1.msra.mxu0 0.0
    %1300 = vmatprep.subr.mxu0 0.0
    %1301 = vmatpush1.msra.mxu0 0.0
    %1302 = vmatprep.subr.mxu0 0.0
    %1303 = vmatpush1.msra.mxu0 0.0
    %1304 = vmatprep.subr.mxu0 0.0
    %1305 = vmatpush1.msra.mxu0 0.0
    %1306 = vmatprep.subr.mxu0 0.0
    %1307 = vmatpush1.msra.mxu0 0.0
    %1308 = vmatprep.subr.mxu0 0.0
    %1309 = vmatpush1.msra.mxu0 0.0
    %1310 = vmatprep.subr.mxu0 0.0
    %1311 = vmatpush1.msra.mxu0 0.0
    %1312 = vmatprep.subr.mxu0 0.0
    %1313 = vmatpush1.msra.mxu0 0.0
    %1314 = vmatprep.subr.mxu0 0.0
    %1315 = vmatpush1.msra.mxu0 0.0
    %1316 = vmatprep.mubr.f32.mxu0 0.0
    %1317 = vmatmul.mubr.f32.gmra.mrb[0].mxu0 %v1178
    %v1318 = vpop.f32.mrb[0].mxu0
    %v1319 = vadd.f32 0.0, %v1318
    %v1320 = vpop.f32.mrb[0].mxu0
    %1321 = vdwg.mxu0
    %v1322 = vsel %vm119, %v1248, 0.0
    %v1323 = vsel %vm119, %v1250, 0.0
    %v1324 = vsel %vm119, %v1319, 0.0
    %v1325 = vadd.f32 %v1322, %v485
    %v1326 = vadd.f32 %v1323, %v489
    %v1327 = vadd.f32 %v1324, %v493
    %1328 = vmatprep.subr.mxu0 %v191
    %1329 = vmatpush1.msra.mxu0 %v190
    %1330 = vmatprep.subr.mxu0 %v194
    %1331 = vmatpush1.msra.mxu0 %v193
    %1332 = vmatprep.subr.mxu0 %v197
    %1333 = vmatpush1.msra.mxu0 %v196
    %1334 = vmatprep.subr.mxu0 %v200
    %1335 = vmatpush1.msra.mxu0 %v199
    %1336 = vmatprep.subr.mxu0 %v203
    %1337 = vmatpush1.msra.mxu0 %v202
    %1338 = vmatprep.subr.mxu0 %v206
    %1339 = vmatpush1.msra.mxu0 %v205
    %1340 = vmatprep.subr.mxu0 %v209
    %1341 = vmatpush1.msra.mxu0 %v208
    %1342 = vmatprep.subr.mxu0 %v212
    %1343 = vmatpush1.msra.mxu0 %v211
    %1344 = vmatprep.subr.mxu0 %v215
    %1345 = vmatpush1.msra.mxu0 %v214
    %1346 = vmatprep.subr.mxu0 %v218
    %1347 = vmatpush1.msra.mxu0 %v217
    %1348 = vmatprep.subr.mxu0 %v221
    %1349 = vmatpush1.msra.mxu0 %v220
    %1350 = vmatprep.subr.mxu0 %v224
    %1351 = vmatpush1.msra.mxu0 %v223
    %1352 = vmatprep.subr.mxu0 %v227
    %1353 = vmatpush1.msra.mxu0 %v226
    %1354 = vmatprep.subr.mxu0 %v230
    %1355 = vmatpush1.msra.mxu0 %v229
    %1356 = vmatprep.subr.mxu0 %v233
    %1357 = vmatpush1.msra.mxu0 %v232
    %1358 = vmatprep.subr.mxu0 %v236
    %1359 = vmatpush1.msra.mxu0 %v235
    %1360 = vmatprep.subr.mxu0 0.0
    %1361 = vmatpush1.msra.mxu0 0.0
    %1362 = vmatprep.subr.mxu0 0.0
    %1363 = vmatpush1.msra.mxu0 0.0
    %1364 = vmatprep.subr.mxu0 0.0
    %1365 = vmatpush1.msra.mxu0 0.0
    %1366 = vmatprep.subr.mxu0 0.0
    %1367 = vmatpush1.msra.mxu0 0.0
    %1368 = vmatprep.subr.mxu0 0.0
    %1369 = vmatpush1.msra.mxu0 0.0
    %1370 = vmatprep.subr.mxu0 0.0
    %1371 = vmatpush1.msra.mxu0 0.0
    %1372 = vmatprep.subr.mxu0 0.0
    %1373 = vmatpush1.msra.mxu0 0.0
    %1374 = vmatprep.subr.mxu0 0.0
    %1375 = vmatpush1.msra.mxu0 0.0
    %1376 = vmatprep.subr.mxu0 0.0
    %1377 = vmatpush1.msra.mxu0 0.0
    %1378 = vmatprep.subr.mxu0 0.0
    %1379 = vmatpush1.msra.mxu0 0.0
    %1380 = vmatprep.subr.mxu0 0.0
    %1381 = vmatpush1.msra.mxu0 0.0
    %1382 = vmatprep.subr.mxu0 0.0
    %1383 = vmatpush1.msra.mxu0 0.0
    %1384 = vmatprep.subr.mxu0 0.0
    %1385 = vmatpush1.msra.mxu0 0.0
    %1386 = vmatprep.subr.mxu0 0.0
    %1387 = vmatpush1.msra.mxu0 0.0
    %1388 = vmatprep.subr.mxu0 0.0
    %1389 = vmatpush1.msra.mxu0 0.0
    %1390 = vmatprep.subr.mxu0 0.0
    %1391 = vmatpush1.msra.mxu0 0.0
    %1392 = vmatprep.mubr.f32.mxu0 0.0
    %1393 = vmatmul.mubr.f32.gmra.mrb[0].mxu0 %v1083
    %v1394 = vpop.f32.mrb[0].mxu0
    %v1395 = vadd.f32 %v504, %v1394
    %v1396 = vpop.f32.mrb[0].mxu0
    %v1397 = vadd.f32 %v508, %v1396
    %1398 = vdwg.mxu0
    %1399 = vmatprep.subr.mxu0 0.0
    %1400 = vmatpush1.msra.mxu0 %v192
    %1401 = vmatprep.subr.mxu0 0.0
    %1402 = vmatpush1.msra.mxu0 %v195
    %1403 = vmatprep.subr.mxu0 0.0
    %1404 = vmatpush1.msra.mxu0 %v198
    %1405 = vmatprep.subr.mxu0 0.0
    %1406 = vmatpush1.msra.mxu0 %v201
    %1407 = vmatprep.subr.mxu0 0.0
    %1408 = vmatpush1.msra.mxu0 %v204
    %1409 = vmatprep.subr.mxu0 0.0
    %1410 = vmatpush1.msra.mxu0 %v207
    %1411 = vmatprep.subr.mxu0 0.0
    %1412 = vmatpush1.msra.mxu0 %v210
    %1413 = vmatprep.subr.mxu0 0.0
    %1414 = vmatpush1.msra.mxu0 %v213
    %1415 = vmatprep.subr.mxu0 0.0
    %1416 = vmatpush1.msra.mxu0 %v216
    %1417 = vmatprep.subr.mxu0 0.0
    %1418 = vmatpush1.msra.mxu0 %v219
    %1419 = vmatprep.subr.mxu0 0.0
    %1420 = vmatpush1.msra.mxu0 %v222
    %1421 = vmatprep.subr.mxu0 0.0
    %1422 = vmatpush1.msra.mxu0 %v225
    %1423 = vmatprep.subr.mxu0 0.0
    %1424 = vmatpush1.msra.mxu0 %v228
    %1425 = vmatprep.subr.mxu0 0.0
    %1426 = vmatpush1.msra.mxu0 %v231
    %1427 = vmatprep.subr.mxu0 0.0
    %1428 = vmatpush1.msra.mxu0 %v234
    %1429 = vmatprep.subr.mxu0 0.0
    %1430 = vmatpush1.msra.mxu0 %v237
    %1431 = vmatprep.subr.mxu0 0.0
    %1432 = vmatpush1.msra.mxu0 0.0
    %1433 = vmatprep.subr.mxu0 0.0
    %1434 = vmatpush1.msra.mxu0 0.0
    %1435 = vmatprep.subr.mxu0 0.0
    %1436 = vmatpush1.msra.mxu0 0.0
    %1437 = vmatprep.subr.mxu0 0.0
    %1438 = vmatpush1.msra.mxu0 0.0
    %1439 = vmatprep.subr.mxu0 0.0
    %1440 = vmatpush1.msra.mxu0 0.0
    %1441 = vmatprep.subr.mxu0 0.0
    %1442 = vmatpush1.msra.mxu0 0.0
    %1443 = vmatprep.subr.mxu0 0.0
    %1444 = vmatpush1.msra.mxu0 0.0
    %1445 = vmatprep.subr.mxu0 0.0
    %1446 = vmatpush1.msra.mxu0 0.0
    %1447 = vmatprep.subr.mxu0 0.0
    %1448 = vmatpush1.msra.mxu0 0.0
    %1449 = vmatprep.subr.mxu0 0.0
    %1450 = vmatpush1.msra.mxu0 0.0
    %1451 = vmatprep.subr.mxu0 0.0
    %1452 = vmatpush1.msra.mxu0 0.0
    %1453 = vmatprep.subr.mxu0 0.0
    %1454 = vmatpush1.msra.mxu0 0.0
    %1455 = vmatprep.subr.mxu0 0.0
    %1456 = vmatpush1.msra.mxu0 0.0
    %1457 = vmatprep.subr.mxu0 0.0
    %1458 = vmatpush1.msra.mxu0 0.0
    %1459 = vmatprep.subr.mxu0 0.0
    %1460 = vmatpush1.msra.mxu0 0.0
    %1461 = vmatprep.subr.mxu0 0.0
    %1462 = vmatpush1.msra.mxu0 0.0
    %1463 = vmatprep.mubr.f32.mxu0 0.0
    %1464 = vmatmul.mubr.f32.gmra.mrb[0].mxu0 %v1083
    %v1465 = vpop.f32.mrb[0].mxu0
    %v1466 = vadd.f32 %v512, %v1465
    %v1467 = vpop.f32.mrb[0].mxu0
    %1468 = vdwg.mxu0
    %v1469 = vadd.f32 %v1325, %v1395
    %v1470 = vxor.u32 %v1469, 2147483648
    %v1471 = vmul.f32 %v1470, 1.442695
    %v1472 = vpow.pop %v1471
    %v1473 = vadd.f32 %v1472, 1.0
    %v1474 = vrcp.pop %v1473
    %v1475 = vmul.f32 1.0, %v1474
    %v1476 = vadd.f32 %v1326, %v1397
    %v1477 = vxor.u32 %v1476, 2147483648
    %v1478 = vmul.f32 %v1477, 1.442695
    %v1479 = vpow.pop %v1478
    %v1480 = vadd.f32 %v1479, 1.0
    %v1481 = vrcp.pop %v1480
    %v1482 = vmul.f32 1.0, %v1481
    %v1483 = vmul.f32 %v1475, %v1466
    %v1484 = vadd.f32 %v1327, %v1483
    %v1485 = vtanh.pop %v1484
    %v1486 = vsub.f32 1.0, %v1482
    %v1487 = vmul.f32 %v1486, %v1485
    %v1488 = vmul.f32 %v1482, %v1083
    %v1489 = vadd.f32 %v1487, %v1488
    %v1490 = vadd.f32 %v1489, %v35
    %v1491 = vadd.f32 %v76, %v35
    %vm1492 = vcmask 253952
    %v1493 = vsel %vm1492, %v1490, 0.0
    %1494 = vadd.xlane.f32.xlu0 %v1493
    %v1495 = vpop.xlane.xlu0 %1494
    %v1496 = vrot.slane %v1495, 4
    %v1497 = vadd.f32 %v1495, %v1496
    %v1498 = vrot.slane %v1497, 2
    %v1499 = vadd.f32 %v1497, %v1498
    %v1500 = vrot.slane %v1499, 1
    %v1501 = vadd.f32 %v1499, %v1500
    %s1502 = vtos %v1501
    %v1503 = vrcp.pop 32.0
    %s1504 = vtos %v1503
    %s1505 = smul.f32 %s1502, %s1504
    %v1506 = vstv %s1505
    %v1507 = vsub.f32 %v1490, %v1506
    %v1508 = vmul.f32 %v1507, %v1507
    %v1509 = vsel %vm1492, %v1508, 0.0
    %1510 = vadd.xlane.f32.xlu0 %v1509
    %v1511 = vpop.xlane.xlu0 %1510
    %v1512 = vrot.slane %v1511, 4
    %v1513 = vadd.f32 %v1511, %v1512
    %v1514 = vrot.slane %v1513, 2
    %v1515 = vadd.f32 %v1513, %v1514
    %v1516 = vrot.slane %v1515, 1
    %v1517 = vadd.f32 %v1515, %v1516
    %s1518 = vtos %v1517
    %v1519 = vrcp.pop 31.0
    %s1520 = vtos %v1519
    %s1521 = smul.f32 %s1518, %s1520
    %s1522 = smul.f32 %s1521, 0.2804888
    %s1523 = smax.f32 %s1522, 1e-12
    %1524 = vxpose.xlu0.b32.start [1/16] %v1490, 128
    %1525 = vxpose.xlu0.b32.cont [2/16] 0.0, 128
    %1526 = vxpose.xlu0.b32.cont [3/16] 0.0, 128
    %1527 = vxpose.xlu0.b32.cont [4/16] 0.0, 128
    %1528 = vxpose.xlu0.b32.cont [5/16] 0.0, 128
    %1529 = vxpose.xlu0.b32.cont [6/16] 0.0, 128
    %1530 = vxpose.xlu0.b32.cont [7/16] 0.0, 128
    %1531 = vxpose.xlu0.b32.cont [8/16] 0.0, 128
    %1532 = vxpose.xlu0.b32.cont [9/16] 0.0, 128
    %1533 = vxpose.xlu0.b32.cont [10/16] 0.0, 128
    %1534 = vxpose.xlu0.b32.cont [11/16] 0.0, 128
    %1535 = vxpose.xlu0.b32.cont [12/16] 0.0, 128
    %1536 = vxpose.xlu0.b32.cont [13/16] 0.0, 128
    %1537 = vxpose.xlu0.b32.cont [14/16] 0.0, 128
    %1538 = vxpose.xlu0.b32.cont [15/16] 0.0, 128
    %1539 = vxpose.xlu0.b32.end [16/16] 0.0, 128
    %v1540 = vpop.trf.xlu0
    %v1541 = vpop.trf.xlu0
    %v1542 = vpop.trf.xlu0
    %v1543 = vpop.trf.xlu0
    %v1544 = vpop.trf.xlu0
    %v1545 = vpop.trf.xlu0
    %v1546 = vpop.trf.xlu0
    %v1547 = vpop.trf.xlu0
    %v1548 = vpop.trf.xlu0
    %v1549 = vpop.trf.xlu0
    %v1550 = vpop.trf.xlu0
    %v1551 = vpop.trf.xlu0
    %v1552 = vpop.trf.xlu0
    %v1553 = vpop.trf.xlu0
    %v1554 = vpop.trf.xlu0
    %v1555 = vpop.trf.xlu0
    %1557 = vset.pattern.permute.xlu0 0
    %1558 = vperm.xlu0 %1557, %v1540
    %v1559 = vpop.permute.xlu0 %1558
    %1562 = vset.pattern.permute.xlu0 0
    %1563 = vperm.xlu0 %1562, %v1541
    %v1564 = vpop.permute.xlu0 %1563
    %1567 = vset.pattern.permute.xlu0 0
    %1568 = vperm.xlu0 %1567, %v1542
    %v1569 = vpop.permute.xlu0 %1568
    %1572 = vset.pattern.permute.xlu0 0
    %1573 = vperm.xlu0 %1572, %v1543
    %v1574 = vpop.permute.xlu0 %1573
    %v1576 = vlaneseq
    %v1577 = vshrl.u32 %v1576, 7
    %v1578 = vsub.s32 0, %v1577
    %v1579 = vrot.slane %v1490, %v1578
    %v1580 = vsub.f32 %v1559, %v1579
    %v1581 = vsub.f32 %v1564, %v1579
    %v1582 = vsub.f32 %v1569, %v1579
    %v1583 = vsub.f32 %v1574, %v1579
    %v1584 = vmul.f32 %v1580, -0.5
    %v1585 = vmul.f32 %v1581, -0.5
    %v1586 = vmul.f32 %v1582, -0.5
    %v1587 = vmul.f32 %v1583, -0.5
    %v1588 = vmul.f32 %v1584, %v1580
    %v1589 = vmul.f32 %v1585, %v1581
    %v1590 = vmul.f32 %v1586, %v1582
    %v1591 = vmul.f32 %v1587, %v1583
    %v1592 = vstv %s1523
    %v1593 = vrcp.pop %v1592
    %v1594 = vmul.f32 %v1588, %v1593
    %v1595 = vmul.f32 %v1589, %v1593
    %v1596 = vmul.f32 %v1590, %v1593
    %v1597 = vmul.f32 %v1591, %v1593
    %v1598 = vmul.f32 %v1594, 1.442695
    %v1599 = vpow.pop %v1598
    %v1600 = vmul.f32 %v1595, 1.442695
    %v1601 = vpow.pop %v1600
    %v1602 = vmul.f32 %v1596, 1.442695
    %v1603 = vpow.pop %v1602
    %v1604 = vmul.f32 %v1597, 1.442695
    %v1605 = vpow.pop %v1604
    %v1606 = vsel %vm37, %v1599, 0.0
    %1607 = vadd.xlane.f32.xlu0 %v1606
    %v1608 = vpop.xlane.xlu0 %1607
    %v1609 = vsel %vm37, %v1601, 0.0
    %1610 = vadd.xlane.f32.xlu0 %v1609
    %v1611 = vpop.xlane.xlu0 %1610
    %v1612 = vsel %vm37, %v1603, 0.0
    %1613 = vadd.xlane.f32.xlu0 %v1612
    %v1614 = vpop.xlane.xlu0 %1613
    %v1615 = vsel %vm37, %v1605, 0.0
    %1616 = vadd.xlane.f32.xlu0 %v1615
    %v1617 = vpop.xlane.xlu0 %1616
    %v1619 = vrot.slane %v1491, 1
    %v1621 = vsel %vm1492, %v1619, 0.0
    %1622 = vadd.xlane.f32.xlu0 %v1621
    %v1623 = vpop.xlane.xlu0 %1622
    %v1624 = vrot.slane %v1623, 4
    %v1625 = vadd.f32 %v1623, %v1624
    %v1626 = vrot.slane %v1625, 2
    %v1627 = vadd.f32 %v1625, %v1626
    %v1628 = vrot.slane %v1627, 1
    %v1629 = vadd.f32 %v1627, %v1628
    %s1630 = vtos %v1629
    %v1631 = vrcp.pop 32.0
    %s1632 = vtos %v1631
    %s1633 = smul.f32 %s1630, %s1632
    %v1634 = vstv %s1633
    %v1635 = vsub.f32 %v1491, %v1634
    %v1636 = vmul.f32 %v1635, %v1635
    %v1638 = vrot.slane %v1636, 1
    %v1640 = vsel %vm1492, %v1638, 0.0
    %1641 = vadd.xlane.f32.xlu0 %v1640
    %v1642 = vpop.xlane.xlu0 %1641
    %v1643 = vrot.slane %v1642, 4
    %v1644 = vadd.f32 %v1642, %v1643
    %v1645 = vrot.slane %v1644, 2
    %v1646 = vadd.f32 %v1644, %v1645
    %v1647 = vrot.slane %v1646, 1
    %v1648 = vadd.f32 %v1646, %v1647
    %s1649 = vtos %v1648
    %v1650 = vrcp.pop 31.0
    %s1651 = vtos %v1650
    %s1652 = smul.f32 %s1649, %s1651
    %s1653 = smul.f32 %s1652, 0.2804888
    %s1654 = smax.f32 %s1653, 1e-12
    %1655 = vxpose.xlu0.b32.start [1/16] %v1619, 128
    %1656 = vxpose.xlu0.b32.cont [2/16] 0.0, 128
    %1657 = vxpose.xlu0.b32.cont [3/16] 0.0, 128
    %1658 = vxpose.xlu0.b32.cont [4/16] 0.0, 128
    %1659 = vxpose.xlu0.b32.cont [5/16] 0.0, 128
    %1660 = vxpose.xlu0.b32.cont [6/16] 0.0, 128
    %1661 = vxpose.xlu0.b32.cont [7/16] 0.0, 128
    %1662 = vxpose.xlu0.b32.cont [8/16] 0.0, 128
    %1663 = vxpose.xlu0.b32.cont [9/16] 0.0, 128
    %1664 = vxpose.xlu0.b32.cont [10/16] 0.0, 128
    %1665 = vxpose.xlu0.b32.cont [11/16] 0.0, 128
    %1666 = vxpose.xlu0.b32.cont [12/16] 0.0, 128
    %1667 = vxpose.xlu0.b32.cont [13/16] 0.0, 128
    %1668 = vxpose.xlu0.b32.cont [14/16] 0.0, 128
    %1669 = vxpose.xlu0.b32.cont [15/16] 0.0, 128
    %1670 = vxpose.xlu0.b32.end [16/16] 0.0, 128
    %v1671 = vpop.trf.xlu0
    %v1672 = vpop.trf.xlu0
    %v1673 = vpop.trf.xlu0
    %v1674 = vpop.trf.xlu0
    %v1675 = vpop.trf.xlu0
    %v1676 = vpop.trf.xlu0
    %v1677 = vpop.trf.xlu0
    %v1678 = vpop.trf.xlu0
    %v1679 = vpop.trf.xlu0
    %v1680 = vpop.trf.xlu0
    %v1681 = vpop.trf.xlu0
    %v1682 = vpop.trf.xlu0
    %v1683 = vpop.trf.xlu0
    %v1684 = vpop.trf.xlu0
    %v1685 = vpop.trf.xlu0
    %v1686 = vpop.trf.xlu0
    %1688 = vset.pattern.permute.xlu0 0
    %1689 = vperm.xlu0 %1688, %v1671
    %v1690 = vpop.permute.xlu0 %1689
    %1693 = vset.pattern.permute.xlu0 0
    %1694 = vperm.xlu0 %1693, %v1672
    %v1695 = vpop.permute.xlu0 %1694
    %1698 = vset.pattern.permute.xlu0 0
    %1699 = vperm.xlu0 %1698, %v1673
    %v1700 = vpop.permute.xlu0 %1699
    %1703 = vset.pattern.permute.xlu0 0
    %1704 = vperm.xlu0 %1703, %v1674
    %v1705 = vpop.permute.xlu0 %1704
    %v1707 = vlaneseq
    %v1708 = vshrl.u32 %v1707, 7
    %v1709 = vsub.s32 1, %v1708
    %v1710 = vrot.slane %v1491, %v1709
    %v1711 = vsub.f32 %v1690, %v1710
    %v1712 = vsub.f32 %v1695, %v1710
    %v1713 = vsub.f32 %v1700, %v1710
    %v1714 = vsub.f32 %v1705, %v1710
    %v1715 = vmul.f32 %v1711, -0.5
    %v1716 = vmul.f32 %v1712, -0.5
    %v1717 = vmul.f32 %v1713, -0.5
    %v1718 = vmul.f32 %v1714, -0.5
    %v1719 = vmul.f32 %v1715, %v1711
    %v1720 = vmul.f32 %v1716, %v1712
    %v1721 = vmul.f32 %v1717, %v1713
    %v1722 = vmul.f32 %v1718, %v1714
    %v1723 = vstv %s1654
    %v1724 = vrcp.pop %v1723
    %v1725 = vmul.f32 %v1719, %v1724
    %v1726 = vmul.f32 %v1720, %v1724
    %v1727 = vmul.f32 %v1721, %v1724
    %v1728 = vmul.f32 %v1722, %v1724
    %v1729 = vmul.f32 %v1725, 1.442695
    %v1730 = vpow.pop %v1729
    %v1731 = vmul.f32 %v1726, 1.442695
    %v1732 = vpow.pop %v1731
    %v1733 = vmul.f32 %v1727, 1.442695
    %v1734 = vpow.pop %v1733
    %v1735 = vmul.f32 %v1728, 1.442695
    %v1736 = vpow.pop %v1735
    %v1737 = vsel %vm37, %v1730, 0.0
    %1738 = vadd.xlane.f32.xlu0 %v1737
    %v1739 = vpop.xlane.xlu0 %1738
    %v1740 = vsel %vm37, %v1732, 0.0
    %1741 = vadd.xlane.f32.xlu0 %v1740
    %v1742 = vpop.xlane.xlu0 %1741
    %v1743 = vsel %vm37, %v1734, 0.0
    %1744 = vadd.xlane.f32.xlu0 %v1743
    %v1745 = vpop.xlane.xlu0 %1744
    %v1746 = vsel %vm37, %v1736, 0.0
    %1747 = vadd.xlane.f32.xlu0 %v1746
    %v1748 = vpop.xlane.xlu0 %1747
    %vm1749 = vcmask 7168
    %v1750 = vsel %vm1749, %v1608, 0.0
    %v1751 = vsel %vm1749, %v1611, 0.0
    %v1752 = vadd.f32 %v1750, %v1751
    %v1753 = vsel %vm1749, %v1614, 0.0
    %v1754 = vadd.f32 %v1752, %v1753
    %v1755 = vsel %vm1749, %v1617, 0.0
    %v1756 = vadd.f32 %v1754, %v1755
    %1757 = vadd.xlane.f32.xlu0 %v1756
    %v1758 = vpop.xlane.xlu0 %1757
    %v1759 = vrot.slane %v1758, 4
    %v1760 = vadd.f32 %v1758, %v1759
    %v1761 = vrot.slane %v1760, 2
    %v1762 = vadd.f32 %v1760, %v1761
    %v1763 = vrot.slane %v1762, 1
    %v1764 = vadd.f32 %v1762, %v1763
    %s1765 = vtos %v1764
    %v1766 = vstv %s1765
    %v1767 = vrcp.pop %v1766
    %v1768 = vmul.f32 %v1608, %v1767
    %v1769 = vmul.f32 %v1611, %v1767
    %v1770 = vmul.f32 %v1614, %v1767
    %v1771 = vmul.f32 %v1617, %v1767
    %v1772 = vsel %vm1749, %v1739, 0.0
    %v1773 = vsel %vm1749, %v1742, 0.0
    %v1774 = vadd.f32 %v1772, %v1773
    %v1775 = vsel %vm1749, %v1745, 0.0
    %v1776 = vadd.f32 %v1774, %v1775
    %v1777 = vsel %vm1749, %v1748, 0.0
    %v1778 = vadd.f32 %v1776, %v1777
    %1779 = vadd.xlane.f32.xlu0 %v1778
    %v1780 = vpop.xlane.xlu0 %1779
    %v1781 = vrot.slane %v1780, 4
    %v1782 = vadd.f32 %v1780, %v1781
    %v1783 = vrot.slane %v1782, 2
    %v1784 = vadd.f32 %v1782, %v1783
    %v1785 = vrot.slane %v1784, 1
    %v1786 = vadd.f32 %v1784, %v1785
    %s1787 = vtos %v1786
    %v1788 = vstv %s1787
    %v1789 = vrcp.pop %v1788
    %v1790 = vmul.f32 %v1739, %v1789
    %v1791 = vmul.f32 %v1742, %v1789
    %v1792 = vmul.f32 %v1745, %v1789
    %v1793 = vmul.f32 %v1748, %v1789
    %v1794 = vrcp.pop %v1790
    %v1795 = vmul.f32 %v1768, %v1794
    %v1796 = vrcp.pop %v1791
    %v1797 = vmul.f32 %v1769, %v1796
    %v1798 = vrcp.pop %v1792
    %v1799 = vmul.f32 %v1770, %v1798
    %v1800 = vrcp.pop %v1793
    %v1801 = vmul.f32 %v1771, %v1800
    %v1802 = vlog2.pop %v1795
    %v1803 = vmul.f32 %v1802, 0.6931472
    %v1804 = vlog2.pop %v1797
    %v1805 = vmul.f32 %v1804, 0.6931472
    %v1806 = vlog2.pop %v1799
    %v1807 = vmul.f32 %v1806, 0.6931472
    %v1808 = vlog2.pop %v1801
    %v1809 = vmul.f32 %v1808, 0.6931472
    %v1810 = vmul.f32 %v1768, %v1803
    %v1811 = vmul.f32 %v1769, %v1805
    %v1812 = vmul.f32 %v1770, %v1807
    %v1813 = vmul.f32 %v1771, %v1809
    %v1814 = vsel %vm1749, %v1810, 0.0
    %v1815 = vsel %vm1749, %v1811, 0.0
    %v1816 = vadd.f32 %v1814, %v1815
    %v1817 = vsel %vm1749, %v1812, 0.0
    %v1818 = vadd.f32 %v1816, %v1817
    %v1819 = vsel %vm1749, %v1813, 0.0
    %v1820 = vadd.f32 %v1818, %v1819
    %1821 = vadd.xlane.f32.xlu0 %v1820
    %v1822 = vpop.xlane.xlu0 %1821
    %v1823 = vrot.slane %v1822, 4
    %v1824 = vadd.f32 %v1822, %v1823
    %v1825 = vrot.slane %v1824, 2
    %v1826 = vadd.f32 %v1824, %v1825
    %v1827 = vrot.slane %v1826, 1
    %v1828 = vadd.f32 %v1826, %v1827
    %s1829 = vtos %v1828
    %v1831 = vrot.slane %v35, 2
    %1832 = vrot.lane.b32.xlu0 %v1831, 32
    %v1833 = vpop.permute.xlu0 %1832
    %v1835 = vadd.f32 %v1489, %v1833
    %v1836 = vadd.f32 %v84, %v35
    %1838 = vrot.lane.b32.xlu0 %v1835, 96
    %v1839 = vpop.permute.xlu0 %1838
    %v1841 = vsel %vm1492, %v1839, 0.0
    %1842 = vadd.xlane.f32.xlu0 %v1841
    %v1843 = vpop.xlane.xlu0 %1842
    %v1844 = vrot.slane %v1843, 4
    %v1845 = vadd.f32 %v1843, %v1844
    %v1846 = vrot.slane %v1845, 2
    %v1847 = vadd.f32 %v1845, %v1846
    %v1848 = vrot.slane %v1847, 1
    %v1849 = vadd.f32 %v1847, %v1848
    %s1850 = vtos %v1849
    %v1851 = vrcp.pop 32.0
    %s1852 = vtos %v1851
    %s1853 = smul.f32 %s1850, %s1852
    %v1854 = vstv %s1853
    %v1855 = vsub.f32 %v1835, %v1854
    %v1856 = vmul.f32 %v1855, %v1855
    %1858 = vrot.lane.b32.xlu0 %v1856, 96
    %v1859 = vpop.permute.xlu0 %1858
    %v1861 = vsel %vm1492, %v1859, 0.0
    %1862 = vadd.xlane.f32.xlu0 %v1861
    %v1863 = vpop.xlane.xlu0 %1862
    %v1864 = vrot.slane %v1863, 4
    %v1865 = vadd.f32 %v1863, %v1864
    %v1866 = vrot.slane %v1865, 2
    %v1867 = vadd.f32 %v1865, %v1866
    %v1868 = vrot.slane %v1867, 1
    %v1869 = vadd.f32 %v1867, %v1868
    %s1870 = vtos %v1869
    %v1871 = vrcp.pop 31.0
    %s1872 = vtos %v1871
    %s1873 = smul.f32 %s1870, %s1872
    %s1874 = smul.f32 %s1873, 0.2804888
    %s1875 = smax.f32 %s1874, 1e-12
    %1876 = vxpose.xlu0.b32.start [1/16] %v1839, 128
    %1877 = vxpose.xlu0.b32.cont [2/16] 0.0, 128
    %1878 = vxpose.xlu0.b32.cont [3/16] 0.0, 128
    %1879 = vxpose.xlu0.b32.cont [4/16] 0.0, 128
    %1880 = vxpose.xlu0.b32.cont [5/16] 0.0, 128
    %1881 = vxpose.xlu0.b32.cont [6/16] 0.0, 128
    %1882 = vxpose.xlu0.b32.cont [7/16] 0.0, 128
    %1883 = vxpose.xlu0.b32.cont [8/16] 0.0, 128
    %1884 = vxpose.xlu0.b32.cont [9/16] 0.0, 128
    %1885 = vxpose.xlu0.b32.cont [10/16] 0.0, 128
    %1886 = vxpose.xlu0.b32.cont [11/16] 0.0, 128
    %1887 = vxpose.xlu0.b32.cont [12/16] 0.0, 128
    %1888 = vxpose.xlu0.b32.cont [13/16] 0.0, 128
    %1889 = vxpose.xlu0.b32.cont [14/16] 0.0, 128
    %1890 = vxpose.xlu0.b32.cont [15/16] 0.0, 128
    %1891 = vxpose.xlu0.b32.end [16/16] 0.0, 128
    %v1892 = vpop.trf.xlu0
    %v1893 = vpop.trf.xlu0
    %v1894 = vpop.trf.xlu0
    %v1895 = vpop.trf.xlu0
    %v1896 = vpop.trf.xlu0
    %v1897 = vpop.trf.xlu0
    %v1898 = vpop.trf.xlu0
    %v1899 = vpop.trf.xlu0
    %v1900 = vpop.trf.xlu0
    %v1901 = vpop.trf.xlu0
    %v1902 = vpop.trf.xlu0
    %v1903 = vpop.trf.xlu0
    %v1904 = vpop.trf.xlu0
    %v1905 = vpop.trf.xlu0
    %v1906 = vpop.trf.xlu0
    %v1907 = vpop.trf.xlu0
    %1909 = vset.pattern.permute.xlu0 0
    %1910 = vperm.xlu0 %1909, %v1892
    %v1911 = vpop.permute.xlu0 %1910
    %1914 = vset.pattern.permute.xlu0 0
    %1915 = vperm.xlu0 %1914, %v1893
    %v1916 = vpop.permute.xlu0 %1915
    %1919 = vset.pattern.permute.xlu0 0
    %1920 = vperm.xlu0 %1919, %v1894
    %v1921 = vpop.permute.xlu0 %1920
    %1924 = vset.pattern.permute.xlu0 0
    %1925 = vperm.xlu0 %1924, %v1895
    %v1926 = vpop.permute.xlu0 %1925
    %v1928 = vlaneseq
    %v1929 = vshrl.u32 %v1928, 7
    %v1930 = vsub.s32 0, %v1929
    %v1931 = vrot.slane %v1835, %v1930
    %v1932 = vsub.f32 %v1911, %v1931
    %v1933 = vsub.f32 %v1916, %v1931
    %v1934 = vsub.f32 %v1921, %v1931
    %v1935 = vsub.f32 %v1926, %v1931
    %v1936 = vmul.f32 %v1932, -0.5
    %v1937 = vmul.f32 %v1933, -0.5
    %v1938 = vmul.f32 %v1934, -0.5
    %v1939 = vmul.f32 %v1935, -0.5
    %v1940 = vmul.f32 %v1936, %v1932
    %v1941 = vmul.f32 %v1937, %v1933
    %v1942 = vmul.f32 %v1938, %v1934
    %v1943 = vmul.f32 %v1939, %v1935
    %v1944 = vstv %s1875
    %v1945 = vrcp.pop %v1944
    %v1946 = vmul.f32 %v1940, %v1945
    %v1947 = vmul.f32 %v1941, %v1945
    %v1948 = vmul.f32 %v1942, %v1945
    %v1949 = vmul.f32 %v1943, %v1945
    %v1950 = vmul.f32 %v1946, 1.442695
    %v1951 = vpow.pop %v1950
    %v1952 = vmul.f32 %v1947, 1.442695
    %v1953 = vpow.pop %v1952
    %v1954 = vmul.f32 %v1948, 1.442695
    %v1955 = vpow.pop %v1954
    %v1956 = vmul.f32 %v1949, 1.442695
    %v1957 = vpow.pop %v1956
    %1962 = vrot.lane.b32.xlu0 %v1951, 96
    %v1963 = vpop.permute.xlu0 %1962
    %1964 = vrot.lane.b32.xlu0 %v1953, 96
    %v1965 = vpop.permute.xlu0 %1964
    %1966 = vrot.lane.b32.xlu0 %v1955, 96
    %v1967 = vpop.permute.xlu0 %1966
    %1968 = vrot.lane.b32.xlu0 %v1957, 96
    %v1969 = vpop.permute.xlu0 %1968
    %v1974 = vsel %vm37, %v1963, 0.0
    %1975 = vadd.xlane.f32.xlu0 %v1974
    %v1976 = vpop.xlane.xlu0 %1975
    %v1977 = vsel %vm37, %v1965, 0.0
    %1978 = vadd.xlane.f32.xlu0 %v1977
    %v1979 = vpop.xlane.xlu0 %1978
    %v1980 = vsel %vm37, %v1967, 0.0
    %1981 = vadd.xlane.f32.xlu0 %v1980
    %v1982 = vpop.xlane.xlu0 %1981
    %v1983 = vsel %vm37, %v1969, 0.0
    %1984 = vadd.xlane.f32.xlu0 %v1983
    %v1985 = vpop.xlane.xlu0 %1984
    %v1987 = vrot.slane %v1836, 3
    %v1989 = vsel %vm1492, %v1987, 0.0
    %1990 = vadd.xlane.f32.xlu0 %v1989
    %v1991 = vpop.xlane.xlu0 %1990
    %v1992 = vrot.slane %v1991, 4
    %v1993 = vadd.f32 %v1991, %v1992
    %v1994 = vrot.slane %v1993, 2
    %v1995 = vadd.f32 %v1993, %v1994
    %v1996 = vrot.slane %v1995, 1
    %v1997 = vadd.f32 %v1995, %v1996
    %s1998 = vtos %v1997
    %v1999 = vrcp.pop 32.0
    %s2000 = vtos %v1999
    %s2001 = smul.f32 %s1998, %s2000
    %v2002 = vstv %s2001
    %v2003 = vsub.f32 %v1836, %v2002
    %v2004 = vmul.f32 %v2003, %v2003
    %v2006 = vrot.slane %v2004, 3
    %v2008 = vsel %vm1492, %v2006, 0.0
    %2009 = vadd.xlane.f32.xlu0 %v2008
    %v2010 = vpop.xlane.xlu0 %2009
    %v2011 = vrot.slane %v2010, 4
    %v2012 = vadd.f32 %v2010, %v2011
    %v2013 = vrot.slane %v2012, 2
    %v2014 = vadd.f32 %v2012, %v2013
    %v2015 = vrot.slane %v2014, 1
    %v2016 = vadd.f32 %v2014, %v2015
    %s2017 = vtos %v2016
    %v2018 = vrcp.pop 31.0
    %s2019 = vtos %v2018
    %s2020 = smul.f32 %s2017, %s2019
    %s2021 = smul.f32 %s2020, 0.2804888
    %s2022 = smax.f32 %s2021, 1e-12
    %2023 = vxpose.xlu0.b32.start [1/16] %v1987, 128
    %2024 = vxpose.xlu0.b32.cont [2/16] 0.0, 128
    %2025 = vxpose.xlu0.b32.cont [3/16] 0.0, 128
    %2026 = vxpose.xlu0.b32.cont [4/16] 0.0, 128
    %2027 = vxpose.xlu0.b32.cont [5/16] 0.0, 128
    %2028 = vxpose.xlu0.b32.cont [6/16] 0.0, 128
    %2029 = vxpose.xlu0.b32.cont [7/16] 0.0, 128
    %2030 = vxpose.xlu0.b32.cont [8/16] 0.0, 128
    %2031 = vxpose.xlu0.b32.cont [9/16] 0.0, 128
    %2032 = vxpose.xlu0.b32.cont [10/16] 0.0, 128
    %2033 = vxpose.xlu0.b32.cont [11/16] 0.0, 128
    %2034 = vxpose.xlu0.b32.cont [12/16] 0.0, 128
    %2035 = vxpose.xlu0.b32.cont [13/16] 0.0, 128
    %2036 = vxpose.xlu0.b32.cont [14/16] 0.0, 128
    %2037 = vxpose.xlu0.b32.cont [15/16] 0.0, 128
    %2038 = vxpose.xlu0.b32.end [16/16] 0.0, 128
    %v2039 = vpop.trf.xlu0
    %v2040 = vpop.trf.xlu0
    %v2041 = vpop.trf.xlu0
    %v2042 = vpop.trf.xlu0
    %v2043 = vpop.trf.xlu0
    %v2044 = vpop.trf.xlu0
    %v2045 = vpop.trf.xlu0
    %v2046 = vpop.trf.xlu0
    %v2047 = vpop.trf.xlu0
    %v2048 = vpop.trf.xlu0
    %v2049 = vpop.trf.xlu0
    %v2050 = vpop.trf.xlu0
    %v2051 = vpop.trf.xlu0
    %v2052 = vpop.trf.xlu0
    %v2053 = vpop.trf.xlu0
    %v2054 = vpop.trf.xlu0
    %2056 = vset.pattern.permute.xlu0 0
    %2057 = vperm.xlu0 %2056, %v2039
    %v2058 = vpop.permute.xlu0 %2057
    %2061 = vset.pattern.permute.xlu0 0
    %2062 = vperm.xlu0 %2061, %v2040
    %v2063 = vpop.permute.xlu0 %2062
    %2066 = vset.pattern.permute.xlu0 0
    %2067 = vperm.xlu0 %2066, %v2041
    %v2068 = vpop.permute.xlu0 %2067
    %2071 = vset.pattern.permute.xlu0 0
    %2072 = vperm.xlu0 %2071, %v2042
    %v2073 = vpop.permute.xlu0 %2072
    %v2075 = vlaneseq
    %v2076 = vshrl.u32 %v2075, 7
    %v2077 = vsub.s32 3, %v2076
    %v2078 = vrot.slane %v1836, %v2077
    %v2079 = vsub.f32 %v2058, %v2078
    %v2080 = vsub.f32 %v2063, %v2078
    %v2081 = vsub.f32 %v2068, %v2078
    %v2082 = vsub.f32 %v2073, %v2078
    %v2083 = vmul.f32 %v2079, -0.5
    %v2084 = vmul.f32 %v2080, -0.5
    %v2085 = vmul.f32 %v2081, -0.5
    %v2086 = vmul.f32 %v2082, -0.5
    %v2087 = vmul.f32 %v2083, %v2079
    %v2088 = vmul.f32 %v2084, %v2080
    %v2089 = vmul.f32 %v2085, %v2081
    %v2090 = vmul.f32 %v2086, %v2082
    %v2091 = vstv %s2022
    %v2092 = vrcp.pop %v2091
    %v2093 = vmul.f32 %v2087, %v2092
    %v2094 = vmul.f32 %v2088, %v2092
    %v2095 = vmul.f32 %v2089, %v2092
    %v2096 = vmul.f32 %v2090, %v2092
    %v2097 = vmul.f32 %v2093, 1.442695
    %v2098 = vpow.pop %v2097
    %v2099 = vmul.f32 %v2094, 1.442695
    %v2100 = vpow.pop %v2099
    %v2101 = vmul.f32 %v2095, 1.442695
    %v2102 = vpow.pop %v2101
    %v2103 = vmul.f32 %v2096, 1.442695
    %v2104 = vpow.pop %v2103
    %v2105 = vsel %vm37, %v2098, 0.0
    %2106 = vadd.xlane.f32.xlu0 %v2105
    %v2107 = vpop.xlane.xlu0 %2106
    %v2108 = vsel %vm37, %v2100, 0.0
    %2109 = vadd.xlane.f32.xlu0 %v2108
    %v2110 = vpop.xlane.xlu0 %2109
    %v2111 = vsel %vm37, %v2102, 0.0
    %2112 = vadd.xlane.f32.xlu0 %v2111
    %v2113 = vpop.xlane.xlu0 %2112
    %v2114 = vsel %vm37, %v2104, 0.0
    %2115 = vadd.xlane.f32.xlu0 %v2114
    %v2116 = vpop.xlane.xlu0 %2115
    %v2117 = vsel %vm1749, %v1976, 0.0
    %v2118 = vsel %vm1749, %v1979, 0.0
    %v2119 = vadd.f32 %v2117, %v2118
    %v2120 = vsel %vm1749, %v1982, 0.0
    %v2121 = vadd.f32 %v2119, %v2120
    %v2122 = vsel %vm1749, %v1985, 0.0
    %v2123 = vadd.f32 %v2121, %v2122
    %2124 = vadd.xlane.f32.xlu0 %v2123
    %v2125 = vpop.xlane.xlu0 %2124
    %v2126 = vrot.slane %v2125, 4
    %v2127 = vadd.f32 %v2125, %v2126
    %v2128 = vrot.slane %v2127, 2
    %v2129 = vadd.f32 %v2127, %v2128
    %v2130 = vrot.slane %v2129, 1
    %v2131 = vadd.f32 %v2129, %v2130
    %s2132 = vtos %v2131
    %v2133 = vstv %s2132
    %v2134 = vrcp.pop %v2133
    %v2135 = vmul.f32 %v1976, %v2134
    %v2136 = vmul.f32 %v1979, %v2134
    %v2137 = vmul.f32 %v1982, %v2134
    %v2138 = vmul.f32 %v1985, %v2134
    %v2139 = vsel %vm1749, %v2107, 0.0
    %v2140 = vsel %vm1749, %v2110, 0.0
    %v2141 = vadd.f32 %v2139, %v2140
    %v2142 = vsel %vm1749, %v2113, 0.0
    %v2143 = vadd.f32 %v2141, %v2142
    %v2144 = vsel %vm1749, %v2116, 0.0
    %v2145 = vadd.f32 %v2143, %v2144
    %2146 = vadd.xlane.f32.xlu0 %v2145
    %v2147 = vpop.xlane.xlu0 %2146
    %v2148 = vrot.slane %v2147, 4
    %v2149 = vadd.f32 %v2147, %v2148
    %v2150 = vrot.slane %v2149, 2
    %v2151 = vadd.f32 %v2149, %v2150
    %v2152 = vrot.slane %v2151, 1
    %v2153 = vadd.f32 %v2151, %v2152
    %s2154 = vtos %v2153
    %v2155 = vstv %s2154
    %v2156 = vrcp.pop %v2155
    %v2157 = vmul.f32 %v2107, %v2156
    %v2158 = vmul.f32 %v2110, %v2156
    %v2159 = vmul.f32 %v2113, %v2156
    %v2160 = vmul.f32 %v2116, %v2156
    %v2161 = vrcp.pop %v2157
    %v2162 = vmul.f32 %v2135, %v2161
    %v2163 = vrcp.pop %v2158
    %v2164 = vmul.f32 %v2136, %v2163
    %v2165 = vrcp.pop %v2159
    %v2166 = vmul.f32 %v2137, %v2165
    %v2167 = vrcp.pop %v2160
    %v2168 = vmul.f32 %v2138, %v2167
    %v2169 = vlog2.pop %v2162
    %v2170 = vmul.f32 %v2169, 0.6931472
    %v2171 = vlog2.pop %v2164
    %v2172 = vmul.f32 %v2171, 0.6931472
    %v2173 = vlog2.pop %v2166
    %v2174 = vmul.f32 %v2173, 0.6931472
    %v2175 = vlog2.pop %v2168
    %v2176 = vmul.f32 %v2175, 0.6931472
    %v2177 = vmul.f32 %v2135, %v2170
    %v2178 = vmul.f32 %v2136, %v2172
    %v2179 = vmul.f32 %v2137, %v2174
    %v2180 = vmul.f32 %v2138, %v2176
    %v2181 = vsel %vm1749, %v2177, 0.0
    %v2182 = vsel %vm1749, %v2178, 0.0
    %v2183 = vadd.f32 %v2181, %v2182
    %v2184 = vsel %vm1749, %v2179, 0.0
    %v2185 = vadd.f32 %v2183, %v2184
    %v2186 = vsel %vm1749, %v2180, 0.0
    %v2187 = vadd.f32 %v2185, %v2186
    %2188 = vadd.xlane.f32.xlu0 %v2187
    %v2189 = vpop.xlane.xlu0 %2188
    %v2190 = vrot.slane %v2189, 4
    %v2191 = vadd.f32 %v2189, %v2190
    %v2192 = vrot.slane %v2191, 2
    %v2193 = vadd.f32 %v2191, %v2192
    %v2194 = vrot.slane %v2193, 1
    %v2195 = vadd.f32 %v2193, %v2194
    %s2196 = vtos %v2195
    %v2197 = vrot.slane %v35, 4
    %2198 = vrot.lane.b32.xlu0 %v2197, 64
    %v2199 = vpop.permute.xlu0 %2198
    %v2201 = vadd.f32 %v1489, %v2199
    %v2202 = vadd.f32 %v92, %v35
    %2204 = vrot.lane.b32.xlu0 %v2201, 64
    %v2205 = vpop.permute.xlu0 %2204
    %v2207 = vsel %vm1492, %v2205, 0.0
    %2208 = vadd.xlane.f32.xlu0 %v2207
    %v2209 = vpop.xlane.xlu0 %2208
    %v2210 = vrot.slane %v2209, 4
    %v2211 = vadd.f32 %v2209, %v2210
    %v2212 = vrot.slane %v2211, 2
    %v2213 = vadd.f32 %v2211, %v2212
    %v2214 = vrot.slane %v2213, 1
    %v2215 = vadd.f32 %v2213, %v2214
    %s2216 = vtos %v2215
    %v2217 = vrcp.pop 32.0
    %s2218 = vtos %v2217
    %s2219 = smul.f32 %s2216, %s2218
    %v2220 = vstv %s2219
    %v2221 = vsub.f32 %v2201, %v2220
    %v2222 = vmul.f32 %v2221, %v2221
    %2224 = vrot.lane.b32.xlu0 %v2222, 64
    %v2225 = vpop.permute.xlu0 %2224
    %v2227 = vsel %vm1492, %v2225, 0.0
    %2228 = vadd.xlane.f32.xlu0 %v2227
    %v2229 = vpop.xlane.xlu0 %2228
    %v2230 = vrot.slane %v2229, 4
    %v2231 = vadd.f32 %v2229, %v2230
    %v2232 = vrot.slane %v2231, 2
    %v2233 = vadd.f32 %v2231, %v2232
    %v2234 = vrot.slane %v2233, 1
    %v2235 = vadd.f32 %v2233, %v2234
    %s2236 = vtos %v2235
    %v2237 = vrcp.pop 31.0
    %s2238 = vtos %v2237
    %s2239 = smul.f32 %s2236, %s2238
    %s2240 = smul.f32 %s2239, 0.2804888
    %s2241 = smax.f32 %s2240, 1e-12
    %2242 = vxpose.xlu0.b32.start [1/16] %v2205, 128
    %2243 = vxpose.xlu0.b32.cont [2/16] 0.0, 128
    %2244 = vxpose.xlu0.b32.cont [3/16] 0.0, 128
    %2245 = vxpose.xlu0.b32.cont [4/16] 0.0, 128
    %2246 = vxpose.xlu0.b32.cont [5/16] 0.0, 128
    %2247 = vxpose.xlu0.b32.cont [6/16] 0.0, 128
    %2248 = vxpose.xlu0.b32.cont [7/16] 0.0, 128
    %2249 = vxpose.xlu0.b32.cont [8/16] 0.0, 128
    %2250 = vxpose.xlu0.b32.cont [9/16] 0.0, 128
    %2251 = vxpose.xlu0.b32.cont [10/16] 0.0, 128
    %2252 = vxpose.xlu0.b32.cont [11/16] 0.0, 128
    %2253 = vxpose.xlu0.b32.cont [12/16] 0.0, 128
    %2254 = vxpose.xlu0.b32.cont [13/16] 0.0, 128
    %2255 = vxpose.xlu0.b32.cont [14/16] 0.0, 128
    %2256 = vxpose.xlu0.b32.cont [15/16] 0.0, 128
    %2257 = vxpose.xlu0.b32.end [16/16] 0.0, 128
    %v2258 = vpop.trf.xlu0
    %v2259 = vpop.trf.xlu0
    %v2260 = vpop.trf.xlu0
    %v2261 = vpop.trf.xlu0
    %v2262 = vpop.trf.xlu0
    %v2263 = vpop.trf.xlu0
    %v2264 = vpop.trf.xlu0
    %v2265 = vpop.trf.xlu0
    %v2266 = vpop.trf.xlu0
    %v2267 = vpop.trf.xlu0
    %v2268 = vpop.trf.xlu0
    %v2269 = vpop.trf.xlu0
    %v2270 = vpop.trf.xlu0
    %v2271 = vpop.trf.xlu0
    %v2272 = vpop.trf.xlu0
    %v2273 = vpop.trf.xlu0
    %2275 = vset.pattern.permute.xlu0 0
    %2276 = vperm.xlu0 %2275, %v2258
    %v2277 = vpop.permute.xlu0 %2276
    %2280 = vset.pattern.permute.xlu0 0
    %2281 = vperm.xlu0 %2280, %v2259
    %v2282 = vpop.permute.xlu0 %2281
    %2285 = vset.pattern.permute.xlu0 0
    %2286 = vperm.xlu0 %2285, %v2260
    %v2287 = vpop.permute.xlu0 %2286
    %2290 = vset.pattern.permute.xlu0 0
    %2291 = vperm.xlu0 %2290, %v2261
    %v2292 = vpop.permute.xlu0 %2291
    %v2294 = vlaneseq
    %v2295 = vshrl.u32 %v2294, 7
    %v2296 = vsub.s32 0, %v2295
    %v2297 = vrot.slane %v2201, %v2296
    %v2298 = vsub.f32 %v2277, %v2297
    %v2299 = vsub.f32 %v2282, %v2297
    %v2300 = vsub.f32 %v2287, %v2297
    %v2301 = vsub.f32 %v2292, %v2297
    %v2302 = vmul.f32 %v2298, -0.5
    %v2303 = vmul.f32 %v2299, -0.5
    %v2304 = vmul.f32 %v2300, -0.5
    %v2305 = vmul.f32 %v2301, -0.5
    %v2306 = vmul.f32 %v2302, %v2298
    %v2307 = vmul.f32 %v2303, %v2299
    %v2308 = vmul.f32 %v2304, %v2300
    %v2309 = vmul.f32 %v2305, %v2301
    %v2310 = vstv %s2241
    %v2311 = vrcp.pop %v2310
    %v2312 = vmul.f32 %v2306, %v2311
    %v2313 = vmul.f32 %v2307, %v2311
    %v2314 = vmul.f32 %v2308, %v2311
    %v2315 = vmul.f32 %v2309, %v2311
    %v2316 = vmul.f32 %v2312, 1.442695
    %v2317 = vpow.pop %v2316
    %v2318 = vmul.f32 %v2313, 1.442695
    %v2319 = vpow.pop %v2318
    %v2320 = vmul.f32 %v2314, 1.442695
    %v2321 = vpow.pop %v2320
    %v2322 = vmul.f32 %v2315, 1.442695
    %v2323 = vpow.pop %v2322
    %2328 = vrot.lane.b32.xlu0 %v2317, 64
    %v2329 = vpop.permute.xlu0 %2328
    %2330 = vrot.lane.b32.xlu0 %v2319, 64
    %v2331 = vpop.permute.xlu0 %2330
    %2332 = vrot.lane.b32.xlu0 %v2321, 64
    %v2333 = vpop.permute.xlu0 %2332
    %2334 = vrot.lane.b32.xlu0 %v2323, 64
    %v2335 = vpop.permute.xlu0 %2334
    %v2340 = vsel %vm37, %v2329, 0.0
    %2341 = vadd.xlane.f32.xlu0 %v2340
    %v2342 = vpop.xlane.xlu0 %2341
    %v2343 = vsel %vm37, %v2331, 0.0
    %2344 = vadd.xlane.f32.xlu0 %v2343
    %v2345 = vpop.xlane.xlu0 %2344
    %v2346 = vsel %vm37, %v2333, 0.0
    %2347 = vadd.xlane.f32.xlu0 %v2346
    %v2348 = vpop.xlane.xlu0 %2347
    %v2349 = vsel %vm37, %v2335, 0.0
    %2350 = vadd.xlane.f32.xlu0 %v2349
    %v2351 = vpop.xlane.xlu0 %2350
    %v2353 = vrot.slane %v2202, 5
    %v2355 = vsel %vm1492, %v2353, 0.0
    %2356 = vadd.xlane.f32.xlu0 %v2355
    %v2357 = vpop.xlane.xlu0 %2356
    %v2358 = vrot.slane %v2357, 4
    %v2359 = vadd.f32 %v2357, %v2358
    %v2360 = vrot.slane %v2359, 2
    %v2361 = vadd.f32 %v2359, %v2360
    %v2362 = vrot.slane %v2361, 1
    %v2363 = vadd.f32 %v2361, %v2362
    %s2364 = vtos %v2363
    %v2365 = vrcp.pop 32.0
    %s2366 = vtos %v2365
    %s2367 = smul.f32 %s2364, %s2366
    %v2368 = vstv %s2367
    %v2369 = vsub.f32 %v2202, %v2368
    %v2370 = vmul.f32 %v2369, %v2369
    %v2372 = vrot.slane %v2370, 5
    %v2374 = vsel %vm1492, %v2372, 0.0
    %2375 = vadd.xlane.f32.xlu0 %v2374
    %v2376 = vpop.xlane.xlu0 %2375
    %v2377 = vrot.slane %v2376, 4
    %v2378 = vadd.f32 %v2376, %v2377
    %v2379 = vrot.slane %v2378, 2
    %v2380 = vadd.f32 %v2378, %v2379
    %v2381 = vrot.slane %v2380, 1
    %v2382 = vadd.f32 %v2380, %v2381
    %s2383 = vtos %v2382
    %v2384 = vrcp.pop 31.0
    %s2385 = vtos %v2384
    %s2386 = smul.f32 %s2383, %s2385
    %s2387 = smul.f32 %s2386, 0.2804888
    %s2388 = smax.f32 %s2387, 1e-12
    %2389 = vxpose.xlu0.b32.start [1/16] %v2353, 128
    %2390 = vxpose.xlu0.b32.cont [2/16] 0.0, 128
    %2391 = vxpose.xlu0.b32.cont [3/16] 0.0, 128
    %2392 = vxpose.xlu0.b32.cont [4/16] 0.0, 128
    %2393 = vxpose.xlu0.b32.cont [5/16] 0.0, 128
    %2394 = vxpose.xlu0.b32.cont [6/16] 0.0, 128
    %2395 = vxpose.xlu0.b32.cont [7/16] 0.0, 128
    %2396 = vxpose.xlu0.b32.cont [8/16] 0.0, 128
    %2397 = vxpose.xlu0.b32.cont [9/16] 0.0, 128
    %2398 = vxpose.xlu0.b32.cont [10/16] 0.0, 128
    %2399 = vxpose.xlu0.b32.cont [11/16] 0.0, 128
    %2400 = vxpose.xlu0.b32.cont [12/16] 0.0, 128
    %2401 = vxpose.xlu0.b32.cont [13/16] 0.0, 128
    %2402 = vxpose.xlu0.b32.cont [14/16] 0.0, 128
    %2403 = vxpose.xlu0.b32.cont [15/16] 0.0, 128
    %2404 = vxpose.xlu0.b32.end [16/16] 0.0, 128
    %v2405 = vpop.trf.xlu0
    %v2406 = vpop.trf.xlu0
    %v2407 = vpop.trf.xlu0
    %v2408 = vpop.trf.xlu0
    %v2409 = vpop.trf.xlu0
    %v2410 = vpop.trf.xlu0
    %v2411 = vpop.trf.xlu0
    %v2412 = vpop.trf.xlu0
    %v2413 = vpop.trf.xlu0
    %v2414 = vpop.trf.xlu0
    %v2415 = vpop.trf.xlu0
    %v2416 = vpop.trf.xlu0
    %v2417 = vpop.trf.xlu0
    %v2418 = vpop.trf.xlu0
    %v2419 = vpop.trf.xlu0
    %v2420 = vpop.trf.xlu0
    %2422 = vset.pattern.permute.xlu0 0
    %2423 = vperm.xlu0 %2422, %v2405
    %v2424 = vpop.permute.xlu0 %2423
    %2427 = vset.pattern.permute.xlu0 0
    %2428 = vperm.xlu0 %2427, %v2406
    %v2429 = vpop.permute.xlu0 %2428
    %2432 = vset.pattern.permute.xlu0 0
    %2433 = vperm.xlu0 %2432, %v2407
    %v2434 = vpop.permute.xlu0 %2433
    %2437 = vset.pattern.permute.xlu0 0
    %2438 = vperm.xlu0 %2437, %v2408
    %v2439 = vpop.permute.xlu0 %2438
    %v2441 = vlaneseq
    %v2442 = vshrl.u32 %v2441, 7
    %v2443 = vsub.s32 5, %v2442
    %v2444 = vrot.slane %v2202, %v2443
    %v2445 = vsub.f32 %v2424, %v2444
    %v2446 = vsub.f32 %v2429, %v2444
    %v2447 = vsub.f32 %v2434, %v2444
    %v2448 = vsub.f32 %v2439, %v2444
    %v2449 = vmul.f32 %v2445, -0.5
    %v2450 = vmul.f32 %v2446, -0.5
    %v2451 = vmul.f32 %v2447, -0.5
    %v2452 = vmul.f32 %v2448, -0.5
    %v2453 = vmul.f32 %v2449, %v2445
    %v2454 = vmul.f32 %v2450, %v2446
    %v2455 = vmul.f32 %v2451, %v2447
    %v2456 = vmul.f32 %v2452, %v2448
    %v2457 = vstv %s2388
    %v2458 = vrcp.pop %v2457
    %v2459 = vmul.f32 %v2453, %v2458
    %v2460 = vmul.f32 %v2454, %v2458
    %v2461 = vmul.f32 %v2455, %v2458
    %v2462 = vmul.f32 %v2456, %v2458
    %v2463 = vmul.f32 %v2459, 1.442695
    %v2464 = vpow.pop %v2463
    %v2465 = vmul.f32 %v2460, 1.442695
    %v2466 = vpow.pop %v2465
    %v2467 = vmul.f32 %v2461, 1.442695
    %v2468 = vpow.pop %v2467
    %v2469 = vmul.f32 %v2462, 1.442695
    %v2470 = vpow.pop %v2469
    %v2471 = vsel %vm37, %v2464, 0.0
    %2472 = vadd.xlane.f32.xlu0 %v2471
    %v2473 = vpop.xlane.xlu0 %2472
    %v2474 = vsel %vm37, %v2466, 0.0
    %2475 = vadd.xlane.f32.xlu0 %v2474
    %v2476 = vpop.xlane.xlu0 %2475
    %v2477 = vsel %vm37, %v2468, 0.0
    %2478 = vadd.xlane.f32.xlu0 %v2477
    %v2479 = vpop.xlane.xlu0 %2478
    %v2480 = vsel %vm37, %v2470, 0.0
    %2481 = vadd.xlane.f32.xlu0 %v2480
    %v2482 = vpop.xlane.xlu0 %2481
    %v2483 = vsel %vm1749, %v2342, 0.0
    %v2484 = vsel %vm1749, %v2345, 0.0
    %v2485 = vadd.f32 %v2483, %v2484
    %v2486 = vsel %vm1749, %v2348, 0.0
    %v2487 = vadd.f32 %v2485, %v2486
    %v2488 = vsel %vm1749, %v2351, 0.0
    %v2489 = vadd.f32 %v2487, %v2488
    %2490 = vadd.xlane.f32.xlu0 %v2489
    %v2491 = vpop.xlane.xlu0 %2490
    %v2492 = vrot.slane %v2491, 4
    %v2493 = vadd.f32 %v2491, %v2492
    %v2494 = vrot.slane %v2493, 2
    %v2495 = vadd.f32 %v2493, %v2494
    %v2496 = vrot.slane %v2495, 1
    %v2497 = vadd.f32 %v2495, %v2496
    %s2498 = vtos %v2497
    %v2499 = vstv %s2498
    %v2500 = vrcp.pop %v2499
    %v2501 = vmul.f32 %v2342, %v2500
    %v2502 = vmul.f32 %v2345, %v2500
    %v2503 = vmul.f32 %v2348, %v2500
    %v2504 = vmul.f32 %v2351, %v2500
    %v2505 = vsel %vm1749, %v2473, 0.0
    %v2506 = vsel %vm1749, %v2476, 0.0
    %v2507 = vadd.f32 %v2505, %v2506
    %v2508 = vsel %vm1749, %v2479, 0.0
    %v2509 = vadd.f32 %v2507, %v2508
    %v2510 = vsel %vm1749, %v2482, 0.0
    %v2511 = vadd.f32 %v2509, %v2510
    %2512 = vadd.xlane.f32.xlu0 %v2511
    %v2513 = vpop.xlane.xlu0 %2512
    %v2514 = vrot.slane %v2513, 4
    %v2515 = vadd.f32 %v2513, %v2514
    %v2516 = vrot.slane %v2515, 2
    %v2517 = vadd.f32 %v2515, %v2516
    %v2518 = vrot.slane %v2517, 1
    %v2519 = vadd.f32 %v2517, %v2518
    %s2520 = vtos %v2519
    %v2521 = vstv %s2520
    %v2522 = vrcp.pop %v2521
    %v2523 = vmul.f32 %v2473, %v2522
    %v2524 = vmul.f32 %v2476, %v2522
    %v2525 = vmul.f32 %v2479, %v2522
    %v2526 = vmul.f32 %v2482, %v2522
    %v2527 = vrcp.pop %v2523
    %v2528 = vmul.f32 %v2501, %v2527
    %v2529 = vrcp.pop %v2524
    %v2530 = vmul.f32 %v2502, %v2529
    %v2531 = vrcp.pop %v2525
    %v2532 = vmul.f32 %v2503, %v2531
    %v2533 = vrcp.pop %v2526
    %v2534 = vmul.f32 %v2504, %v2533
    %v2535 = vlog2.pop %v2528
    %v2536 = vmul.f32 %v2535, 0.6931472
    %v2537 = vlog2.pop %v2530
    %v2538 = vmul.f32 %v2537, 0.6931472
    %v2539 = vlog2.pop %v2532
    %v2540 = vmul.f32 %v2539, 0.6931472
    %v2541 = vlog2.pop %v2534
    %v2542 = vmul.f32 %v2541, 0.6931472
    %v2543 = vmul.f32 %v2501, %v2536
    %v2544 = vmul.f32 %v2502, %v2538
    %v2545 = vmul.f32 %v2503, %v2540
    %v2546 = vmul.f32 %v2504, %v2542
    %v2547 = vsel %vm1749, %v2543, 0.0
    %v2548 = vsel %vm1749, %v2544, 0.0
    %v2549 = vadd.f32 %v2547, %v2548
    %v2550 = vsel %vm1749, %v2545, 0.0
    %v2551 = vadd.f32 %v2549, %v2550
    %v2552 = vsel %vm1749, %v2546, 0.0
    %v2553 = vadd.f32 %v2551, %v2552
    %2554 = vadd.xlane.f32.xlu0 %v2553
    %v2555 = vpop.xlane.xlu0 %2554
    %v2556 = vrot.slane %v2555, 4
    %v2557 = vadd.f32 %v2555, %v2556
    %v2558 = vrot.slane %v2557, 2
    %v2559 = vadd.f32 %v2557, %v2558
    %v2560 = vrot.slane %v2559, 1
    %v2561 = vadd.f32 %v2559, %v2560
    %s2562 = vtos %v2561
    %v2563 = vrot.slane %v35, 6
    %2564 = vrot.lane.b32.xlu0 %v2563, 96
    %v2565 = vpop.permute.xlu0 %2564
    %v2567 = vadd.f32 %v1489, %v2565
    %v2568 = vadd.f32 %v100, %v35
    %2570 = vrot.lane.b32.xlu0 %v2567, 32
    %v2571 = vpop.permute.xlu0 %2570
    %v2573 = vsel %vm1492, %v2571, 0.0
    %2574 = vadd.xlane.f32.xlu0 %v2573
    %v2575 = vpop.xlane.xlu0 %2574
    %v2576 = vrot.slane %v2575, 4
    %v2577 = vadd.f32 %v2575, %v2576
    %v2578 = vrot.slane %v2577, 2
    %v2579 = vadd.f32 %v2577, %v2578
    %v2580 = vrot.slane %v2579, 1
    %v2581 = vadd.f32 %v2579, %v2580
    %s2582 = vtos %v2581
    %v2583 = vrcp.pop 32.0
    %s2584 = vtos %v2583
    %s2585 = smul.f32 %s2582, %s2584
    %v2586 = vstv %s2585
    %v2587 = vsub.f32 %v2567, %v2586
    %v2588 = vmul.f32 %v2587, %v2587
    %2590 = vrot.lane.b32.xlu0 %v2588, 32
    %v2591 = vpop.permute.xlu0 %2590
    %v2593 = vsel %vm1492, %v2591, 0.0
    %2594 = vadd.xlane.f32.xlu0 %v2593
    %v2595 = vpop.xlane.xlu0 %2594
    %v2596 = vrot.slane %v2595, 4
    %v2597 = vadd.f32 %v2595, %v2596
    %v2598 = vrot.slane %v2597, 2
    %v2599 = vadd.f32 %v2597, %v2598
    %v2600 = vrot.slane %v2599, 1
    %v2601 = vadd.f32 %v2599, %v2600
    %s2602 = vtos %v2601
    %v2603 = vrcp.pop 31.0
    %s2604 = vtos %v2603
    %s2605 = smul.f32 %s2602, %s2604
    %s2606 = smul.f32 %s2605, 0.2804888
    %s2607 = smax.f32 %s2606, 1e-12
    %2608 = vxpose.xlu0.b32.start [1/16] %v2571, 128
    %2609 = vxpose.xlu0.b32.cont [2/16] 0.0, 128
    %2610 = vxpose.xlu0.b32.cont [3/16] 0.0, 128
    %2611 = vxpose.xlu0.b32.cont [4/16] 0.0, 128
    %2612 = vxpose.xlu0.b32.cont [5/16] 0.0, 128
    %2613 = vxpose.xlu0.b32.cont [6/16] 0.0, 128
    %2614 = vxpose.xlu0.b32.cont [7/16] 0.0, 128
    %2615 = vxpose.xlu0.b32.cont [8/16] 0.0, 128
    %2616 = vxpose.xlu0.b32.cont [9/16] 0.0, 128
    %2617 = vxpose.xlu0.b32.cont [10/16] 0.0, 128
    %2618 = vxpose.xlu0.b32.cont [11/16] 0.0, 128
    %2619 = vxpose.xlu0.b32.cont [12/16] 0.0, 128
    %2620 = vxpose.xlu0.b32.cont [13/16] 0.0, 128
    %2621 = vxpose.xlu0.b32.cont [14/16] 0.0, 128
    %2622 = vxpose.xlu0.b32.cont [15/16] 0.0, 128
    %2623 = vxpose.xlu0.b32.end [16/16] 0.0, 128
    %v2624 = vpop.trf.xlu0
    %v2625 = vpop.trf.xlu0
    %v2626 = vpop.trf.xlu0
    %v2627 = vpop.trf.xlu0
    %v2628 = vpop.trf.xlu0
    %v2629 = vpop.trf.xlu0
    %v2630 = vpop.trf.xlu0
    %v2631 = vpop.trf.xlu0
    %v2632 = vpop.trf.xlu0
    %v2633 = vpop.trf.xlu0
    %v2634 = vpop.trf.xlu0
    %v2635 = vpop.trf.xlu0
    %v2636 = vpop.trf.xlu0
    %v2637 = vpop.trf.xlu0
    %v2638 = vpop.trf.xlu0
    %v2639 = vpop.trf.xlu0
    %2641 = vset.pattern.permute.xlu0 0
    %2642 = vperm.xlu0 %2641, %v2624
    %v2643 = vpop.permute.xlu0 %2642
    %2646 = vset.pattern.permute.xlu0 0
    %2647 = vperm.xlu0 %2646, %v2625
    %v2648 = vpop.permute.xlu0 %2647
    %2651 = vset.pattern.permute.xlu0 0
    %2652 = vperm.xlu0 %2651, %v2626
    %v2653 = vpop.permute.xlu0 %2652
    %2656 = vset.pattern.permute.xlu0 0
    %2657 = vperm.xlu0 %2656, %v2627
    %v2658 = vpop.permute.xlu0 %2657
    %v2660 = vlaneseq
    %v2661 = vshrl.u32 %v2660, 7
    %v2662 = vsub.s32 0, %v2661
    %v2663 = vrot.slane %v2567, %v2662
    %v2664 = vsub.f32 %v2643, %v2663
    %v2665 = vsub.f32 %v2648, %v2663
    %v2666 = vsub.f32 %v2653, %v2663
    %v2667 = vsub.f32 %v2658, %v2663
    %v2668 = vmul.f32 %v2664, -0.5
    %v2669 = vmul.f32 %v2665, -0.5
    %v2670 = vmul.f32 %v2666, -0.5
    %v2671 = vmul.f32 %v2667, -0.5
    %v2672 = vmul.f32 %v2668, %v2664
    %v2673 = vmul.f32 %v2669, %v2665
    %v2674 = vmul.f32 %v2670, %v2666
    %v2675 = vmul.f32 %v2671, %v2667
    %v2676 = vstv %s2607
    %v2677 = vrcp.pop %v2676
    %v2678 = vmul.f32 %v2672, %v2677
    %v2679 = vmul.f32 %v2673, %v2677
    %v2680 = vmul.f32 %v2674, %v2677
    %v2681 = vmul.f32 %v2675, %v2677
    %v2682 = vmul.f32 %v2678, 1.442695
    %v2683 = vpow.pop %v2682
    %v2684 = vmul.f32 %v2679, 1.442695
    %v2685 = vpow.pop %v2684
    %v2686 = vmul.f32 %v2680, 1.442695
    %v2687 = vpow.pop %v2686
    %v2688 = vmul.f32 %v2681, 1.442695
    %v2689 = vpow.pop %v2688
    %2694 = vrot.lane.b32.xlu0 %v2683, 32
    %v2695 = vpop.permute.xlu0 %2694
    %2696 = vrot.lane.b32.xlu0 %v2685, 32
    %v2697 = vpop.permute.xlu0 %2696
    %2698 = vrot.lane.b32.xlu0 %v2687, 32
    %v2699 = vpop.permute.xlu0 %2698
    %2700 = vrot.lane.b32.xlu0 %v2689, 32
    %v2701 = vpop.permute.xlu0 %2700
    %v2706 = vsel %vm37, %v2695, 0.0
    %2707 = vadd.xlane.f32.xlu0 %v2706
    %v2708 = vpop.xlane.xlu0 %2707
    %v2709 = vsel %vm37, %v2697, 0.0
    %2710 = vadd.xlane.f32.xlu0 %v2709
    %v2711 = vpop.xlane.xlu0 %2710
    %v2712 = vsel %vm37, %v2699, 0.0
    %2713 = vadd.xlane.f32.xlu0 %v2712
    %v2714 = vpop.xlane.xlu0 %2713
    %v2715 = vsel %vm37, %v2701, 0.0
    %2716 = vadd.xlane.f32.xlu0 %v2715
    %v2717 = vpop.xlane.xlu0 %2716
    %v2719 = vrot.slane %v2568, 7
    %v2721 = vsel %vm1492, %v2719, 0.0
    %2722 = vadd.xlane.f32.xlu0 %v2721
    %v2723 = vpop.xlane.xlu0 %2722
    %v2724 = vrot.slane %v2723, 4
    %v2725 = vadd.f32 %v2723, %v2724
    %v2726 = vrot.slane %v2725, 2
    %v2727 = vadd.f32 %v2725, %v2726
    %v2728 = vrot.slane %v2727, 1
    %v2729 = vadd.f32 %v2727, %v2728
    %s2730 = vtos %v2729
    %v2731 = vrcp.pop 32.0
    %s2732 = vtos %v2731
    %s2733 = smul.f32 %s2730, %s2732
    %v2734 = vstv %s2733
    %v2735 = vsub.f32 %v2568, %v2734
    %v2736 = vmul.f32 %v2735, %v2735
    %v2738 = vrot.slane %v2736, 7
    %v2740 = vsel %vm1492, %v2738, 0.0
    %2741 = vadd.xlane.f32.xlu0 %v2740
    %v2742 = vpop.xlane.xlu0 %2741
    %v2743 = vrot.slane %v2742, 4
    %v2744 = vadd.f32 %v2742, %v2743
    %v2745 = vrot.slane %v2744, 2
    %v2746 = vadd.f32 %v2744, %v2745
    %v2747 = vrot.slane %v2746, 1
    %v2748 = vadd.f32 %v2746, %v2747
    %s2749 = vtos %v2748
    %v2750 = vrcp.pop 31.0
    %s2751 = vtos %v2750
    %s2752 = smul.f32 %s2749, %s2751
    %s2753 = smul.f32 %s2752, 0.2804888
    %s2754 = smax.f32 %s2753, 1e-12
    %2755 = vxpose.xlu0.b32.start [1/16] %v2719, 128
    %2756 = vxpose.xlu0.b32.cont [2/16] 0.0, 128
    %2757 = vxpose.xlu0.b32.cont [3/16] 0.0, 128
    %2758 = vxpose.xlu0.b32.cont [4/16] 0.0, 128
    %2759 = vxpose.xlu0.b32.cont [5/16] 0.0, 128
    %2760 = vxpose.xlu0.b32.cont [6/16] 0.0, 128
    %2761 = vxpose.xlu0.b32.cont [7/16] 0.0, 128
    %2762 = vxpose.xlu0.b32.cont [8/16] 0.0, 128
    %2763 = vxpose.xlu0.b32.cont [9/16] 0.0, 128
    %2764 = vxpose.xlu0.b32.cont [10/16] 0.0, 128
    %2765 = vxpose.xlu0.b32.cont [11/16] 0.0, 128
    %2766 = vxpose.xlu0.b32.cont [12/16] 0.0, 128
    %2767 = vxpose.xlu0.b32.cont [13/16] 0.0, 128
    %2768 = vxpose.xlu0.b32.cont [14/16] 0.0, 128
    %2769 = vxpose.xlu0.b32.cont [15/16] 0.0, 128
    %2770 = vxpose.xlu0.b32.end [16/16] 0.0, 128
    %v2771 = vpop.trf.xlu0
    %v2772 = vpop.trf.xlu0
    %v2773 = vpop.trf.xlu0
    %v2774 = vpop.trf.xlu0
    %v2775 = vpop.trf.xlu0
    %v2776 = vpop.trf.xlu0
    %v2777 = vpop.trf.xlu0
    %v2778 = vpop.trf.xlu0
    %v2779 = vpop.trf.xlu0
    %v2780 = vpop.trf.xlu0
    %v2781 = vpop.trf.xlu0
    %v2782 = vpop.trf.xlu0
    %v2783 = vpop.trf.xlu0
    %v2784 = vpop.trf.xlu0
    %v2785 = vpop.trf.xlu0
    %v2786 = vpop.trf.xlu0
    %2788 = vset.pattern.permute.xlu0 0
    %2789 = vperm.xlu0 %2788, %v2771
    %v2790 = vpop.permute.xlu0 %2789
    %2793 = vset.pattern.permute.xlu0 0
    %2794 = vperm.xlu0 %2793, %v2772
    %v2795 = vpop.permute.xlu0 %2794
    %2798 = vset.pattern.permute.xlu0 0
    %2799 = vperm.xlu0 %2798, %v2773
    %v2800 = vpop.permute.xlu0 %2799
    %2803 = vset.pattern.permute.xlu0 0
    %2804 = vperm.xlu0 %2803, %v2774
    %v2805 = vpop.permute.xlu0 %2804
    %v2807 = vlaneseq
    %v2808 = vshrl.u32 %v2807, 7
    %v2809 = vsub.s32 7, %v2808
    %v2810 = vrot.slane %v2568, %v2809
    %v2811 = vsub.f32 %v2790, %v2810
    %v2812 = vsub.f32 %v2795, %v2810
    %v2813 = vsub.f32 %v2800, %v2810
    %v2814 = vsub.f32 %v2805, %v2810
    %v2815 = vmul.f32 %v2811, -0.5
    %v2816 = vmul.f32 %v2812, -0.5
    %v2817 = vmul.f32 %v2813, -0.5
    %v2818 = vmul.f32 %v2814, -0.5
    %v2819 = vmul.f32 %v2815, %v2811
    %v2820 = vmul.f32 %v2816, %v2812
    %v2821 = vmul.f32 %v2817, %v2813
    %v2822 = vmul.f32 %v2818, %v2814
    %v2823 = vstv %s2754
    %v2824 = vrcp.pop %v2823
    %v2825 = vmul.f32 %v2819, %v2824
    %v2826 = vmul.f32 %v2820, %v2824
    %v2827 = vmul.f32 %v2821, %v2824
    %v2828 = vmul.f32 %v2822, %v2824
    %v2829 = vmul.f32 %v2825, 1.442695
    %v2830 = vpow.pop %v2829
    %v2831 = vmul.f32 %v2826, 1.442695
    %v2832 = vpow.pop %v2831
    %v2833 = vmul.f32 %v2827, 1.442695
    %v2834 = vpow.pop %v2833
    %v2835 = vmul.f32 %v2828, 1.442695
    %v2836 = vpow.pop %v2835
    %v2837 = vsel %vm37, %v2830, 0.0
    %2838 = vadd.xlane.f32.xlu0 %v2837
    %v2839 = vpop.xlane.xlu0 %2838
    %v2840 = vsel %vm37, %v2832, 0.0
    %2841 = vadd.xlane.f32.xlu0 %v2840
    %v2842 = vpop.xlane.xlu0 %2841
    %v2843 = vsel %vm37, %v2834, 0.0
    %2844 = vadd.xlane.f32.xlu0 %v2843
    %v2845 = vpop.xlane.xlu0 %2844
    %v2846 = vsel %vm37, %v2836, 0.0
    %2847 = vadd.xlane.f32.xlu0 %v2846
    %v2848 = vpop.xlane.xlu0 %2847
    %v2849 = vsel %vm1749, %v2708, 0.0
    %v2850 = vsel %vm1749, %v2711, 0.0
    %v2851 = vadd.f32 %v2849, %v2850
    %v2852 = vsel %vm1749, %v2714, 0.0
    %v2853 = vadd.f32 %v2851, %v2852
    %v2854 = vsel %vm1749, %v2717, 0.0
    %v2855 = vadd.f32 %v2853, %v2854
    %2856 = vadd.xlane.f32.xlu0 %v2855
    %v2857 = vpop.xlane.xlu0 %2856
    %v2858 = vrot.slane %v2857, 4
    %v2859 = vadd.f32 %v2857, %v2858
    %v2860 = vrot.slane %v2859, 2
    %v2861 = vadd.f32 %v2859, %v2860
    %v2862 = vrot.slane %v2861, 1
    %v2863 = vadd.f32 %v2861, %v2862
    %s2864 = vtos %v2863
    %v2865 = vstv %s2864
    %v2866 = vrcp.pop %v2865
    %v2867 = vmul.f32 %v2708, %v2866
    %v2868 = vmul.f32 %v2711, %v2866
    %v2869 = vmul.f32 %v2714, %v2866
    %v2870 = vmul.f32 %v2717, %v2866
    %v2871 = vsel %vm1749, %v2839, 0.0
    %v2872 = vsel %vm1749, %v2842, 0.0
    %v2873 = vadd.f32 %v2871, %v2872
    %v2874 = vsel %vm1749, %v2845, 0.0
    %v2875 = vadd.f32 %v2873, %v2874
    %v2876 = vsel %vm1749, %v2848, 0.0
    %v2877 = vadd.f32 %v2875, %v2876
    %2878 = vadd.xlane.f32.xlu0 %v2877
    %v2879 = vpop.xlane.xlu0 %2878
    %v2880 = vrot.slane %v2879, 4
    %v2881 = vadd.f32 %v2879, %v2880
    %v2882 = vrot.slane %v2881, 2
    %v2883 = vadd.f32 %v2881, %v2882
    %v2884 = vrot.slane %v2883, 1
    %v2885 = vadd.f32 %v2883, %v2884
    %s2886 = vtos %v2885
    %v2887 = vstv %s2886
    %v2888 = vrcp.pop %v2887
    %v2889 = vmul.f32 %v2839, %v2888
    %v2890 = vmul.f32 %v2842, %v2888
    %v2891 = vmul.f32 %v2845, %v2888
    %v2892 = vmul.f32 %v2848, %v2888
    %v2893 = vrcp.pop %v2889
    %v2894 = vmul.f32 %v2867, %v2893
    %v2895 = vrcp.pop %v2890
    %v2896 = vmul.f32 %v2868, %v2895
    %v2897 = vrcp.pop %v2891
    %v2898 = vmul.f32 %v2869, %v2897
    %v2899 = vrcp.pop %v2892
    %v2900 = vmul.f32 %v2870, %v2899
    %v2901 = vlog2.pop %v2894
    %v2902 = vmul.f32 %v2901, 0.6931472
    %v2903 = vlog2.pop %v2896
    %v2904 = vmul.f32 %v2903, 0.6931472
    %v2905 = vlog2.pop %v2898
    %v2906 = vmul.f32 %v2905, 0.6931472
    %v2907 = vlog2.pop %v2900
    %v2908 = vmul.f32 %v2907, 0.6931472
    %v2909 = vmul.f32 %v2867, %v2902
    %v2910 = vmul.f32 %v2868, %v2904
    %v2911 = vmul.f32 %v2869, %v2906
    %v2912 = vmul.f32 %v2870, %v2908
    %v2913 = vsel %vm1749, %v2909, 0.0
    %v2914 = vsel %vm1749, %v2910, 0.0
    %v2915 = vadd.f32 %v2913, %v2914
    %v2916 = vsel %vm1749, %v2911, 0.0
    %v2917 = vadd.f32 %v2915, %v2916
    %v2918 = vsel %vm1749, %v2912, 0.0
    %v2919 = vadd.f32 %v2917, %v2918
    %2920 = vadd.xlane.f32.xlu0 %v2919
    %v2921 = vpop.xlane.xlu0 %2920
    %v2922 = vrot.slane %v2921, 4
    %v2923 = vadd.f32 %v2921, %v2922
    %v2924 = vrot.slane %v2923, 2
    %v2925 = vadd.f32 %v2923, %v2924
    %v2926 = vrot.slane %v2925, 1
    %v2927 = vadd.f32 %v2925, %v2926
    %s2928 = vtos %v2927
    %v2929 = vadd.f32 %v1489, %v36
    %v2930 = vadd.f32 %v44, %v36
    %v2931 = vsel %vm1492, %v2929, 0.0
    %2932 = vadd.xlane.f32.xlu0 %v2931
    %v2933 = vpop.xlane.xlu0 %2932
    %v2934 = vrot.slane %v2933, 4
    %v2935 = vadd.f32 %v2933, %v2934
    %v2936 = vrot.slane %v2935, 2
    %v2937 = vadd.f32 %v2935, %v2936
    %v2938 = vrot.slane %v2937, 1
    %v2939 = vadd.f32 %v2937, %v2938
    %s2940 = vtos %v2939
    %v2941 = vrcp.pop 32.0
    %s2942 = vtos %v2941
    %s2943 = smul.f32 %s2940, %s2942
    %v2944 = vstv %s2943
    %v2945 = vsub.f32 %v2929, %v2944
    %v2946 = vmul.f32 %v2945, %v2945
    %v2947 = vsel %vm1492, %v2946, 0.0
    %2948 = vadd.xlane.f32.xlu0 %v2947
    %v2949 = vpop.xlane.xlu0 %2948
    %v2950 = vrot.slane %v2949, 4
    %v2951 = vadd.f32 %v2949, %v2950
    %v2952 = vrot.slane %v2951, 2
    %v2953 = vadd.f32 %v2951, %v2952
    %v2954 = vrot.slane %v2953, 1
    %v2955 = vadd.f32 %v2953, %v2954
    %s2956 = vtos %v2955
    %v2957 = vrcp.pop 31.0
    %s2958 = vtos %v2957
    %s2959 = smul.f32 %s2956, %s2958
    %s2960 = smul.f32 %s2959, 0.2804888
    %s2961 = smax.f32 %s2960, 1e-12
    %2962 = vxpose.xlu0.b32.start [1/16] %v2929, 128
    %2963 = vxpose.xlu0.b32.cont [2/16] 0.0, 128
    %2964 = vxpose.xlu0.b32.cont [3/16] 0.0, 128
    %2965 = vxpose.xlu0.b32.cont [4/16] 0.0, 128
    %2966 = vxpose.xlu0.b32.cont [5/16] 0.0, 128
    %2967 = vxpose.xlu0.b32.cont [6/16] 0.0, 128
    %2968 = vxpose.xlu0.b32.cont [7/16] 0.0, 128
    %2969 = vxpose.xlu0.b32.cont [8/16] 0.0, 128
    %2970 = vxpose.xlu0.b32.cont [9/16] 0.0, 128
    %2971 = vxpose.xlu0.b32.cont [10/16] 0.0, 128
    %2972 = vxpose.xlu0.b32.cont [11/16] 0.0, 128
    %2973 = vxpose.xlu0.b32.cont [12/16] 0.0, 128
    %2974 = vxpose.xlu0.b32.cont [13/16] 0.0, 128
    %2975 = vxpose.xlu0.b32.cont [14/16] 0.0, 128
    %2976 = vxpose.xlu0.b32.cont [15/16] 0.0, 128
    %2977 = vxpose.xlu0.b32.end [16/16] 0.0, 128
    %v2978 = vpop.trf.xlu0
    %v2979 = vpop.trf.xlu0
    %v2980 = vpop.trf.xlu0
    %v2981 = vpop.trf.xlu0
    %v2982 = vpop.trf.xlu0
    %v2983 = vpop.trf.xlu0
    %v2984 = vpop.trf.xlu0
    %v2985 = vpop.trf.xlu0
    %v2986 = vpop.trf.xlu0
    %v2987 = vpop.trf.xlu0
    %v2988 = vpop.trf.xlu0
    %v2989 = vpop.trf.xlu0
    %v2990 = vpop.trf.xlu0
    %v2991 = vpop.trf.xlu0
    %v2992 = vpop.trf.xlu0
    %v2993 = vpop.trf.xlu0
    %2995 = vset.pattern.permute.xlu0 0
    %2996 = vperm.xlu0 %2995, %v2978
    %v2997 = vpop.permute.xlu0 %2996
    %3000 = vset.pattern.permute.xlu0 0
    %3001 = vperm.xlu0 %3000, %v2979
    %v3002 = vpop.permute.xlu0 %3001
    %3005 = vset.pattern.permute.xlu0 0
    %3006 = vperm.xlu0 %3005, %v2980
    %v3007 = vpop.permute.xlu0 %3006
    %3010 = vset.pattern.permute.xlu0 0
    %3011 = vperm.xlu0 %3010, %v2981
    %v3012 = vpop.permute.xlu0 %3011
    %v3014 = vlaneseq
    %v3015 = vshrl.u32 %v3014, 7
    %v3016 = vsub.s32 0, %v3015
    %v3017 = vrot.slane %v2929, %v3016
    %v3018 = vsub.f32 %v2997, %v3017
    %v3019 = vsub.f32 %v3002, %v3017
    %v3020 = vsub.f32 %v3007, %v3017
    %v3021 = vsub.f32 %v3012, %v3017
    %v3022 = vmul.f32 %v3018, -0.5
    %v3023 = vmul.f32 %v3019, -0.5
    %v3024 = vmul.f32 %v3020, -0.5
    %v3025 = vmul.f32 %v3021, -0.5
    %v3026 = vmul.f32 %v3022, %v3018
    %v3027 = vmul.f32 %v3023, %v3019
    %v3028 = vmul.f32 %v3024, %v3020
    %v3029 = vmul.f32 %v3025, %v3021
    %v3030 = vstv %s2961
    %v3031 = vrcp.pop %v3030
    %v3032 = vmul.f32 %v3026, %v3031
    %v3033 = vmul.f32 %v3027, %v3031
    %v3034 = vmul.f32 %v3028, %v3031
    %v3035 = vmul.f32 %v3029, %v3031
    %v3036 = vmul.f32 %v3032, 1.442695
    %v3037 = vpow.pop %v3036
    %v3038 = vmul.f32 %v3033, 1.442695
    %v3039 = vpow.pop %v3038
    %v3040 = vmul.f32 %v3034, 1.442695
    %v3041 = vpow.pop %v3040
    %v3042 = vmul.f32 %v3035, 1.442695
    %v3043 = vpow.pop %v3042
    %v3044 = vsel %vm37, %v3037, 0.0
    %3045 = vadd.xlane.f32.xlu0 %v3044
    %v3046 = vpop.xlane.xlu0 %3045
    %v3047 = vsel %vm37, %v3039, 0.0
    %3048 = vadd.xlane.f32.xlu0 %v3047
    %v3049 = vpop.xlane.xlu0 %3048
    %v3050 = vsel %vm37, %v3041, 0.0
    %3051 = vadd.xlane.f32.xlu0 %v3050
    %v3052 = vpop.xlane.xlu0 %3051
    %v3053 = vsel %vm37, %v3043, 0.0
    %3054 = vadd.xlane.f32.xlu0 %v3053
    %v3055 = vpop.xlane.xlu0 %3054
    %v3057 = vrot.slane %v2930, 1
    %v3059 = vsel %vm1492, %v3057, 0.0
    %3060 = vadd.xlane.f32.xlu0 %v3059
    %v3061 = vpop.xlane.xlu0 %3060
    %v3062 = vrot.slane %v3061, 4
    %v3063 = vadd.f32 %v3061, %v3062
    %v3064 = vrot.slane %v3063, 2
    %v3065 = vadd.f32 %v3063, %v3064
    %v3066 = vrot.slane %v3065, 1
    %v3067 = vadd.f32 %v3065, %v3066
    %s3068 = vtos %v3067
    %v3069 = vrcp.pop 32.0
    %s3070 = vtos %v3069
    %s3071 = smul.f32 %s3068, %s3070
    %v3072 = vstv %s3071
    %v3073 = vsub.f32 %v2930, %v3072
    %v3074 = vmul.f32 %v3073, %v3073
    %v3076 = vrot.slane %v3074, 1
    %v3078 = vsel %vm1492, %v3076, 0.0
    %3079 = vadd.xlane.f32.xlu0 %v3078
    %v3080 = vpop.xlane.xlu0 %3079
    %v3081 = vrot.slane %v3080, 4
    %v3082 = vadd.f32 %v3080, %v3081
    %v3083 = vrot.slane %v3082, 2
    %v3084 = vadd.f32 %v3082, %v3083
    %v3085 = vrot.slane %v3084, 1
    %v3086 = vadd.f32 %v3084, %v3085
    %s3087 = vtos %v3086
    %v3088 = vrcp.pop 31.0
    %s3089 = vtos %v3088
    %s3090 = smul.f32 %s3087, %s3089
    %s3091 = smul.f32 %s3090, 0.2804888
    %s3092 = smax.f32 %s3091, 1e-12
    %3093 = vxpose.xlu0.b32.start [1/16] %v3057, 128
    %3094 = vxpose.xlu0.b32.cont [2/16] 0.0, 128
    %3095 = vxpose.xlu0.b32.cont [3/16] 0.0, 128
    %3096 = vxpose.xlu0.b32.cont [4/16] 0.0, 128
    %3097 = vxpose.xlu0.b32.cont [5/16] 0.0, 128
    %3098 = vxpose.xlu0.b32.cont [6/16] 0.0, 128
    %3099 = vxpose.xlu0.b32.cont [7/16] 0.0, 128
    %3100 = vxpose.xlu0.b32.cont [8/16] 0.0, 128
    %3101 = vxpose.xlu0.b32.cont [9/16] 0.0, 128
    %3102 = vxpose.xlu0.b32.cont [10/16] 0.0, 128
    %3103 = vxpose.xlu0.b32.cont [11/16] 0.0, 128
    %3104 = vxpose.xlu0.b32.cont [12/16] 0.0, 128
    %3105 = vxpose.xlu0.b32.cont [13/16] 0.0, 128
    %3106 = vxpose.xlu0.b32.cont [14/16] 0.0, 128
    %3107 = vxpose.xlu0.b32.cont [15/16] 0.0, 128
    %3108 = vxpose.xlu0.b32.end [16/16] 0.0, 128
    %v3109 = vpop.trf.xlu0
    %v3110 = vpop.trf.xlu0
    %v3111 = vpop.trf.xlu0
    %v3112 = vpop.trf.xlu0
    %v3113 = vpop.trf.xlu0
    %v3114 = vpop.trf.xlu0
    %v3115 = vpop.trf.xlu0
    %v3116 = vpop.trf.xlu0
    %v3117 = vpop.trf.xlu0
    %v3118 = vpop.trf.xlu0
    %v3119 = vpop.trf.xlu0
    %v3120 = vpop.trf.xlu0
    %v3121 = vpop.trf.xlu0
    %v3122 = vpop.trf.xlu0
    %v3123 = vpop.trf.xlu0
    %v3124 = vpop.trf.xlu0
    %3126 = vset.pattern.permute.xlu0 0
    %3127 = vperm.xlu0 %3126, %v3109
    %v3128 = vpop.permute.xlu0 %3127
    %3131 = vset.pattern.permute.xlu0 0
    %3132 = vperm.xlu0 %3131, %v3110
    %v3133 = vpop.permute.xlu0 %3132
    %3136 = vset.pattern.permute.xlu0 0
    %3137 = vperm.xlu0 %3136, %v3111
    %v3138 = vpop.permute.xlu0 %3137
    %3141 = vset.pattern.permute.xlu0 0
    %3142 = vperm.xlu0 %3141, %v3112
    %v3143 = vpop.permute.xlu0 %3142
    %v3145 = vlaneseq
    %v3146 = vshrl.u32 %v3145, 7
    %v3147 = vsub.s32 1, %v3146
    %v3148 = vrot.slane %v2930, %v3147
    %v3149 = vsub.f32 %v3128, %v3148
    %v3150 = vsub.f32 %v3133, %v3148
    %v3151 = vsub.f32 %v3138, %v3148
    %v3152 = vsub.f32 %v3143, %v3148
    %v3153 = vmul.f32 %v3149, -0.5
    %v3154 = vmul.f32 %v3150, -0.5
    %v3155 = vmul.f32 %v3151, -0.5
    %v3156 = vmul.f32 %v3152, -0.5
    %v3157 = vmul.f32 %v3153, %v3149
    %v3158 = vmul.f32 %v3154, %v3150
    %v3159 = vmul.f32 %v3155, %v3151
    %v3160 = vmul.f32 %v3156, %v3152
    %v3161 = vstv %s3092
    %v3162 = vrcp.pop %v3161
    %v3163 = vmul.f32 %v3157, %v3162
    %v3164 = vmul.f32 %v3158, %v3162
    %v3165 = vmul.f32 %v3159, %v3162
    %v3166 = vmul.f32 %v3160, %v3162
    %v3167 = vmul.f32 %v3163, 1.442695
    %v3168 = vpow.pop %v3167
    %v3169 = vmul.f32 %v3164, 1.442695
    %v3170 = vpow.pop %v3169
    %v3171 = vmul.f32 %v3165, 1.442695
    %v3172 = vpow.pop %v3171
    %v3173 = vmul.f32 %v3166, 1.442695
    %v3174 = vpow.pop %v3173
    %v3175 = vsel %vm37, %v3168, 0.0
    %3176 = vadd.xlane.f32.xlu0 %v3175
    %v3177 = vpop.xlane.xlu0 %3176
    %v3178 = vsel %vm37, %v3170, 0.0
    %3179 = vadd.xlane.f32.xlu0 %v3178
    %v3180 = vpop.xlane.xlu0 %3179
    %v3181 = vsel %vm37, %v3172, 0.0
    %3182 = vadd.xlane.f32.xlu0 %v3181
    %v3183 = vpop.xlane.xlu0 %3182
    %v3184 = vsel %vm37, %v3174, 0.0
    %3185 = vadd.xlane.f32.xlu0 %v3184
    %v3186 = vpop.xlane.xlu0 %3185
    %v3187 = vsel %vm1749, %v3046, 0.0
    %v3188 = vsel %vm1749, %v3049, 0.0
    %v3189 = vadd.f32 %v3187, %v3188
    %v3190 = vsel %vm1749, %v3052, 0.0
    %v3191 = vadd.f32 %v3189, %v3190
    %v3192 = vsel %vm1749, %v3055, 0.0
    %v3193 = vadd.f32 %v3191, %v3192
    %3194 = vadd.xlane.f32.xlu0 %v3193
    %v3195 = vpop.xlane.xlu0 %3194
    %v3196 = vrot.slane %v3195, 4
    %v3197 = vadd.f32 %v3195, %v3196
    %v3198 = vrot.slane %v3197, 2
    %v3199 = vadd.f32 %v3197, %v3198
    %v3200 = vrot.slane %v3199, 1
    %v3201 = vadd.f32 %v3199, %v3200
    %s3202 = vtos %v3201
    %v3203 = vstv %s3202
    %v3204 = vrcp.pop %v3203
    %v3205 = vmul.f32 %v3046, %v3204
    %v3206 = vmul.f32 %v3049, %v3204
    %v3207 = vmul.f32 %v3052, %v3204
    %v3208 = vmul.f32 %v3055, %v3204
    %v3209 = vsel %vm1749, %v3177, 0.0
    %v3210 = vsel %vm1749, %v3180, 0.0
    %v3211 = vadd.f32 %v3209, %v3210
    %v3212 = vsel %vm1749, %v3183, 0.0
    %v3213 = vadd.f32 %v3211, %v3212
    %v3214 = vsel %vm1749, %v3186, 0.0
    %v3215 = vadd.f32 %v3213, %v3214
    %3216 = vadd.xlane.f32.xlu0 %v3215
    %v3217 = vpop.xlane.xlu0 %3216
    %v3218 = vrot.slane %v3217, 4
    %v3219 = vadd.f32 %v3217, %v3218
    %v3220 = vrot.slane %v3219, 2
    %v3221 = vadd.f32 %v3219, %v3220
    %v3222 = vrot.slane %v3221, 1
    %v3223 = vadd.f32 %v3221, %v3222
    %s3224 = vtos %v3223
    %v3225 = vstv %s3224
    %v3226 = vrcp.pop %v3225
    %v3227 = vmul.f32 %v3177, %v3226
    %v3228 = vmul.f32 %v3180, %v3226
    %v3229 = vmul.f32 %v3183, %v3226
    %v3230 = vmul.f32 %v3186, %v3226
    %v3231 = vrcp.pop %v3227
    %v3232 = vmul.f32 %v3205, %v3231
    %v3233 = vrcp.pop %v3228
    %v3234 = vmul.f32 %v3206, %v3233
    %v3235 = vrcp.pop %v3229
    %v3236 = vmul.f32 %v3207, %v3235
    %v3237 = vrcp.pop %v3230
    %v3238 = vmul.f32 %v3208, %v3237
    %v3239 = vlog2.pop %v3232
    %v3240 = vmul.f32 %v3239, 0.6931472
    %v3241 = vlog2.pop %v3234
    %v3242 = vmul.f32 %v3241, 0.6931472
    %v3243 = vlog2.pop %v3236
    %v3244 = vmul.f32 %v3243, 0.6931472
    %v3245 = vlog2.pop %v3238
    %v3246 = vmul.f32 %v3245, 0.6931472
    %v3247 = vmul.f32 %v3205, %v3240
    %v3248 = vmul.f32 %v3206, %v3242
    %v3249 = vmul.f32 %v3207, %v3244
    %v3250 = vmul.f32 %v3208, %v3246
    %v3251 = vsel %vm1749, %v3247, 0.0
    %v3252 = vsel %vm1749, %v3248, 0.0
    %v3253 = vadd.f32 %v3251, %v3252
    %v3254 = vsel %vm1749, %v3249, 0.0
    %v3255 = vadd.f32 %v3253, %v3254
    %v3256 = vsel %vm1749, %v3250, 0.0
    %v3257 = vadd.f32 %v3255, %v3256
    %3258 = vadd.xlane.f32.xlu0 %v3257
    %v3259 = vpop.xlane.xlu0 %3258
    %v3260 = vrot.slane %v3259, 4
    %v3261 = vadd.f32 %v3259, %v3260
    %v3262 = vrot.slane %v3261, 2
    %v3263 = vadd.f32 %v3261, %v3262
    %v3264 = vrot.slane %v3263, 1
    %v3265 = vadd.f32 %v3263, %v3264
    %s3266 = vtos %v3265
    %v3268 = vrot.slane %v36, 2
    %3269 = vrot.lane.b32.xlu0 %v3268, 32
    %v3270 = vpop.permute.xlu0 %3269
    %v3272 = vadd.f32 %v1489, %v3270
    %v3273 = vadd.f32 %v52, %v36
    %3275 = vrot.lane.b32.xlu0 %v3272, 96
    %v3276 = vpop.permute.xlu0 %3275
    %v3278 = vsel %vm1492, %v3276, 0.0
    %3279 = vadd.xlane.f32.xlu0 %v3278
    %v3280 = vpop.xlane.xlu0 %3279
    %v3281 = vrot.slane %v3280, 4
    %v3282 = vadd.f32 %v3280, %v3281
    %v3283 = vrot.slane %v3282, 2
    %v3284 = vadd.f32 %v3282, %v3283
    %v3285 = vrot.slane %v3284, 1
    %v3286 = vadd.f32 %v3284, %v3285
    %s3287 = vtos %v3286
    %v3288 = vrcp.pop 32.0
    %s3289 = vtos %v3288
    %s3290 = smul.f32 %s3287, %s3289
    %v3291 = vstv %s3290
    %v3292 = vsub.f32 %v3272, %v3291
    %v3293 = vmul.f32 %v3292, %v3292
    %3295 = vrot.lane.b32.xlu0 %v3293, 96
    %v3296 = vpop.permute.xlu0 %3295
    %v3298 = vsel %vm1492, %v3296, 0.0
    %3299 = vadd.xlane.f32.xlu0 %v3298
    %v3300 = vpop.xlane.xlu0 %3299
    %v3301 = vrot.slane %v3300, 4
    %v3302 = vadd.f32 %v3300, %v3301
    %v3303 = vrot.slane %v3302, 2
    %v3304 = vadd.f32 %v3302, %v3303
    %v3305 = vrot.slane %v3304, 1
    %v3306 = vadd.f32 %v3304, %v3305
    %s3307 = vtos %v3306
    %v3308 = vrcp.pop 31.0
    %s3309 = vtos %v3308
    %s3310 = smul.f32 %s3307, %s3309
    %s3311 = smul.f32 %s3310, 0.2804888
    %s3312 = smax.f32 %s3311, 1e-12
    %3313 = vxpose.xlu0.b32.start [1/16] %v3276, 128
    %3314 = vxpose.xlu0.b32.cont [2/16] 0.0, 128
    %3315 = vxpose.xlu0.b32.cont [3/16] 0.0, 128
    %3316 = vxpose.xlu0.b32.cont [4/16] 0.0, 128
    %3317 = vxpose.xlu0.b32.cont [5/16] 0.0, 128
    %3318 = vxpose.xlu0.b32.cont [6/16] 0.0, 128
    %3319 = vxpose.xlu0.b32.cont [7/16] 0.0, 128
    %3320 = vxpose.xlu0.b32.cont [8/16] 0.0, 128
    %3321 = vxpose.xlu0.b32.cont [9/16] 0.0, 128
    %3322 = vxpose.xlu0.b32.cont [10/16] 0.0, 128
    %3323 = vxpose.xlu0.b32.cont [11/16] 0.0, 128
    %3324 = vxpose.xlu0.b32.cont [12/16] 0.0, 128
    %3325 = vxpose.xlu0.b32.cont [13/16] 0.0, 128
    %3326 = vxpose.xlu0.b32.cont [14/16] 0.0, 128
    %3327 = vxpose.xlu0.b32.cont [15/16] 0.0, 128
    %3328 = vxpose.xlu0.b32.end [16/16] 0.0, 128
    %v3329 = vpop.trf.xlu0
    %v3330 = vpop.trf.xlu0
    %v3331 = vpop.trf.xlu0
    %v3332 = vpop.trf.xlu0
    %v3333 = vpop.trf.xlu0
    %v3334 = vpop.trf.xlu0
    %v3335 = vpop.trf.xlu0
    %v3336 = vpop.trf.xlu0
    %v3337 = vpop.trf.xlu0
    %v3338 = vpop.trf.xlu0
    %v3339 = vpop.trf.xlu0
    %v3340 = vpop.trf.xlu0
    %v3341 = vpop.trf.xlu0
    %v3342 = vpop.trf.xlu0
    %v3343 = vpop.trf.xlu0
    %v3344 = vpop.trf.xlu0
    %3346 = vset.pattern.permute.xlu0 0
    %3347 = vperm.xlu0 %3346, %v3329
    %v3348 = vpop.permute.xlu0 %3347
    %3351 = vset.pattern.permute.xlu0 0
    %3352 = vperm.xlu0 %3351, %v3330
    %v3353 = vpop.permute.xlu0 %3352
    %3356 = vset.pattern.permute.xlu0 0
    %3357 = vperm.xlu0 %3356, %v3331
    %v3358 = vpop.permute.xlu0 %3357
    %3361 = vset.pattern.permute.xlu0 0
    %3362 = vperm.xlu0 %3361, %v3332
    %v3363 = vpop.permute.xlu0 %3362
    %v3365 = vlaneseq
    %v3366 = vshrl.u32 %v3365, 7
    %v3367 = vsub.s32 0, %v3366
    %v3368 = vrot.slane %v3272, %v3367
    %v3369 = vsub.f32 %v3348, %v3368
    %v3370 = vsub.f32 %v3353, %v3368
    %v3371 = vsub.f32 %v3358, %v3368
    %v3372 = vsub.f32 %v3363, %v3368
    %v3373 = vmul.f32 %v3369, -0.5
    %v3374 = vmul.f32 %v3370, -0.5
    %v3375 = vmul.f32 %v3371, -0.5
    %v3376 = vmul.f32 %v3372, -0.5
    %v3377 = vmul.f32 %v3373, %v3369
    %v3378 = vmul.f32 %v3374, %v3370
    %v3379 = vmul.f32 %v3375, %v3371
    %v3380 = vmul.f32 %v3376, %v3372
    %v3381 = vstv %s3312
    %v3382 = vrcp.pop %v3381
    %v3383 = vmul.f32 %v3377, %v3382
    %v3384 = vmul.f32 %v3378, %v3382
    %v3385 = vmul.f32 %v3379, %v3382
    %v3386 = vmul.f32 %v3380, %v3382
    %v3387 = vmul.f32 %v3383, 1.442695
    %v3388 = vpow.pop %v3387
    %v3389 = vmul.f32 %v3384, 1.442695
    %v3390 = vpow.pop %v3389
    %v3391 = vmul.f32 %v3385, 1.442695
    %v3392 = vpow.pop %v3391
    %v3393 = vmul.f32 %v3386, 1.442695
    %v3394 = vpow.pop %v3393
    %3399 = vrot.lane.b32.xlu0 %v3388, 96
    %v3400 = vpop.permute.xlu0 %3399
    %3401 = vrot.lane.b32.xlu0 %v3390, 96
    %v3402 = vpop.permute.xlu0 %3401
    %3403 = vrot.lane.b32.xlu0 %v3392, 96
    %v3404 = vpop.permute.xlu0 %3403
    %3405 = vrot.lane.b32.xlu0 %v3394, 96
    %v3406 = vpop.permute.xlu0 %3405
    %v3411 = vsel %vm37, %v3400, 0.0
    %3412 = vadd.xlane.f32.xlu0 %v3411
    %v3413 = vpop.xlane.xlu0 %3412
    %v3414 = vsel %vm37, %v3402, 0.0
    %3415 = vadd.xlane.f32.xlu0 %v3414
    %v3416 = vpop.xlane.xlu0 %3415
    %v3417 = vsel %vm37, %v3404, 0.0
    %3418 = vadd.xlane.f32.xlu0 %v3417
    %v3419 = vpop.xlane.xlu0 %3418
    %v3420 = vsel %vm37, %v3406, 0.0
    %3421 = vadd.xlane.f32.xlu0 %v3420
    %v3422 = vpop.xlane.xlu0 %3421
    %v3424 = vrot.slane %v3273, 3
    %v3426 = vsel %vm1492, %v3424, 0.0
    %3427 = vadd.xlane.f32.xlu0 %v3426
    %v3428 = vpop.xlane.xlu0 %3427
    %v3429 = vrot.slane %v3428, 4
    %v3430 = vadd.f32 %v3428, %v3429
    %v3431 = vrot.slane %v3430, 2
    %v3432 = vadd.f32 %v3430, %v3431
    %v3433 = vrot.slane %v3432, 1
    %v3434 = vadd.f32 %v3432, %v3433
    %s3435 = vtos %v3434
    %v3436 = vrcp.pop 32.0
    %s3437 = vtos %v3436
    %s3438 = smul.f32 %s3435, %s3437
    %v3439 = vstv %s3438
    %v3440 = vsub.f32 %v3273, %v3439
    %v3441 = vmul.f32 %v3440, %v3440
    %v3443 = vrot.slane %v3441, 3
    %v3445 = vsel %vm1492, %v3443, 0.0
    %3446 = vadd.xlane.f32.xlu0 %v3445
    %v3447 = vpop.xlane.xlu0 %3446
    %v3448 = vrot.slane %v3447, 4
    %v3449 = vadd.f32 %v3447, %v3448
    %v3450 = vrot.slane %v3449, 2
    %v3451 = vadd.f32 %v3449, %v3450
    %v3452 = vrot.slane %v3451, 1
    %v3453 = vadd.f32 %v3451, %v3452
    %s3454 = vtos %v3453
    %v3455 = vrcp.pop 31.0
    %s3456 = vtos %v3455
    %s3457 = smul.f32 %s3454, %s3456
    %s3458 = smul.f32 %s3457, 0.2804888
    %s3459 = smax.f32 %s3458, 1e-12
    %3460 = vxpose.xlu0.b32.start [1/16] %v3424, 128
    %3461 = vxpose.xlu0.b32.cont [2/16] 0.0, 128
    %3462 = vxpose.xlu0.b32.cont [3/16] 0.0, 128
    %3463 = vxpose.xlu0.b32.cont [4/16] 0.0, 128
    %3464 = vxpose.xlu0.b32.cont [5/16] 0.0, 128
    %3465 = vxpose.xlu0.b32.cont [6/16] 0.0, 128
    %3466 = vxpose.xlu0.b32.cont [7/16] 0.0, 128
    %3467 = vxpose.xlu0.b32.cont [8/16] 0.0, 128
    %3468 = vxpose.xlu0.b32.cont [9/16] 0.0, 128
    %3469 = vxpose.xlu0.b32.cont [10/16] 0.0, 128
    %3470 = vxpose.xlu0.b32.cont [11/16] 0.0, 128
    %3471 = vxpose.xlu0.b32.cont [12/16] 0.0, 128
    %3472 = vxpose.xlu0.b32.cont [13/16] 0.0, 128
    %3473 = vxpose.xlu0.b32.cont [14/16] 0.0, 128
    %3474 = vxpose.xlu0.b32.cont [15/16] 0.0, 128
    %3475 = vxpose.xlu0.b32.end [16/16] 0.0, 128
    %v3476 = vpop.trf.xlu0
    %v3477 = vpop.trf.xlu0
    %v3478 = vpop.trf.xlu0
    %v3479 = vpop.trf.xlu0
    %v3480 = vpop.trf.xlu0
    %v3481 = vpop.trf.xlu0
    %v3482 = vpop.trf.xlu0
    %v3483 = vpop.trf.xlu0
    %v3484 = vpop.trf.xlu0
    %v3485 = vpop.trf.xlu0
    %v3486 = vpop.trf.xlu0
    %v3487 = vpop.trf.xlu0
    %v3488 = vpop.trf.xlu0
    %v3489 = vpop.trf.xlu0
    %v3490 = vpop.trf.xlu0
    %v3491 = vpop.trf.xlu0
    %3493 = vset.pattern.permute.xlu0 0
    %3494 = vperm.xlu0 %3493, %v3476
    %v3495 = vpop.permute.xlu0 %3494
    %3498 = vset.pattern.permute.xlu0 0
    %3499 = vperm.xlu0 %3498, %v3477
    %v3500 = vpop.permute.xlu0 %3499
    %3503 = vset.pattern.permute.xlu0 0
    %3504 = vperm.xlu0 %3503, %v3478
    %v3505 = vpop.permute.xlu0 %3504
    %3508 = vset.pattern.permute.xlu0 0
    %3509 = vperm.xlu0 %3508, %v3479
    %v3510 = vpop.permute.xlu0 %3509
    %v3512 = vlaneseq
    %v3513 = vshrl.u32 %v3512, 7
    %v3514 = vsub.s32 3, %v3513
    %v3515 = vrot.slane %v3273, %v3514
    %v3516 = vsub.f32 %v3495, %v3515
    %v3517 = vsub.f32 %v3500, %v3515
    %v3518 = vsub.f32 %v3505, %v3515
    %v3519 = vsub.f32 %v3510, %v3515
    %v3520 = vmul.f32 %v3516, -0.5
    %v3521 = vmul.f32 %v3517, -0.5
    %v3522 = vmul.f32 %v3518, -0.5
    %v3523 = vmul.f32 %v3519, -0.5
    %v3524 = vmul.f32 %v3520, %v3516
    %v3525 = vmul.f32 %v3521, %v3517
    %v3526 = vmul.f32 %v3522, %v3518
    %v3527 = vmul.f32 %v3523, %v3519
    %v3528 = vstv %s3459
    %v3529 = vrcp.pop %v3528
    %v3530 = vmul.f32 %v3524, %v3529
    %v3531 = vmul.f32 %v3525, %v3529
    %v3532 = vmul.f32 %v3526, %v3529
    %v3533 = vmul.f32 %v3527, %v3529
    %v3534 = vmul.f32 %v3530, 1.442695
    %v3535 = vpow.pop %v3534
    %v3536 = vmul.f32 %v3531, 1.442695
    %v3537 = vpow.pop %v3536
    %v3538 = vmul.f32 %v3532, 1.442695
    %v3539 = vpow.pop %v3538
    %v3540 = vmul.f32 %v3533, 1.442695
    %v3541 = vpow.pop %v3540
    %v3542 = vsel %vm37, %v3535, 0.0
    %3543 = vadd.xlane.f32.xlu0 %v3542
    %v3544 = vpop.xlane.xlu0 %3543
    %v3545 = vsel %vm37, %v3537, 0.0
    %3546 = vadd.xlane.f32.xlu0 %v3545
    %v3547 = vpop.xlane.xlu0 %3546
    %v3548 = vsel %vm37, %v3539, 0.0
    %3549 = vadd.xlane.f32.xlu0 %v3548
    %v3550 = vpop.xlane.xlu0 %3549
    %v3551 = vsel %vm37, %v3541, 0.0
    %3552 = vadd.xlane.f32.xlu0 %v3551
    %v3553 = vpop.xlane.xlu0 %3552
    %v3554 = vsel %vm1749, %v3413, 0.0
    %v3555 = vsel %vm1749, %v3416, 0.0
    %v3556 = vadd.f32 %v3554, %v3555
    %v3557 = vsel %vm1749, %v3419, 0.0
    %v3558 = vadd.f32 %v3556, %v3557
    %v3559 = vsel %vm1749, %v3422, 0.0
    %v3560 = vadd.f32 %v3558, %v3559
    %3561 = vadd.xlane.f32.xlu0 %v3560
    %v3562 = vpop.xlane.xlu0 %3561
    %v3563 = vrot.slane %v3562, 4
    %v3564 = vadd.f32 %v3562, %v3563
    %v3565 = vrot.slane %v3564, 2
    %v3566 = vadd.f32 %v3564, %v3565
    %v3567 = vrot.slane %v3566, 1
    %v3568 = vadd.f32 %v3566, %v3567
    %s3569 = vtos %v3568
    %v3570 = vstv %s3569
    %v3571 = vrcp.pop %v3570
    %v3572 = vmul.f32 %v3413, %v3571
    %v3573 = vmul.f32 %v3416, %v3571
    %v3574 = vmul.f32 %v3419, %v3571
    %v3575 = vmul.f32 %v3422, %v3571
    %v3576 = vsel %vm1749, %v3544, 0.0
    %v3577 = vsel %vm1749, %v3547, 0.0
    %v3578 = vadd.f32 %v3576, %v3577
    %v3579 = vsel %vm1749, %v3550, 0.0
    %v3580 = vadd.f32 %v3578, %v3579
    %v3581 = vsel %vm1749, %v3553, 0.0
    %v3582 = vadd.f32 %v3580, %v3581
    %3583 = vadd.xlane.f32.xlu0 %v3582
    %v3584 = vpop.xlane.xlu0 %3583
    %v3585 = vrot.slane %v3584, 4
    %v3586 = vadd.f32 %v3584, %v3585
    %v3587 = vrot.slane %v3586, 2
    %v3588 = vadd.f32 %v3586, %v3587
    %v3589 = vrot.slane %v3588, 1
    %v3590 = vadd.f32 %v3588, %v3589
    %s3591 = vtos %v3590
    %v3592 = vstv %s3591
    %v3593 = vrcp.pop %v3592
    %v3594 = vmul.f32 %v3544, %v3593
    %v3595 = vmul.f32 %v3547, %v3593
    %v3596 = vmul.f32 %v3550, %v3593
    %v3597 = vmul.f32 %v3553, %v3593
    %v3598 = vrcp.pop %v3594
    %v3599 = vmul.f32 %v3572, %v3598
    %v3600 = vrcp.pop %v3595
    %v3601 = vmul.f32 %v3573, %v3600
    %v3602 = vrcp.pop %v3596
    %v3603 = vmul.f32 %v3574, %v3602
    %v3604 = vrcp.pop %v3597
    %v3605 = vmul.f32 %v3575, %v3604
    %v3606 = vlog2.pop %v3599
    %v3607 = vmul.f32 %v3606, 0.6931472
    %v3608 = vlog2.pop %v3601
    %v3609 = vmul.f32 %v3608, 0.6931472
    %v3610 = vlog2.pop %v3603
    %v3611 = vmul.f32 %v3610, 0.6931472
    %v3612 = vlog2.pop %v3605
    %v3613 = vmul.f32 %v3612, 0.6931472
    %v3614 = vmul.f32 %v3572, %v3607
    %v3615 = vmul.f32 %v3573, %v3609
    %v3616 = vmul.f32 %v3574, %v3611
    %v3617 = vmul.f32 %v3575, %v3613
    %v3618 = vsel %vm1749, %v3614, 0.0
    %v3619 = vsel %vm1749, %v3615, 0.0
    %v3620 = vadd.f32 %v3618, %v3619
    %v3621 = vsel %vm1749, %v3616, 0.0
    %v3622 = vadd.f32 %v3620, %v3621
    %v3623 = vsel %vm1749, %v3617, 0.0
    %v3624 = vadd.f32 %v3622, %v3623
    %3625 = vadd.xlane.f32.xlu0 %v3624
    %v3626 = vpop.xlane.xlu0 %3625
    %v3627 = vrot.slane %v3626, 4
    %v3628 = vadd.f32 %v3626, %v3627
    %v3629 = vrot.slane %v3628, 2
    %v3630 = vadd.f32 %v3628, %v3629
    %v3631 = vrot.slane %v3630, 1
    %v3632 = vadd.f32 %v3630, %v3631
    %s3633 = vtos %v3632
    %v3634 = vrot.slane %v36, 4
    %3635 = vrot.lane.b32.xlu0 %v3634, 64
    %v3636 = vpop.permute.xlu0 %3635
    %v3638 = vadd.f32 %v1489, %v3636
    %v3639 = vadd.f32 %v60, %v36
    %3641 = vrot.lane.b32.xlu0 %v3638, 64
    %v3642 = vpop.permute.xlu0 %3641
    %v3644 = vsel %vm1492, %v3642, 0.0
    %3645 = vadd.xlane.f32.xlu0 %v3644
    %v3646 = vpop.xlane.xlu0 %3645
    %v3647 = vrot.slane %v3646, 4
    %v3648 = vadd.f32 %v3646, %v3647
    %v3649 = vrot.slane %v3648, 2
    %v3650 = vadd.f32 %v3648, %v3649
    %v3651 = vrot.slane %v3650, 1
    %v3652 = vadd.f32 %v3650, %v3651
    %s3653 = vtos %v3652
    %v3654 = vrcp.pop 32.0
    %s3655 = vtos %v3654
    %s3656 = smul.f32 %s3653, %s3655
    %v3657 = vstv %s3656
    %v3658 = vsub.f32 %v3638, %v3657
    %v3659 = vmul.f32 %v3658, %v3658
    %3661 = vrot.lane.b32.xlu0 %v3659, 64
    %v3662 = vpop.permute.xlu0 %3661
    %v3664 = vsel %vm1492, %v3662, 0.0
    %3665 = vadd.xlane.f32.xlu0 %v3664
    %v3666 = vpop.xlane.xlu0 %3665
    %v3667 = vrot.slane %v3666, 4
    %v3668 = vadd.f32 %v3666, %v3667
    %v3669 = vrot.slane %v3668, 2
    %v3670 = vadd.f32 %v3668, %v3669
    %v3671 = vrot.slane %v3670, 1
    %v3672 = vadd.f32 %v3670, %v3671
    %s3673 = vtos %v3672
    %v3674 = vrcp.pop 31.0
    %s3675 = vtos %v3674
    %s3676 = smul.f32 %s3673, %s3675
    %s3677 = smul.f32 %s3676, 0.2804888
    %s3678 = smax.f32 %s3677, 1e-12
    %3679 = vxpose.xlu0.b32.start [1/16] %v3642, 128
    %3680 = vxpose.xlu0.b32.cont [2/16] 0.0, 128
    %3681 = vxpose.xlu0.b32.cont [3/16] 0.0, 128
    %3682 = vxpose.xlu0.b32.cont [4/16] 0.0, 128
    %3683 = vxpose.xlu0.b32.cont [5/16] 0.0, 128
    %3684 = vxpose.xlu0.b32.cont [6/16] 0.0, 128
    %3685 = vxpose.xlu0.b32.cont [7/16] 0.0, 128
    %3686 = vxpose.xlu0.b32.cont [8/16] 0.0, 128
    %3687 = vxpose.xlu0.b32.cont [9/16] 0.0, 128
    %3688 = vxpose.xlu0.b32.cont [10/16] 0.0, 128
    %3689 = vxpose.xlu0.b32.cont [11/16] 0.0, 128
    %3690 = vxpose.xlu0.b32.cont [12/16] 0.0, 128
    %3691 = vxpose.xlu0.b32.cont [13/16] 0.0, 128
    %3692 = vxpose.xlu0.b32.cont [14/16] 0.0, 128
    %3693 = vxpose.xlu0.b32.cont [15/16] 0.0, 128
    %3694 = vxpose.xlu0.b32.end [16/16] 0.0, 128
    %v3695 = vpop.trf.xlu0
    %v3696 = vpop.trf.xlu0
    %v3697 = vpop.trf.xlu0
    %v3698 = vpop.trf.xlu0
    %v3699 = vpop.trf.xlu0
    %v3700 = vpop.trf.xlu0
    %v3701 = vpop.trf.xlu0
    %v3702 = vpop.trf.xlu0
    %v3703 = vpop.trf.xlu0
    %v3704 = vpop.trf.xlu0
    %v3705 = vpop.trf.xlu0
    %v3706 = vpop.trf.xlu0
    %v3707 = vpop.trf.xlu0
    %v3708 = vpop.trf.xlu0
    %v3709 = vpop.trf.xlu0
    %v3710 = vpop.trf.xlu0
    %3712 = vset.pattern.permute.xlu0 0
    %3713 = vperm.xlu0 %3712, %v3695
    %v3714 = vpop.permute.xlu0 %3713
    %3717 = vset.pattern.permute.xlu0 0
    %3718 = vperm.xlu0 %3717, %v3696
    %v3719 = vpop.permute.xlu0 %3718
    %3722 = vset.pattern.permute.xlu0 0
    %3723 = vperm.xlu0 %3722, %v3697
    %v3724 = vpop.permute.xlu0 %3723
    %3727 = vset.pattern.permute.xlu0 0
    %3728 = vperm.xlu0 %3727, %v3698
    %v3729 = vpop.permute.xlu0 %3728
    %v3731 = vlaneseq
    %v3732 = vshrl.u32 %v3731, 7
    %v3733 = vsub.s32 0, %v3732
    %v3734 = vrot.slane %v3638, %v3733
    %v3735 = vsub.f32 %v3714, %v3734
    %v3736 = vsub.f32 %v3719, %v3734
    %v3737 = vsub.f32 %v3724, %v3734
    %v3738 = vsub.f32 %v3729, %v3734
    %v3739 = vmul.f32 %v3735, -0.5
    %v3740 = vmul.f32 %v3736, -0.5
    %v3741 = vmul.f32 %v3737, -0.5
    %v3742 = vmul.f32 %v3738, -0.5
    %v3743 = vmul.f32 %v3739, %v3735
    %v3744 = vmul.f32 %v3740, %v3736
    %v3745 = vmul.f32 %v3741, %v3737
    %v3746 = vmul.f32 %v3742, %v3738
    %v3747 = vstv %s3678
    %v3748 = vrcp.pop %v3747
    %v3749 = vmul.f32 %v3743, %v3748
    %v3750 = vmul.f32 %v3744, %v3748
    %v3751 = vmul.f32 %v3745, %v3748
    %v3752 = vmul.f32 %v3746, %v3748
    %v3753 = vmul.f32 %v3749, 1.442695
    %v3754 = vpow.pop %v3753
    %v3755 = vmul.f32 %v3750, 1.442695
    %v3756 = vpow.pop %v3755
    %v3757 = vmul.f32 %v3751, 1.442695
    %v3758 = vpow.pop %v3757
    %v3759 = vmul.f32 %v3752, 1.442695
    %v3760 = vpow.pop %v3759
    %3765 = vrot.lane.b32.xlu0 %v3754, 64
    %v3766 = vpop.permute.xlu0 %3765
    %3767 = vrot.lane.b32.xlu0 %v3756, 64
    %v3768 = vpop.permute.xlu0 %3767
    %3769 = vrot.lane.b32.xlu0 %v3758, 64
    %v3770 = vpop.permute.xlu0 %3769
    %3771 = vrot.lane.b32.xlu0 %v3760, 64
    %v3772 = vpop.permute.xlu0 %3771
    %v3777 = vsel %vm37, %v3766, 0.0
    %3778 = vadd.xlane.f32.xlu0 %v3777
    %v3779 = vpop.xlane.xlu0 %3778
    %v3780 = vsel %vm37, %v3768, 0.0
    %3781 = vadd.xlane.f32.xlu0 %v3780
    %v3782 = vpop.xlane.xlu0 %3781
    %v3783 = vsel %vm37, %v3770, 0.0
    %3784 = vadd.xlane.f32.xlu0 %v3783
    %v3785 = vpop.xlane.xlu0 %3784
    %v3786 = vsel %vm37, %v3772, 0.0
    %3787 = vadd.xlane.f32.xlu0 %v3786
    %v3788 = vpop.xlane.xlu0 %3787
    %v3790 = vrot.slane %v3639, 5
    %v3792 = vsel %vm1492, %v3790, 0.0
    %3793 = vadd.xlane.f32.xlu0 %v3792
    %v3794 = vpop.xlane.xlu0 %3793
    %v3795 = vrot.slane %v3794, 4
    %v3796 = vadd.f32 %v3794, %v3795
    %v3797 = vrot.slane %v3796, 2
    %v3798 = vadd.f32 %v3796, %v3797
    %v3799 = vrot.slane %v3798, 1
    %v3800 = vadd.f32 %v3798, %v3799
    %s3801 = vtos %v3800
    %v3802 = vrcp.pop 32.0
    %s3803 = vtos %v3802
    %s3804 = smul.f32 %s3801, %s3803
    %v3805 = vstv %s3804
    %v3806 = vsub.f32 %v3639, %v3805
    %v3807 = vmul.f32 %v3806, %v3806
    %v3809 = vrot.slane %v3807, 5
    %v3811 = vsel %vm1492, %v3809, 0.0
    %3812 = vadd.xlane.f32.xlu0 %v3811
    %v3813 = vpop.xlane.xlu0 %3812
    %v3814 = vrot.slane %v3813, 4
    %v3815 = vadd.f32 %v3813, %v3814
    %v3816 = vrot.slane %v3815, 2
    %v3817 = vadd.f32 %v3815, %v3816
    %v3818 = vrot.slane %v3817, 1
    %v3819 = vadd.f32 %v3817, %v3818
    %s3820 = vtos %v3819
    %v3821 = vrcp.pop 31.0
    %s3822 = vtos %v3821
    %s3823 = smul.f32 %s3820, %s3822
    %s3824 = smul.f32 %s3823, 0.2804888
    %s3825 = smax.f32 %s3824, 1e-12
    %3826 = vxpose.xlu0.b32.start [1/16] %v3790, 128
    %3827 = vxpose.xlu0.b32.cont [2/16] 0.0, 128
    %3828 = vxpose.xlu0.b32.cont [3/16] 0.0, 128
    %3829 = vxpose.xlu0.b32.cont [4/16] 0.0, 128
    %3830 = vxpose.xlu0.b32.cont [5/16] 0.0, 128
    %3831 = vxpose.xlu0.b32.cont [6/16] 0.0, 128
    %3832 = vxpose.xlu0.b32.cont [7/16] 0.0, 128
    %3833 = vxpose.xlu0.b32.cont [8/16] 0.0, 128
    %3834 = vxpose.xlu0.b32.cont [9/16] 0.0, 128
    %3835 = vxpose.xlu0.b32.cont [10/16] 0.0, 128
    %3836 = vxpose.xlu0.b32.cont [11/16] 0.0, 128
    %3837 = vxpose.xlu0.b32.cont [12/16] 0.0, 128
    %3838 = vxpose.xlu0.b32.cont [13/16] 0.0, 128
    %3839 = vxpose.xlu0.b32.cont [14/16] 0.0, 128
    %3840 = vxpose.xlu0.b32.cont [15/16] 0.0, 128
    %3841 = vxpose.xlu0.b32.end [16/16] 0.0, 128
    %v3842 = vpop.trf.xlu0
    %v3843 = vpop.trf.xlu0
    %v3844 = vpop.trf.xlu0
    %v3845 = vpop.trf.xlu0
    %v3846 = vpop.trf.xlu0
    %v3847 = vpop.trf.xlu0
    %v3848 = vpop.trf.xlu0
    %v3849 = vpop.trf.xlu0
    %v3850 = vpop.trf.xlu0
    %v3851 = vpop.trf.xlu0
    %v3852 = vpop.trf.xlu0
    %v3853 = vpop.trf.xlu0
    %v3854 = vpop.trf.xlu0
    %v3855 = vpop.trf.xlu0
    %v3856 = vpop.trf.xlu0
    %v3857 = vpop.trf.xlu0
    %3859 = vset.pattern.permute.xlu0 0
    %3860 = vperm.xlu0 %3859, %v3842
    %v3861 = vpop.permute.xlu0 %3860
    %3864 = vset.pattern.permute.xlu0 0
    %3865 = vperm.xlu0 %3864, %v3843
    %v3866 = vpop.permute.xlu0 %3865
    %3869 = vset.pattern.permute.xlu0 0
    %3870 = vperm.xlu0 %3869, %v3844
    %v3871 = vpop.permute.xlu0 %3870
    %3874 = vset.pattern.permute.xlu0 0
    %3875 = vperm.xlu0 %3874, %v3845
    %v3876 = vpop.permute.xlu0 %3875
    %v3878 = vlaneseq
    %v3879 = vshrl.u32 %v3878, 7
    %v3880 = vsub.s32 5, %v3879
    %v3881 = vrot.slane %v3639, %v3880
    %v3882 = vsub.f32 %v3861, %v3881
    %v3883 = vsub.f32 %v3866, %v3881
    %v3884 = vsub.f32 %v3871, %v3881
    %v3885 = vsub.f32 %v3876, %v3881
    %v3886 = vmul.f32 %v3882, -0.5
    %v3887 = vmul.f32 %v3883, -0.5
    %v3888 = vmul.f32 %v3884, -0.5
    %v3889 = vmul.f32 %v3885, -0.5
    %v3890 = vmul.f32 %v3886, %v3882
    %v3891 = vmul.f32 %v3887, %v3883
    %v3892 = vmul.f32 %v3888, %v3884
    %v3893 = vmul.f32 %v3889, %v3885
    %v3894 = vstv %s3825
    %v3895 = vrcp.pop %v3894
    %v3896 = vmul.f32 %v3890, %v3895
    %v3897 = vmul.f32 %v3891, %v3895
    %v3898 = vmul.f32 %v3892, %v3895
    %v3899 = vmul.f32 %v3893, %v3895
    %v3900 = vmul.f32 %v3896, 1.442695
    %v3901 = vpow.pop %v3900
    %v3902 = vmul.f32 %v3897, 1.442695
    %v3903 = vpow.pop %v3902
    %v3904 = vmul.f32 %v3898, 1.442695
    %v3905 = vpow.pop %v3904
    %v3906 = vmul.f32 %v3899, 1.442695
    %v3907 = vpow.pop %v3906
    %v3908 = vsel %vm37, %v3901, 0.0
    %3909 = vadd.xlane.f32.xlu0 %v3908
    %v3910 = vpop.xlane.xlu0 %3909
    %v3911 = vsel %vm37, %v3903, 0.0
    %3912 = vadd.xlane.f32.xlu0 %v3911
    %v3913 = vpop.xlane.xlu0 %3912
    %v3914 = vsel %vm37, %v3905, 0.0
    %3915 = vadd.xlane.f32.xlu0 %v3914
    %v3916 = vpop.xlane.xlu0 %3915
    %v3917 = vsel %vm37, %v3907, 0.0
    %3918 = vadd.xlane.f32.xlu0 %v3917
    %v3919 = vpop.xlane.xlu0 %3918
    %v3920 = vsel %vm1749, %v3779, 0.0
    %v3921 = vsel %vm1749, %v3782, 0.0
    %v3922 = vadd.f32 %v3920, %v3921
    %v3923 = vsel %vm1749, %v3785, 0.0
    %v3924 = vadd.f32 %v3922, %v3923
    %v3925 = vsel %vm1749, %v3788, 0.0
    %v3926 = vadd.f32 %v3924, %v3925
    %3927 = vadd.xlane.f32.xlu0 %v3926
    %v3928 = vpop.xlane.xlu0 %3927
    %v3929 = vrot.slane %v3928, 4
    %v3930 = vadd.f32 %v3928, %v3929
    %v3931 = vrot.slane %v3930, 2
    %v3932 = vadd.f32 %v3930, %v3931
    %v3933 = vrot.slane %v3932, 1
    %v3934 = vadd.f32 %v3932, %v3933
    %s3935 = vtos %v3934
    %v3936 = vstv %s3935
    %v3937 = vrcp.pop %v3936
    %v3938 = vmul.f32 %v3779, %v3937
    %v3939 = vmul.f32 %v3782, %v3937
    %v3940 = vmul.f32 %v3785, %v3937
    %v3941 = vmul.f32 %v3788, %v3937
    %v3942 = vsel %vm1749, %v3910, 0.0
    %v3943 = vsel %vm1749, %v3913, 0.0
    %v3944 = vadd.f32 %v3942, %v3943
    %v3945 = vsel %vm1749, %v3916, 0.0
    %v3946 = vadd.f32 %v3944, %v3945
    %v3947 = vsel %vm1749, %v3919, 0.0
    %v3948 = vadd.f32 %v3946, %v3947
    %3949 = vadd.xlane.f32.xlu0 %v3948
    %v3950 = vpop.xlane.xlu0 %3949
    %v3951 = vrot.slane %v3950, 4
    %v3952 = vadd.f32 %v3950, %v3951
    %v3953 = vrot.slane %v3952, 2
    %v3954 = vadd.f32 %v3952, %v3953
    %v3955 = vrot.slane %v3954, 1
    %v3956 = vadd.f32 %v3954, %v3955
    %s3957 = vtos %v3956
    %v3958 = vstv %s3957
    %v3959 = vrcp.pop %v3958
    %v3960 = vmul.f32 %v3910, %v3959
    %v3961 = vmul.f32 %v3913, %v3959
    %v3962 = vmul.f32 %v3916, %v3959
    %v3963 = vmul.f32 %v3919, %v3959
    %v3964 = vrcp.pop %v3960
    %v3965 = vmul.f32 %v3938, %v3964
    %v3966 = vrcp.pop %v3961
    %v3967 = vmul.f32 %v3939, %v3966
    %v3968 = vrcp.pop %v3962
    %v3969 = vmul.f32 %v3940, %v3968
    %v3970 = vrcp.pop %v3963
    %v3971 = vmul.f32 %v3941, %v3970
    %v3972 = vlog2.pop %v3965
    %v3973 = vmul.f32 %v3972, 0.6931472
    %v3974 = vlog2.pop %v3967
    %v3975 = vmul.f32 %v3974, 0.6931472
    %v3976 = vlog2.pop %v3969
    %v3977 = vmul.f32 %v3976, 0.6931472
    %v3978 = vlog2.pop %v3971
    %v3979 = vmul.f32 %v3978, 0.6931472
    %v3980 = vmul.f32 %v3938, %v3973
    %v3981 = vmul.f32 %v3939, %v3975
    %v3982 = vmul.f32 %v3940, %v3977
    %v3983 = vmul.f32 %v3941, %v3979
    %v3984 = vsel %vm1749, %v3980, 0.0
    %v3985 = vsel %vm1749, %v3981, 0.0
    %v3986 = vadd.f32 %v3984, %v3985
    %v3987 = vsel %vm1749, %v3982, 0.0
    %v3988 = vadd.f32 %v3986, %v3987
    %v3989 = vsel %vm1749, %v3983, 0.0
    %v3990 = vadd.f32 %v3988, %v3989
    %3991 = vadd.xlane.f32.xlu0 %v3990
    %v3992 = vpop.xlane.xlu0 %3991
    %v3993 = vrot.slane %v3992, 4
    %v3994 = vadd.f32 %v3992, %v3993
    %v3995 = vrot.slane %v3994, 2
    %v3996 = vadd.f32 %v3994, %v3995
    %v3997 = vrot.slane %v3996, 1
    %v3998 = vadd.f32 %v3996, %v3997
    %s3999 = vtos %v3998
    %v4000 = vrot.slane %v36, 6
    %4001 = vrot.lane.b32.xlu0 %v4000, 96
    %v4002 = vpop.permute.xlu0 %4001
    %v4004 = vadd.f32 %v1489, %v4002
    %v4005 = vadd.f32 %v68, %v36
    %4007 = vrot.lane.b32.xlu0 %v4004, 32
    %v4008 = vpop.permute.xlu0 %4007
    %v4010 = vsel %vm1492, %v4008, 0.0
    %4011 = vadd.xlane.f32.xlu0 %v4010
    %v4012 = vpop.xlane.xlu0 %4011
    %v4013 = vrot.slane %v4012, 4
    %v4014 = vadd.f32 %v4012, %v4013
    %v4015 = vrot.slane %v4014, 2
    %v4016 = vadd.f32 %v4014, %v4015
    %v4017 = vrot.slane %v4016, 1
    %v4018 = vadd.f32 %v4016, %v4017
    %s4019 = vtos %v4018
    %v4020 = vrcp.pop 32.0
    %s4021 = vtos %v4020
    %s4022 = smul.f32 %s4019, %s4021
    %v4023 = vstv %s4022
    %v4024 = vsub.f32 %v4004, %v4023
    %v4025 = vmul.f32 %v4024, %v4024
    %4027 = vrot.lane.b32.xlu0 %v4025, 32
    %v4028 = vpop.permute.xlu0 %4027
    %v4030 = vsel %vm1492, %v4028, 0.0
    %4031 = vadd.xlane.f32.xlu0 %v4030
    %v4032 = vpop.xlane.xlu0 %4031
    %v4033 = vrot.slane %v4032, 4
    %v4034 = vadd.f32 %v4032, %v4033
    %v4035 = vrot.slane %v4034, 2
    %v4036 = vadd.f32 %v4034, %v4035
    %v4037 = vrot.slane %v4036, 1
    %v4038 = vadd.f32 %v4036, %v4037
    %s4039 = vtos %v4038
    %v4040 = vrcp.pop 31.0
    %s4041 = vtos %v4040
    %s4042 = smul.f32 %s4039, %s4041
    %s4043 = smul.f32 %s4042, 0.2804888
    %s4044 = smax.f32 %s4043, 1e-12
    %4045 = vxpose.xlu0.b32.start [1/16] %v4008, 128
    %4046 = vxpose.xlu0.b32.cont [2/16] 0.0, 128
    %4047 = vxpose.xlu0.b32.cont [3/16] 0.0, 128
    %4048 = vxpose.xlu0.b32.cont [4/16] 0.0, 128
    %4049 = vxpose.xlu0.b32.cont [5/16] 0.0, 128
    %4050 = vxpose.xlu0.b32.cont [6/16] 0.0, 128
    %4051 = vxpose.xlu0.b32.cont [7/16] 0.0, 128
    %4052 = vxpose.xlu0.b32.cont [8/16] 0.0, 128
    %4053 = vxpose.xlu0.b32.cont [9/16] 0.0, 128
    %4054 = vxpose.xlu0.b32.cont [10/16] 0.0, 128
    %4055 = vxpose.xlu0.b32.cont [11/16] 0.0, 128
    %4056 = vxpose.xlu0.b32.cont [12/16] 0.0, 128
    %4057 = vxpose.xlu0.b32.cont [13/16] 0.0, 128
    %4058 = vxpose.xlu0.b32.cont [14/16] 0.0, 128
    %4059 = vxpose.xlu0.b32.cont [15/16] 0.0, 128
    %4060 = vxpose.xlu0.b32.end [16/16] 0.0, 128
    %v4061 = vpop.trf.xlu0
    %v4062 = vpop.trf.xlu0
    %v4063 = vpop.trf.xlu0
    %v4064 = vpop.trf.xlu0
    %v4065 = vpop.trf.xlu0
    %v4066 = vpop.trf.xlu0
    %v4067 = vpop.trf.xlu0
    %v4068 = vpop.trf.xlu0
    %v4069 = vpop.trf.xlu0
    %v4070 = vpop.trf.xlu0
    %v4071 = vpop.trf.xlu0
    %v4072 = vpop.trf.xlu0
    %v4073 = vpop.trf.xlu0
    %v4074 = vpop.trf.xlu0
    %v4075 = vpop.trf.xlu0
    %v4076 = vpop.trf.xlu0
    %4078 = vset.pattern.permute.xlu0 0
    %4079 = vperm.xlu0 %4078, %v4061
    %v4080 = vpop.permute.xlu0 %4079
    %4083 = vset.pattern.permute.xlu0 0
    %4084 = vperm.xlu0 %4083, %v4062
    %v4085 = vpop.permute.xlu0 %4084
    %4088 = vset.pattern.permute.xlu0 0
    %4089 = vperm.xlu0 %4088, %v4063
    %v4090 = vpop.permute.xlu0 %4089
    %4093 = vset.pattern.permute.xlu0 0
    %4094 = vperm.xlu0 %4093, %v4064
    %v4095 = vpop.permute.xlu0 %4094
    %v4097 = vlaneseq
    %v4098 = vshrl.u32 %v4097, 7
    %v4099 = vsub.s32 0, %v4098
    %v4100 = vrot.slane %v4004, %v4099
    %v4101 = vsub.f32 %v4080, %v4100
    %v4102 = vsub.f32 %v4085, %v4100
    %v4103 = vsub.f32 %v4090, %v4100
    %v4104 = vsub.f32 %v4095, %v4100
    %v4105 = vmul.f32 %v4101, -0.5
    %v4106 = vmul.f32 %v4102, -0.5
    %v4107 = vmul.f32 %v4103, -0.5
    %v4108 = vmul.f32 %v4104, -0.5
    %v4109 = vmul.f32 %v4105, %v4101
    %v4110 = vmul.f32 %v4106, %v4102
    %v4111 = vmul.f32 %v4107, %v4103
    %v4112 = vmul.f32 %v4108, %v4104
    %v4113 = vstv %s4044
    %v4114 = vrcp.pop %v4113
    %v4115 = vmul.f32 %v4109, %v4114
    %v4116 = vmul.f32 %v4110, %v4114
    %v4117 = vmul.f32 %v4111, %v4114
    %v4118 = vmul.f32 %v4112, %v4114
    %v4119 = vmul.f32 %v4115, 1.442695
    %v4120 = vpow.pop %v4119
    %v4121 = vmul.f32 %v4116, 1.442695
    %v4122 = vpow.pop %v4121
    %v4123 = vmul.f32 %v4117, 1.442695
    %v4124 = vpow.pop %v4123
    %v4125 = vmul.f32 %v4118, 1.442695
    %v4126 = vpow.pop %v4125
    %4131 = vrot.lane.b32.xlu0 %v4120, 32
    %v4132 = vpop.permute.xlu0 %4131
    %4133 = vrot.lane.b32.xlu0 %v4122, 32
    %v4134 = vpop.permute.xlu0 %4133
    %4135 = vrot.lane.b32.xlu0 %v4124, 32
    %v4136 = vpop.permute.xlu0 %4135
    %4137 = vrot.lane.b32.xlu0 %v4126, 32
    %v4138 = vpop.permute.xlu0 %4137
    %v4143 = vsel %vm37, %v4132, 0.0
    %4144 = vadd.xlane.f32.xlu0 %v4143
    %v4145 = vpop.xlane.xlu0 %4144
    %v4146 = vsel %vm37, %v4134, 0.0
    %4147 = vadd.xlane.f32.xlu0 %v4146
    %v4148 = vpop.xlane.xlu0 %4147
    %v4149 = vsel %vm37, %v4136, 0.0
    %4150 = vadd.xlane.f32.xlu0 %v4149
    %v4151 = vpop.xlane.xlu0 %4150
    %v4152 = vsel %vm37, %v4138, 0.0
    %4153 = vadd.xlane.f32.xlu0 %v4152
    %v4154 = vpop.xlane.xlu0 %4153
    %v4156 = vrot.slane %v4005, 7
    %v4158 = vsel %vm1492, %v4156, 0.0
    %4159 = vadd.xlane.f32.xlu0 %v4158
    %v4160 = vpop.xlane.xlu0 %4159
    %v4161 = vrot.slane %v4160, 4
    %v4162 = vadd.f32 %v4160, %v4161
    %v4163 = vrot.slane %v4162, 2
    %v4164 = vadd.f32 %v4162, %v4163
    %v4165 = vrot.slane %v4164, 1
    %v4166 = vadd.f32 %v4164, %v4165
    %s4167 = vtos %v4166
    %v4168 = vrcp.pop 32.0
    %s4169 = vtos %v4168
    %s4170 = smul.f32 %s4167, %s4169
    %v4171 = vstv %s4170
    %v4172 = vsub.f32 %v4005, %v4171
    %v4173 = vmul.f32 %v4172, %v4172
    %v4175 = vrot.slane %v4173, 7
    %v4177 = vsel %vm1492, %v4175, 0.0
    %4178 = vadd.xlane.f32.xlu0 %v4177
    %v4179 = vpop.xlane.xlu0 %4178
    %v4180 = vrot.slane %v4179, 4
    %v4181 = vadd.f32 %v4179, %v4180
    %v4182 = vrot.slane %v4181, 2
    %v4183 = vadd.f32 %v4181, %v4182
    %v4184 = vrot.slane %v4183, 1
    %v4185 = vadd.f32 %v4183, %v4184
    %s4186 = vtos %v4185
    %v4187 = vrcp.pop 31.0
    %s4188 = vtos %v4187
    %s4189 = smul.f32 %s4186, %s4188
    %s4190 = smul.f32 %s4189, 0.2804888
    %s4191 = smax.f32 %s4190, 1e-12
    %4192 = vxpose.xlu0.b32.start [1/16] %v4156, 128
    %4193 = vxpose.xlu0.b32.cont [2/16] 0.0, 128
    %4194 = vxpose.xlu0.b32.cont [3/16] 0.0, 128
    %4195 = vxpose.xlu0.b32.cont [4/16] 0.0, 128
    %4196 = vxpose.xlu0.b32.cont [5/16] 0.0, 128
    %4197 = vxpose.xlu0.b32.cont [6/16] 0.0, 128
    %4198 = vxpose.xlu0.b32.cont [7/16] 0.0, 128
    %4199 = vxpose.xlu0.b32.cont [8/16] 0.0, 128
    %4200 = vxpose.xlu0.b32.cont [9/16] 0.0, 128
    %4201 = vxpose.xlu0.b32.cont [10/16] 0.0, 128
    %4202 = vxpose.xlu0.b32.cont [11/16] 0.0, 128
    %4203 = vxpose.xlu0.b32.cont [12/16] 0.0, 128
    %4204 = vxpose.xlu0.b32.cont [13/16] 0.0, 128
    %4205 = vxpose.xlu0.b32.cont [14/16] 0.0, 128
    %4206 = vxpose.xlu0.b32.cont [15/16] 0.0, 128
    %4207 = vxpose.xlu0.b32.end [16/16] 0.0, 128
    %v4208 = vpop.trf.xlu0
    %v4209 = vpop.trf.xlu0
    %v4210 = vpop.trf.xlu0
    %v4211 = vpop.trf.xlu0
    %v4212 = vpop.trf.xlu0
    %v4213 = vpop.trf.xlu0
    %v4214 = vpop.trf.xlu0
    %v4215 = vpop.trf.xlu0
    %v4216 = vpop.trf.xlu0
    %v4217 = vpop.trf.xlu0
    %v4218 = vpop.trf.xlu0
    %v4219 = vpop.trf.xlu0
    %v4220 = vpop.trf.xlu0
    %v4221 = vpop.trf.xlu0
    %v4222 = vpop.trf.xlu0
    %v4223 = vpop.trf.xlu0
    %4225 = vset.pattern.permute.xlu0 0
    %4226 = vperm.xlu0 %4225, %v4208
    %v4227 = vpop.permute.xlu0 %4226
    %4230 = vset.pattern.permute.xlu0 0
    %4231 = vperm.xlu0 %4230, %v4209
    %v4232 = vpop.permute.xlu0 %4231
    %4235 = vset.pattern.permute.xlu0 0
    %4236 = vperm.xlu0 %4235, %v4210
    %v4237 = vpop.permute.xlu0 %4236
    %4240 = vset.pattern.permute.xlu0 0
    %4241 = vperm.xlu0 %4240, %v4211
    %v4242 = vpop.permute.xlu0 %4241
    %v4244 = vlaneseq
    %v4245 = vshrl.u32 %v4244, 7
    %v4246 = vsub.s32 7, %v4245
    %v4247 = vrot.slane %v4005, %v4246
    %v4248 = vsub.f32 %v4227, %v4247
    %v4249 = vsub.f32 %v4232, %v4247
    %v4250 = vsub.f32 %v4237, %v4247
    %v4251 = vsub.f32 %v4242, %v4247
    %v4252 = vmul.f32 %v4248, -0.5
    %v4253 = vmul.f32 %v4249, -0.5
    %v4254 = vmul.f32 %v4250, -0.5
    %v4255 = vmul.f32 %v4251, -0.5
    %v4256 = vmul.f32 %v4252, %v4248
    %v4257 = vmul.f32 %v4253, %v4249
    %v4258 = vmul.f32 %v4254, %v4250
    %v4259 = vmul.f32 %v4255, %v4251
    %v4260 = vstv %s4191
    %v4261 = vrcp.pop %v4260
    %v4262 = vmul.f32 %v4256, %v4261
    %v4263 = vmul.f32 %v4257, %v4261
    %v4264 = vmul.f32 %v4258, %v4261
    %v4265 = vmul.f32 %v4259, %v4261
    %v4266 = vmul.f32 %v4262, 1.442695
    %v4267 = vpow.pop %v4266
    %v4268 = vmul.f32 %v4263, 1.442695
    %v4269 = vpow.pop %v4268
    %v4270 = vmul.f32 %v4264, 1.442695
    %v4271 = vpow.pop %v4270
    %v4272 = vmul.f32 %v4265, 1.442695
    %v4273 = vpow.pop %v4272
    %v4274 = vsel %vm37, %v4267, 0.0
    %4275 = vadd.xlane.f32.xlu0 %v4274
    %v4276 = vpop.xlane.xlu0 %4275
    %v4277 = vsel %vm37, %v4269, 0.0
    %4278 = vadd.xlane.f32.xlu0 %v4277
    %v4279 = vpop.xlane.xlu0 %4278
    %v4280 = vsel %vm37, %v4271, 0.0
    %4281 = vadd.xlane.f32.xlu0 %v4280
    %v4282 = vpop.xlane.xlu0 %4281
    %v4283 = vsel %vm37, %v4273, 0.0
    %4284 = vadd.xlane.f32.xlu0 %v4283
    %v4285 = vpop.xlane.xlu0 %4284
    %v4286 = vsel %vm1749, %v4145, 0.0
    %v4287 = vsel %vm1749, %v4148, 0.0
    %v4288 = vadd.f32 %v4286, %v4287
    %v4289 = vsel %vm1749, %v4151, 0.0
    %v4290 = vadd.f32 %v4288, %v4289
    %v4291 = vsel %vm1749, %v4154, 0.0
    %v4292 = vadd.f32 %v4290, %v4291
    %4293 = vadd.xlane.f32.xlu0 %v4292
    %v4294 = vpop.xlane.xlu0 %4293
    %v4295 = vrot.slane %v4294, 4
    %v4296 = vadd.f32 %v4294, %v4295
    %v4297 = vrot.slane %v4296, 2
    %v4298 = vadd.f32 %v4296, %v4297
    %v4299 = vrot.slane %v4298, 1
    %v4300 = vadd.f32 %v4298, %v4299
    %s4301 = vtos %v4300
    %v4302 = vstv %s4301
    %v4303 = vrcp.pop %v4302
    %v4304 = vmul.f32 %v4145, %v4303
    %v4305 = vmul.f32 %v4148, %v4303
    %v4306 = vmul.f32 %v4151, %v4303
    %v4307 = vmul.f32 %v4154, %v4303
    %v4308 = vsel %vm1749, %v4276, 0.0
    %v4309 = vsel %vm1749, %v4279, 0.0
    %v4310 = vadd.f32 %v4308, %v4309
    %v4311 = vsel %vm1749, %v4282, 0.0
    %v4312 = vadd.f32 %v4310, %v4311
    %v4313 = vsel %vm1749, %v4285, 0.0
    %v4314 = vadd.f32 %v4312, %v4313
    %4315 = vadd.xlane.f32.xlu0 %v4314
    %v4316 = vpop.xlane.xlu0 %4315
    %v4317 = vrot.slane %v4316, 4
    %v4318 = vadd.f32 %v4316, %v4317
    %v4319 = vrot.slane %v4318, 2
    %v4320 = vadd.f32 %v4318, %v4319
    %v4321 = vrot.slane %v4320, 1
    %v4322 = vadd.f32 %v4320, %v4321
    %s4323 = vtos %v4322
    %v4324 = vstv %s4323
    %v4325 = vrcp.pop %v4324
    %v4326 = vmul.f32 %v4276, %v4325
    %v4327 = vmul.f32 %v4279, %v4325
    %v4328 = vmul.f32 %v4282, %v4325
    %v4329 = vmul.f32 %v4285, %v4325
    %v4330 = vrcp.pop %v4326
    %v4331 = vmul.f32 %v4304, %v4330
    %v4332 = vrcp.pop %v4327
    %v4333 = vmul.f32 %v4305, %v4332
    %v4334 = vrcp.pop %v4328
    %v4335 = vmul.f32 %v4306, %v4334
    %v4336 = vrcp.pop %v4329
    %v4337 = vmul.f32 %v4307, %v4336
    %v4338 = vlog2.pop %v4331
    %v4339 = vmul.f32 %v4338, 0.6931472
    %v4340 = vlog2.pop %v4333
    %v4341 = vmul.f32 %v4340, 0.6931472
    %v4342 = vlog2.pop %v4335
    %v4343 = vmul.f32 %v4342, 0.6931472
    %v4344 = vlog2.pop %v4337
    %v4345 = vmul.f32 %v4344, 0.6931472
    %v4346 = vmul.f32 %v4304, %v4339
    %v4347 = vmul.f32 %v4305, %v4341
    %v4348 = vmul.f32 %v4306, %v4343
    %v4349 = vmul.f32 %v4307, %v4345
    %v4350 = vsel %vm1749, %v4346, 0.0
    %v4351 = vsel %vm1749, %v4347, 0.0
    %v4352 = vadd.f32 %v4350, %v4351
    %v4353 = vsel %vm1749, %v4348, 0.0
    %v4354 = vadd.f32 %v4352, %v4353
    %v4355 = vsel %vm1749, %v4349, 0.0
    %v4356 = vadd.f32 %v4354, %v4355
    %4357 = vadd.xlane.f32.xlu0 %v4356
    %v4358 = vpop.xlane.xlu0 %4357
    %v4359 = vrot.slane %v4358, 4
    %v4360 = vadd.f32 %v4358, %v4359
    %v4361 = vrot.slane %v4360, 2
    %v4362 = vadd.f32 %v4360, %v4361
    %v4363 = vrot.slane %v4362, 1
    %v4364 = vadd.f32 %v4362, %v4363
    %s4365 = vtos %v4364
    %s4366 = sadd.f32 %s1829, %s2196
    %s4367 = sadd.f32 %s4366, %s2562
    %s4368 = sadd.f32 %s4367, %s2928
    %s4369 = sadd.f32 %s3266, %s3633
    %s4370 = sadd.f32 %s4369, %s3999
    %s4371 = sadd.f32 %s4370, %s4365
    %s4372 = smul.f32 %s4368, 0.5
    %s4373 = smul.f32 %s4371, 0.5
    %s4374 = sadd.f32 %s4372, %s4373
    %v4375 = vstv %s4374
    %vm4376 = vcmask 0
    %4377 = vst.msk [vmem:[#allocation2] sm:$0x1] %vm4376, %v4375
    // Predicated region
    $region30: #{graph_loss_forward.1} parent=1 // pred_check
      _
    $region31: #{graph_loss_forward.1} parent=1 // pred_check_branch
      %4379 = sbr.rel (0) target = $region33
    $region32: #{graph_loss_forward.1} parent=1 // pred_region
      %s4381 = ssub.s32 16, 16
      %4382 = vsyncadd [#allocation3], %s4381
      %s4384 = sshll.u32 [#allocation2], 4
      %s4385 = int_to_ptr.vmem [resolvable:$true] %s4384
      %4387 = dma.vmem_to_hbm [thread:$0]  %s4385, 16, %s7, [#allocation3]
    $region33: #{graph_loss_forward.1} parent=1 // pred_fallthru
      _
    // Predicated region
    $region34: #{graph_loss_forward.1} parent=1 // pred_check
      _
    $region35: #{graph_loss_forward.1} parent=1 // pred_check_branch
      %4389 = sbr.rel (0) target = $region37
    $region36: #{graph_loss_forward.1} parent=1 // pred_region
      %4390 = dma.done [#allocation3], 16
    $region37: #{graph_loss_forward.1} parent=1 // pred_fallthru
      _
    %4391 = vsyncpa [#allocation3], 1

</llo_original>
